<compile_context>
chip_gen: v6e
topology: v6e:2x2x1
jax: 0.10.0
libtpu: 0.0.40
codegen_flags: <defaults>
</compile_context>

<pallas_src>
from functools import partial

import jax
import jax.numpy as jnp
from jax import lax
from jax.experimental import pallas as pl
from jax.experimental.pallas import tpu as pltpu


# ----------------------------------------------------------------------------
# Pallas kernel: 3x3 conv head + fused projections + decode, one batch element.
# ----------------------------------------------------------------------------
def skp_rpn_kernel(step, H, W, C, HID,
                   x_ref, w1_ref, b1_ref, wft_ref, bh_ref, anc_ref, out_ref):
    HW = H * W

    # Feature stream arrives as bf16 (halves HBM traffic); upcast once, slice taps in f32.
    x = x_ref[0].astype(jnp.float32)                              # [S, C]

    # Width-boundary masks (zero padding for the +/-1 column taps).
    col = lax.broadcasted_iota(jnp.int32, (HW, 1), 0) % W
    m_left = col > 0                                              # valid when reading j-1
    m_right = col < (W - 1)                                       # valid when reading j+1

    # 3x3 conv as 9 shifted-slice matmuls: im2col happens in VMEM, not in HBM.
    h = jnp.zeros((HW, HID), jnp.float32)
    for a in range(3):            # height tap
        for b in range(3):        # width tap
            s = a * W + b
            tap = x[s:s + HW, :]                                  # [HW, C] contiguous slice
            if b == 0:
                tap = jnp.where(m_left, tap, 0.0)
            elif b == 2:
                tap = jnp.where(m_right, tap, 0.0)
            h = h + jnp.dot(tap.astype(jnp.bfloat16), w1_ref[a * 3 + b],
                            preferred_element_type=jnp.float32)
    h = jnp.maximum(h + b1_ref[...], 0.0)                         # [HW, HID] f32

    # Fused head (objectness | position | size): one MXU pass, result already
    # transposed so the output slab is lane-dense:  [8, HW] = wf_t . h^T
    head = lax.dot_general(wft_ref[...], h, (((1,), (1,)), ((), ())),
                           preferred_element_type=jnp.float32)    # [8, HW]
    head = head + bh_ref[...]                                     # [8, 1] bias broadcast

    # Global average pool (rows 5..7 are the size head; pooling is linear so the
    # per-position bias already added above is preserved exactly).
    pooled = jnp.mean(head, axis=1, keepdims=True)                # [8, 1]

    # PositionCoder.decode, written into one lane-dense slab.
    r = lax.broadcasted_iota(jnp.int32, (8, HW), 0)
    dec = jnp.where(r == 0, jax.nn.sigmoid(head),                       # pre_scores
          jnp.where(r <= 4, anc_ref[...] + head * step,                 # pre_positions
                    pooled))                                            # pre_size (bcast)
    out_ref[0] = dec                                              # [8, HW]


# ----------------------------------------------------------------------------
# Glue: compact feature layout, anchors, params, pallas_call wrapper.
# ----------------------------------------------------------------------------
def make_anchors(min_x, max_x, min_z, max_z, step, H, W):
    xs = min_x + (jnp.arange(W, dtype=jnp.float32) + 0.5) * step
    zs = min_z + (jnp.arange(H, dtype=jnp.float32) + 0.5) * step
    zz, xx = jnp.meshgrid(zs, xs, indexing="ij")
    yy = jnp.zeros_like(xx)
    pad = jnp.zeros_like(xx)
    return jnp.stack([xx, yy, zz, pad], axis=-1).reshape(H * W, 4)


def init_params(key, C, HID):
    ks = jax.random.split(key, 10)
    s = 0.1
    return {
        "w1": s * jax.random.normal(ks[0], (9 * C, HID), jnp.float32),
        "b1": s * jax.random.normal(ks[1], (1, HID), jnp.float32),
        "wo": s * jax.random.normal(ks[2], (HID, 1), jnp.float32),
        "bo": s * jax.random.normal(ks[3], (1, 1), jnp.float32),
        "wp": s * jax.random.normal(ks[4], (HID, 4), jnp.float32),
        "bp": s * jax.random.normal(ks[5], (1, 4), jnp.float32),
        "ws": s * jax.random.normal(ks[6], (HID, 3), jnp.float32),
        "bs": s * jax.random.normal(ks[7], (1, 3), jnp.float32),
    }


def skp_rpn_forward(features_nchw, params, anchors, step):
    B, C, H, W = features_nchw.shape
    HW = H * W
    HID = params["w1"].shape[1]
    S = HW + 2 * W + 2

    # Compact feature stream: NHWC, zero-pad height by 1 row top/bottom, flatten
    # spatial, pad the flat axis by 1 element each side, cast to bf16.
    x = jnp.transpose(features_nchw, (0, 2, 3, 1))                # [B, H, W, C]
    x = jnp.pad(x, ((0, 0), (1, 1), (0, 0), (0, 0)))              # [B, H+2, W, C]
    x = x.reshape(B, (H + 2) * W, C)
    x = jnp.pad(x, ((0, 0), (1, 1), (0, 0))).astype(jnp.bfloat16)  # [B, S, C]

    w1 = params["w1"].reshape(9, C, HID).astype(jnp.bfloat16)     # per-tap conv weights
    b1 = params["b1"]                                             # [1, HID]
    # Fused head weights/bias: rows = [objectness, position(4), size(3)], pre-transposed.
    wf_t = jnp.concatenate(
        [params["wo"].T, params["wp"].T, params["ws"].T], axis=0)  # [8, HID]
    bh = jnp.concatenate(
        [params["bo"], params["bp"], params["bs"]], axis=1).T      # [8, 1]
    # Anchors packed to match the [8, HW] output slab (rows 1..4).
    anc_t = jnp.concatenate(
        [jnp.zeros((1, HW), jnp.float32), anchors.T,
         jnp.zeros((3, HW), jnp.float32)], axis=0)                 # [8, HW]

    out = pl.pallas_call(
        partial(skp_rpn_kernel, step, H, W, C, HID),
        out_shape=jax.ShapeDtypeStruct((B, 8, HW), jnp.float32),
        grid_spec=pltpu.PrefetchScalarGridSpec(
            num_scalar_prefetch=0,
            grid=(B,),
            in_specs=[
                pl.BlockSpec((1, S, C), lambda b: (b, 0, 0)),      # features (bf16)
                pl.BlockSpec((9, C, HID), lambda b: (0, 0, 0)),    # conv taps (bf16)
                pl.BlockSpec((1, HID), lambda b: (0, 0)),          # conv bias
                pl.BlockSpec((8, HID), lambda b: (0, 0)),          # fused head weight^T
                pl.BlockSpec((8, 1), lambda b: (0, 0)),            # fused head bias
                pl.BlockSpec((8, HW), lambda b: (0, 0)),           # packed anchors
            ],
            out_specs=pl.BlockSpec((1, 8, HW), lambda b: (b, 0, 0)),
        ),
        compiler_params=pltpu.CompilerParams(dimension_semantics=("parallel",)),
    )(x, w1, b1, wf_t, bh, anc_t)                                  # [B, 8, HW]

    losses = {}                                                    # eval mode
    pre_scores = out[:, 0, :]                                      # [B, num_anchor]
    pre_positions = jnp.transpose(out[:, 1:5, :], (0, 2, 1)).reshape(B * HW, 4)
    pre_size = out[:, 5:8, 0]                                      # [B, 3]
    return losses, pre_scores, pre_positions, pre_size


# ----------------------------------------------------------------------------
# Pure-JAX f32 reference (host-side im2col) for verification.
# ----------------------------------------------------------------------------
def im2col_3x3(features_nchw):
    B, C, H, W = features_nchw.shape
    x = jnp.transpose(features_nchw, (0, 2, 3, 1))                 # NHWC
    xp = jnp.pad(x, ((0, 0), (1, 1), (1, 1), (0, 0)))
    taps = [xp[:, i:i + H, j:j + W, :] for i in range(3) for j in range(3)]
    patches = jnp.stack(taps, axis=3)                              # [B,H,W,9,C]
    return patches.reshape(B, H * W, 9 * C)


def reference_forward(features_nchw, params, anchors, step):
    B, C, H, W = features_nchw.shape
    patches = im2col_3x3(features_nchw)
    h = jnp.maximum(patches @ params["w1"] + params["b1"], 0.0)
    obj = h @ params["wo"] + params["bo"]
    pde = h @ params["wp"] + params["bp"]
    pooled = h.mean(axis=1)
    sz = pooled @ params["ws"] + params["bs"]
    pre_scores = jax.nn.sigmoid(obj)[..., 0]
    pre_positions = (anchors[None] + pde * step).reshape(B * H * W, 4)
    return pre_scores, pre_positions, sz


if __name__ == "__main__":
    key = jax.random.PRNGKey(0)
    B, C, H, W, HID = 2, 4, 16, 16, 128
    step = 1.0
    min_x, max_x, min_z, max_z = 0.0, 16.0, 0.0, 16.0

    k_feat, k_par = jax.random.split(key)
    features = jax.random.normal(k_feat, (B, C, H, W), jnp.float32)   # NCHW, as in PyTorch
    params = init_params(k_par, C, HID)
    anchors = make_anchors(min_x, max_x, min_z, max_z, step, H, W)

    losses, pre_scores, pre_positions, pre_size = skp_rpn_forward(
        features, params, anchors, step)
    jax.block_until_ready((pre_scores, pre_positions, pre_size))

    ref_scores, ref_positions, ref_size = reference_forward(features, params, anchors, step)
    assert pre_scores.shape == (B, H * W)
    assert pre_positions.shape == (B * H * W, 4)
    assert pre_size.shape == (B, 3)
    # Kernel runs the conv matmul with bf16 inputs / f32 accumulation; compare
    # against the pure-f32 reference with a correspondingly relaxed tolerance.
    assert jnp.allclose(pre_scores, ref_scores, atol=1e-2, rtol=1e-2)
    assert jnp.allclose(pre_positions, ref_positions, atol=1e-2, rtol=1e-2)
    assert jnp.allclose(pre_size, ref_size, atol=1e-2, rtol=1e-2)
    assert losses == {}

    print("KERNEL_OK")
</pallas_src>

<mosaic_0001>
module attributes {stable_mosaic.version = 11 : i64} {
  func.func @skp_rpn_kernel(%arg0: i32, %arg1: memref<1x290x4xbf16, #tpu.memory_space<vmem>>, %arg2: memref<9x4x128xbf16, #tpu.memory_space<vmem>>, %arg3: memref<1x128xf32, #tpu.memory_space<vmem>>, %arg4: memref<8x128xf32, #tpu.memory_space<vmem>>, %arg5: memref<8x1xf32, #tpu.memory_space<vmem>>, %arg6: memref<8x256xf32, #tpu.memory_space<vmem>>, %arg7: memref<1x8x256xf32, #tpu.memory_space<vmem>>) attributes {dimension_semantics = [#tpu.dimension_semantics<parallel>], iteration_bounds = array<i64: 2>, scalar_prefetch = 0 : i64, scratch_operands = 0 : i64, tpu.core_type = #tpu.core_type<tc>, window_params = [{transform_indices = @transform_0, window_bounds = array<i64: 1, 290, 4>}, {pipeline_mode = #tpu.pipeline_mode<synchronous>, transform_indices = @transform_1, window_bounds = array<i64: 9, 4, 128>}, {pipeline_mode = #tpu.pipeline_mode<synchronous>, transform_indices = @transform_2, window_bounds = array<i64: 1, 128>}, {pipeline_mode = #tpu.pipeline_mode<synchronous>, transform_indices = @transform_3, window_bounds = array<i64: 8, 128>}, {pipeline_mode = #tpu.pipeline_mode<synchronous>, transform_indices = @transform_4, window_bounds = array<i64: 8, 1>}, {pipeline_mode = #tpu.pipeline_mode<synchronous>, transform_indices = @transform_5, window_bounds = array<i64: 8, 256>}, {transform_indices = @transform_6, window_bounds = array<i64: 1, 8, 256>}]} {
    %c0 = arith.constant 0 : index
    %c0_0 = arith.constant 0 : index
    %c0_1 = arith.constant 0 : index
    %0 = vector.load %arg1[%c0, %c0_0, %c0_1] : memref<1x290x4xbf16, #tpu.memory_space<vmem>>, vector<1x290x4xbf16>
    %1 = vector.shape_cast %0 : vector<1x290x4xbf16> to vector<290x4xbf16>
    %2 = arith.extf %1 : vector<290x4xbf16> to vector<290x4xf32>
    %3 = tpu.iota {dimensions = array<i32: 0>} : vector<256x1xi32>
    %c16_i32 = arith.constant 16 : i32
    %c0_i32 = arith.constant 0 : i32
    %4 = arith.cmpi eq, %c16_i32, %c0_i32 : i32
    %c1_i32 = arith.constant 1 : i32
    %5 = arith.select %4, %c1_i32, %c16_i32 : i32
    %6 = vector.broadcast %5 : i32 to vector<256x1xi32>
    %7 = arith.remsi %3, %6 : vector<256x1xi32>
    %c0_i32_2 = arith.constant 0 : i32
    %8 = vector.broadcast %c0_i32_2 : i32 to vector<256x1xi32>
    %9 = arith.cmpi ne, %7, %8 : vector<256x1xi32>
    %c0_i32_3 = arith.constant 0 : i32
    %10 = vector.broadcast %c0_i32_3 : i32 to vector<256x1xi32>
    %11 = arith.cmpi slt, %7, %10 : vector<256x1xi32>
    %c0_i32_4 = arith.constant 0 : i32
    %12 = arith.cmpi slt, %5, %c0_i32_4 : i32
    %13 = vector.broadcast %12 : i1 to vector<256x1xi1>
    %14 = vector.broadcast %13 : vector<256x1xi1> to vector<256x1xi1>
    %15 = arith.xori %11, %14 : vector<256x1xi1>
    %16 = arith.andi %15, %9 : vector<256x1xi1>
    %17 = vector.broadcast %5 : i32 to vector<256x1xi32>
    %18 = arith.addi %7, %17 : vector<256x1xi32>
    %19 = arith.select %16, %18, %7 : vector<256x1xi1>, vector<256x1xi32>
    %c0_i32_5 = arith.constant 0 : i32
    %20 = vector.broadcast %c0_i32_5 : i32 to vector<256x1xi32>
    %21 = arith.cmpi sgt, %19, %20 : vector<256x1xi32>
    %c15_i32 = arith.constant 15 : i32
    %22 = vector.broadcast %c15_i32 : i32 to vector<256x1xi32>
    %23 = arith.cmpi slt, %19, %22 : vector<256x1xi32>
    %cst = arith.constant 0.000000e+00 : f32
    %24 = vector.broadcast %cst : f32 to vector<256x128xf32>
    %25 = vector.extract_strided_slice %2 {offsets = [0, 0], sizes = [256, 4], strides = [1, 1]} : vector<290x4xf32> to vector<256x4xf32>
    %cst_6 = arith.constant 0.000000e+00 : f32
    %26 = vector.shape_cast %21 : vector<256x1xi1> to vector<256x1xi1>
    %27 = vector.broadcast %26 : vector<256x1xi1> to vector<256x4xi1>
    %28 = vector.broadcast %cst_6 : f32 to vector<256x4xf32>
    %29 = arith.select %27, %25, %28 : vector<256x4xi1>, vector<256x4xf32>
    %30 = arith.truncf %29 : vector<256x4xf32> to vector<256x4xbf16>
    %c0_7 = arith.constant 0 : index
    %c0_8 = arith.constant 0 : index
    %c0_9 = arith.constant 0 : index
    %31 = vector.load %arg2[%c0_7, %c0_8, %c0_9] : memref<9x4x128xbf16, #tpu.memory_space<vmem>>, vector<1x4x128xbf16>
    %32 = vector.shape_cast %31 : vector<1x4x128xbf16> to vector<4x128xbf16>
    %cst_10 = arith.constant dense<0.000000e+00> : vector<256x128xf32>
    %33 = tpu.matmul %30, %32, %cst_10 {dimension_numbers = #tpu.dot_dimension_numbers<[1], [0], [0], [1], [0, 0, 1, 1], [], []>} : vector<256x4xbf16>, vector<4x128xbf16>, vector<256x128xf32> -> vector<256x128xf32>
    %34 = arith.addf %24, %33 : vector<256x128xf32>
    %35 = vector.extract_strided_slice %2 {offsets = [1, 0], sizes = [256, 4], strides = [1, 1]} : vector<290x4xf32> to vector<256x4xf32>
    %36 = arith.truncf %35 : vector<256x4xf32> to vector<256x4xbf16>
    %c1 = arith.constant 1 : index
    %c0_11 = arith.constant 0 : index
    %c0_12 = arith.constant 0 : index
    %37 = vector.load %arg2[%c1, %c0_11, %c0_12] : memref<9x4x128xbf16, #tpu.memory_space<vmem>>, vector<1x4x128xbf16>
    %38 = vector.shape_cast %37 : vector<1x4x128xbf16> to vector<4x128xbf16>
    %cst_13 = arith.constant dense<0.000000e+00> : vector<256x128xf32>
    %39 = tpu.matmul %36, %38, %cst_13 {dimension_numbers = #tpu.dot_dimension_numbers<[1], [0], [0], [1], [0, 0, 1, 1], [], []>} : vector<256x4xbf16>, vector<4x128xbf16>, vector<256x128xf32> -> vector<256x128xf32>
    %40 = arith.addf %34, %39 : vector<256x128xf32>
    %41 = vector.extract_strided_slice %2 {offsets = [2, 0], sizes = [256, 4], strides = [1, 1]} : vector<290x4xf32> to vector<256x4xf32>
    %cst_14 = arith.constant 0.000000e+00 : f32
    %42 = vector.shape_cast %23 : vector<256x1xi1> to vector<256x1xi1>
    %43 = vector.broadcast %42 : vector<256x1xi1> to vector<256x4xi1>
    %44 = vector.broadcast %cst_14 : f32 to vector<256x4xf32>
    %45 = arith.select %43, %41, %44 : vector<256x4xi1>, vector<256x4xf32>
    %46 = arith.truncf %45 : vector<256x4xf32> to vector<256x4xbf16>
    %c2 = arith.constant 2 : index
    %c0_15 = arith.constant 0 : index
    %c0_16 = arith.constant 0 : index
    %47 = vector.load %arg2[%c2, %c0_15, %c0_16] : memref<9x4x128xbf16, #tpu.memory_space<vmem>>, vector<1x4x128xbf16>
    %48 = vector.shape_cast %47 : vector<1x4x128xbf16> to vector<4x128xbf16>
    %cst_17 = arith.constant dense<0.000000e+00> : vector<256x128xf32>
    %49 = tpu.matmul %46, %48, %cst_17 {dimension_numbers = #tpu.dot_dimension_numbers<[1], [0], [0], [1], [0, 0, 1, 1], [], []>} : vector<256x4xbf16>, vector<4x128xbf16>, vector<256x128xf32> -> vector<256x128xf32>
    %50 = arith.addf %40, %49 : vector<256x128xf32>
    %51 = vector.extract_strided_slice %2 {offsets = [16, 0], sizes = [256, 4], strides = [1, 1]} : vector<290x4xf32> to vector<256x4xf32>
    %cst_18 = arith.constant 0.000000e+00 : f32
    %52 = vector.shape_cast %21 : vector<256x1xi1> to vector<256x1xi1>
    %53 = vector.broadcast %52 : vector<256x1xi1> to vector<256x4xi1>
    %54 = vector.broadcast %cst_18 : f32 to vector<256x4xf32>
    %55 = arith.select %53, %51, %54 : vector<256x4xi1>, vector<256x4xf32>
    %56 = arith.truncf %55 : vector<256x4xf32> to vector<256x4xbf16>
    %c3 = arith.constant 3 : index
    %c0_19 = arith.constant 0 : index
    %c0_20 = arith.constant 0 : index
    %57 = vector.load %arg2[%c3, %c0_19, %c0_20] : memref<9x4x128xbf16, #tpu.memory_space<vmem>>, vector<1x4x128xbf16>
    %58 = vector.shape_cast %57 : vector<1x4x128xbf16> to vector<4x128xbf16>
    %cst_21 = arith.constant dense<0.000000e+00> : vector<256x128xf32>
    %59 = tpu.matmul %56, %58, %cst_21 {dimension_numbers = #tpu.dot_dimension_numbers<[1], [0], [0], [1], [0, 0, 1, 1], [], []>} : vector<256x4xbf16>, vector<4x128xbf16>, vector<256x128xf32> -> vector<256x128xf32>
    %60 = arith.addf %50, %59 : vector<256x128xf32>
    %61 = vector.extract_strided_slice %2 {offsets = [17, 0], sizes = [256, 4], strides = [1, 1]} : vector<290x4xf32> to vector<256x4xf32>
    %62 = arith.truncf %61 : vector<256x4xf32> to vector<256x4xbf16>
    %c4 = arith.constant 4 : index
    %c0_22 = arith.constant 0 : index
    %c0_23 = arith.constant 0 : index
    %63 = vector.load %arg2[%c4, %c0_22, %c0_23] : memref<9x4x128xbf16, #tpu.memory_space<vmem>>, vector<1x4x128xbf16>
    %64 = vector.shape_cast %63 : vector<1x4x128xbf16> to vector<4x128xbf16>
    %cst_24 = arith.constant dense<0.000000e+00> : vector<256x128xf32>
    %65 = tpu.matmul %62, %64, %cst_24 {dimension_numbers = #tpu.dot_dimension_numbers<[1], [0], [0], [1], [0, 0, 1, 1], [], []>} : vector<256x4xbf16>, vector<4x128xbf16>, vector<256x128xf32> -> vector<256x128xf32>
    %66 = arith.addf %60, %65 : vector<256x128xf32>
    %67 = vector.extract_strided_slice %2 {offsets = [18, 0], sizes = [256, 4], strides = [1, 1]} : vector<290x4xf32> to vector<256x4xf32>
    %cst_25 = arith.constant 0.000000e+00 : f32
    %68 = vector.shape_cast %23 : vector<256x1xi1> to vector<256x1xi1>
    %69 = vector.broadcast %68 : vector<256x1xi1> to vector<256x4xi1>
    %70 = vector.broadcast %cst_25 : f32 to vector<256x4xf32>
    %71 = arith.select %69, %67, %70 : vector<256x4xi1>, vector<256x4xf32>
    %72 = arith.truncf %71 : vector<256x4xf32> to vector<256x4xbf16>
    %c5 = arith.constant 5 : index
    %c0_26 = arith.constant 0 : index
    %c0_27 = arith.constant 0 : index
    %73 = vector.load %arg2[%c5, %c0_26, %c0_27] : memref<9x4x128xbf16, #tpu.memory_space<vmem>>, vector<1x4x128xbf16>
    %74 = vector.shape_cast %73 : vector<1x4x128xbf16> to vector<4x128xbf16>
    %cst_28 = arith.constant dense<0.000000e+00> : vector<256x128xf32>
    %75 = tpu.matmul %72, %74, %cst_28 {dimension_numbers = #tpu.dot_dimension_numbers<[1], [0], [0], [1], [0, 0, 1, 1], [], []>} : vector<256x4xbf16>, vector<4x128xbf16>, vector<256x128xf32> -> vector<256x128xf32>
    %76 = arith.addf %66, %75 : vector<256x128xf32>
    %77 = vector.extract_strided_slice %2 {offsets = [32, 0], sizes = [256, 4], strides = [1, 1]} : vector<290x4xf32> to vector<256x4xf32>
    %cst_29 = arith.constant 0.000000e+00 : f32
    %78 = vector.shape_cast %21 : vector<256x1xi1> to vector<256x1xi1>
    %79 = vector.broadcast %78 : vector<256x1xi1> to vector<256x4xi1>
    %80 = vector.broadcast %cst_29 : f32 to vector<256x4xf32>
    %81 = arith.select %79, %77, %80 : vector<256x4xi1>, vector<256x4xf32>
    %82 = arith.truncf %81 : vector<256x4xf32> to vector<256x4xbf16>
    %c6 = arith.constant 6 : index
    %c0_30 = arith.constant 0 : index
    %c0_31 = arith.constant 0 : index
    %83 = vector.load %arg2[%c6, %c0_30, %c0_31] : memref<9x4x128xbf16, #tpu.memory_space<vmem>>, vector<1x4x128xbf16>
    %84 = vector.shape_cast %83 : vector<1x4x128xbf16> to vector<4x128xbf16>
    %cst_32 = arith.constant dense<0.000000e+00> : vector<256x128xf32>
    %85 = tpu.matmul %82, %84, %cst_32 {dimension_numbers = #tpu.dot_dimension_numbers<[1], [0], [0], [1], [0, 0, 1, 1], [], []>} : vector<256x4xbf16>, vector<4x128xbf16>, vector<256x128xf32> -> vector<256x128xf32>
    %86 = arith.addf %76, %85 : vector<256x128xf32>
    %87 = vector.extract_strided_slice %2 {offsets = [33, 0], sizes = [256, 4], strides = [1, 1]} : vector<290x4xf32> to vector<256x4xf32>
    %88 = arith.truncf %87 : vector<256x4xf32> to vector<256x4xbf16>
    %c7 = arith.constant 7 : index
    %c0_33 = arith.constant 0 : index
    %c0_34 = arith.constant 0 : index
    %89 = vector.load %arg2[%c7, %c0_33, %c0_34] : memref<9x4x128xbf16, #tpu.memory_space<vmem>>, vector<1x4x128xbf16>
    %90 = vector.shape_cast %89 : vector<1x4x128xbf16> to vector<4x128xbf16>
    %cst_35 = arith.constant dense<0.000000e+00> : vector<256x128xf32>
    %91 = tpu.matmul %88, %90, %cst_35 {dimension_numbers = #tpu.dot_dimension_numbers<[1], [0], [0], [1], [0, 0, 1, 1], [], []>} : vector<256x4xbf16>, vector<4x128xbf16>, vector<256x128xf32> -> vector<256x128xf32>
    %92 = arith.addf %86, %91 : vector<256x128xf32>
    %93 = vector.extract_strided_slice %2 {offsets = [34, 0], sizes = [256, 4], strides = [1, 1]} : vector<290x4xf32> to vector<256x4xf32>
    %cst_36 = arith.constant 0.000000e+00 : f32
    %94 = vector.shape_cast %23 : vector<256x1xi1> to vector<256x1xi1>
    %95 = vector.broadcast %94 : vector<256x1xi1> to vector<256x4xi1>
    %96 = vector.broadcast %cst_36 : f32 to vector<256x4xf32>
    %97 = arith.select %95, %93, %96 : vector<256x4xi1>, vector<256x4xf32>
    %98 = arith.truncf %97 : vector<256x4xf32> to vector<256x4xbf16>
    %c8 = arith.constant 8 : index
    %c0_37 = arith.constant 0 : index
    %c0_38 = arith.constant 0 : index
    %99 = vector.load %arg2[%c8, %c0_37, %c0_38] : memref<9x4x128xbf16, #tpu.memory_space<vmem>>, vector<1x4x128xbf16>
    %100 = vector.shape_cast %99 : vector<1x4x128xbf16> to vector<4x128xbf16>
    %cst_39 = arith.constant dense<0.000000e+00> : vector<256x128xf32>
    %101 = tpu.matmul %98, %100, %cst_39 {dimension_numbers = #tpu.dot_dimension_numbers<[1], [0], [0], [1], [0, 0, 1, 1], [], []>} : vector<256x4xbf16>, vector<4x128xbf16>, vector<256x128xf32> -> vector<256x128xf32>
    %102 = arith.addf %92, %101 : vector<256x128xf32>
    %c0_40 = arith.constant 0 : index
    %c0_41 = arith.constant 0 : index
    %103 = vector.load %arg3[%c0_40, %c0_41] : memref<1x128xf32, #tpu.memory_space<vmem>>, vector<1x128xf32>
    %104 = vector.broadcast %103 : vector<1x128xf32> to vector<256x128xf32>
    %105 = arith.addf %102, %104 : vector<256x128xf32>
    %cst_42 = arith.constant 0.000000e+00 : f32
    %106 = vector.broadcast %cst_42 : f32 to vector<256x128xf32>
    %107 = arith.maximumf %105, %106 : vector<256x128xf32>
    %c0_43 = arith.constant 0 : index
    %c0_44 = arith.constant 0 : index
    %108 = vector.load %arg4[%c0_43, %c0_44] : memref<8x128xf32, #tpu.memory_space<vmem>>, vector<8x128xf32>
    %cst_45 = arith.constant dense<0.000000e+00> : vector<8x256xf32>
    %109 = tpu.matmul %108, %107, %cst_45 {dimension_numbers = #tpu.dot_dimension_numbers<[1], [1], [0], [0], [0, 0, 1, 0], [], []>} : vector<8x128xf32>, vector<256x128xf32>, vector<8x256xf32> -> vector<8x256xf32>
    %c0_46 = arith.constant 0 : index
    %c0_47 = arith.constant 0 : index
    %110 = vector.load %arg5[%c0_46, %c0_47] : memref<8x1xf32, #tpu.memory_space<vmem>>, vector<8x1xf32>
    %111 = vector.broadcast %110 : vector<8x1xf32> to vector<8x256xf32>
    %112 = arith.addf %109, %111 : vector<8x256xf32>
    %cst_48 = arith.constant dense<0.000000e+00> : vector<8xf32>
    %113 = vector.multi_reduction <add>, %112, %cst_48 [1] : vector<8x256xf32> to vector<8xf32>
    %114 = vector.shape_cast %113 : vector<8xf32> to vector<8x1xf32>
    %cst_49 = arith.constant 2.560000e+02 : f32
    %115 = vector.broadcast %cst_49 : f32 to vector<8x1xf32>
    %116 = arith.divf %114, %115 : vector<8x1xf32>
    %117 = tpu.iota {dimensions = array<i32: 0>} : vector<8x256xi32>
    %c0_i32_50 = arith.constant 0 : i32
    %118 = vector.broadcast %c0_i32_50 : i32 to vector<8x256xi32>
    %119 = arith.cmpi eq, %117, %118 : vector<8x256xi32>
    %120 = arith.negf %112 : vector<8x256xf32>
    %121 = math.exp %120 : vector<8x256xf32>
    %cst_51 = arith.constant 1.000000e+00 : f32
    %122 = vector.broadcast %cst_51 : f32 to vector<8x256xf32>
    %123 = arith.addf %122, %121 : vector<8x256xf32>
    %124 = arith.divf %122, %123 : vector<8x256xf32>
    %c4_i32 = arith.constant 4 : i32
    %125 = vector.broadcast %c4_i32 : i32 to vector<8x256xi32>
    %126 = arith.cmpi sle, %117, %125 : vector<8x256xi32>
    %c0_52 = arith.constant 0 : index
    %c0_53 = arith.constant 0 : index
    %127 = vector.load %arg6[%c0_52, %c0_53] : memref<8x256xf32, #tpu.memory_space<vmem>>, vector<8x256xf32>
    %cst_54 = arith.constant 1.000000e+00 : f32
    %128 = vector.broadcast %cst_54 : f32 to vector<8x256xf32>
    %129 = arith.mulf %112, %128 : vector<8x256xf32>
    %130 = arith.addf %127, %129 : vector<8x256xf32>
    %131 = vector.shape_cast %116 : vector<8x1xf32> to vector<8x1xf32>
    %132 = vector.broadcast %131 : vector<8x1xf32> to vector<8x256xf32>
    %133 = arith.select %126, %130, %132 : vector<8x256xi1>, vector<8x256xf32>
    %134 = arith.select %119, %124, %133 : vector<8x256xi1>, vector<8x256xf32>
    %c0_55 = arith.constant 0 : index
    %c0_56 = arith.constant 0 : index
    %c0_57 = arith.constant 0 : index
    %135 = vector.load %arg7[%c0_55, %c0_56, %c0_57] : memref<1x8x256xf32, #tpu.memory_space<vmem>>, vector<1x8x256xf32>
    %136 = vector.shape_cast %135 : vector<1x8x256xf32> to vector<8x256xf32>
    %137 = vector.shape_cast %134 : vector<8x256xf32> to vector<1x8x256xf32>
    tpu.vector_store %arg7[%c0_55, %c0_56, %c0_57], %137 {strides = array<i32>} : memref<1x8x256xf32, #tpu.memory_space<vmem>>, vector<1x8x256xf32>,
    return
  }
  func.func @transform_0(%arg0: i32) -> (i32, i32, i32) {
    %c0_i32 = arith.constant 0 : i32
    %c0_i32_0 = arith.constant 0 : i32
    %c0_i32_1 = arith.constant 0 : i32
    return %arg0, %c0_i32, %c0_i32_0 : i32, i32, i32
  }
  func.func @transform_1(%arg0: i32) -> (i32, i32, i32) {
    %c0_i32 = arith.constant 0 : i32
    %c0_i32_0 = arith.constant 0 : i32
    %c0_i32_1 = arith.constant 0 : i32
    %c0_i32_2 = arith.constant 0 : i32
    return %c0_i32, %c0_i32_0, %c0_i32_1 : i32, i32, i32
  }
  func.func @transform_2(%arg0: i32) -> (i32, i32) {
    %c0_i32 = arith.constant 0 : i32
    %c0_i32_0 = arith.constant 0 : i32
    %c0_i32_1 = arith.constant 0 : i32
    return %c0_i32, %c0_i32_0 : i32, i32
  }
  func.func @transform_3(%arg0: i32) -> (i32, i32) {
    %c0_i32 = arith.constant 0 : i32
    %c0_i32_0 = arith.constant 0 : i32
    %c0_i32_1 = arith.constant 0 : i32
    return %c0_i32, %c0_i32_0 : i32, i32
  }
  func.func @transform_4(%arg0: i32) -> (i32, i32) {
    %c0_i32 = arith.constant 0 : i32
    %c0_i32_0 = arith.constant 0 : i32
    %c0_i32_1 = arith.constant 0 : i32
    return %c0_i32, %c0_i32_0 : i32, i32
  }
  func.func @transform_5(%arg0: i32) -> (i32, i32) {
    %c0_i32 = arith.constant 0 : i32
    %c0_i32_0 = arith.constant 0 : i32
    %c0_i32_1 = arith.constant 0 : i32
    return %c0_i32, %c0_i32_0 : i32, i32
  }
  func.func @transform_6(%arg0: i32) -> (i32, i32, i32) {
    %c0_i32 = arith.constant 0 : i32
    %c0_i32_0 = arith.constant 0 : i32
    %c0_i32_1 = arith.constant 0 : i32
    return %arg0, %c0_i32, %c0_i32_0 : i32, i32, i32
  }
}

</mosaic_0001>

<llo_original>
// kernel: tpu_custom_call.1
$region0: #{tpu_custom_call.1}
  #allocation0 [shape = 'u32[]', space=smem, size = 0x4, offset = 0x4, fixed_abs, tag = 'smem constant byte address 0x4 - core index']
  #allocation1 [shape = 'u32[144,128]{1,0:T(1,128)}', space=vmem, size = 0x12000, scoped, tag = 'internal scratch']
  %s0 = inlined_call_operand.vmem [shape: bf16[2,290,4], index: 0, kind: input, shape index: {}]
  %s1 = inlined_call_operand.vmem [shape: bf16[9,4,128], index: 1, kind: input, shape index: {}]
  %s2 = inlined_call_operand.vmem [shape: f32[1,128], index: 2, kind: input, shape index: {}]
  %s3 = inlined_call_operand.vmem [shape: f32[8,128], index: 3, kind: input, shape index: {}]
  %s4 = inlined_call_operand.vmem [shape: f32[8,1], index: 4, kind: input, shape index: {}]
  %s5 = inlined_call_operand.vmem [shape: f32[8,256], index: 5, kind: input, shape index: {}]
  %s6 = inlined_call_operand.hbm [shape: f32[2,8,256], index: 6, kind: output, shape index: {}]
  %s7 = sld [smem:[#allocation0]]
  $region57: #{tpu_custom_call.1} parent=0
    _
  %s9 = ssub.s32 1, %s7
  %s10 = scalar_select 0, %s9, %s7
  $region1: #{tpu_custom_call.1} parent=0
    #allocation2 [shape = 'u8[16384]{0}', space=vmem, size = 0x4000, scoped, tag = 'output window, operand 0']
    #allocation3 [shape = 's32[2]{0}', space=sflag, size = 0x8, scoped, tag = 'scoped memory for tpu_custom_call.1']
    %11 = vsyncpa [#allocation3], 0
    %s12 = scalar_lea.sflag [#allocation3], 1
    %13 = vsyncpa %s12, 0
    loop: start=0, step=1, limit=4
    $region2: #{tpu_custom_call.1} parent=1 // loop_pre_header
      _
    $region3: #{tpu_custom_call.1} parent=1 // loop_header
      %s15 = sphi 0, %s19
      %p16 = scmp.ge.s32.totalorder %s15, 4
      %s25 = sphi 0, %s27
      %s28 = sphi 0, %s25
      %s29 = sphi 0, %s28
      %s45 = sphi 0, %s29
      %s49 = sphi 0, %s49
      %s51 = sphi 0, %s49
      %s52 = sphi 0, %s51
      %s66 = sphi 0, %s52
      %s70 = sphi 0, %s70
      %s72 = sphi 0, %s70
      %s73 = sphi 0, %s72
      %s87 = sphi 0, %s73
      %s91 = sphi 0, %s91
      %s93 = sphi 0, %s91
      %s94 = sphi 0, %s93
      %s108 = sphi 0, %s94
      %s112 = sphi 0, %s112
      %s114 = sphi 0, %s112
      %s115 = sphi 0, %s114
      %s129 = sphi 0, %s115
      %s133 = sphi 0, %s133
      %s135 = sphi 0, %s133
      %s136 = sphi 0, %s135
      %s150 = sphi 0, %s136
      %s156 = sphi 0, %s158
      %s159 = sphi 0, %s156
      %s160 = sphi 0, %s159
      %s176 = sphi 0, %s160
    $region4: #{tpu_custom_call.1} parent=1 // loop_header_branch
      %18 = sbr.rel (%p16) target = $region8
    $region5: #{tpu_custom_call.1} parent=1 // loop_body
      %s20 = ssub.s32 %s15, 1
      %s21 = ssub.s32 %s15, 2
      %s22 = sadd.s32 %s15, 1
      %s23 = ssub.s32 %s15, %s22
      %p24 = scmp.eq.s32.totalorder %s23, 0
      %s26 = sadd.s32 %s25, 1
      %s27 = scalar_select %p24, %s25, %s26
      %p30 = pneg %p24
      %p31 = scmp.eq.s32.totalorder %s15, 1
      %p32 = por %p30, %p31
      %p33 = scmp.ne.s32.totalorder %s25, %s28
      %p34 = scmp.eq.s32.totalorder %s15, 0
      %p35 = por %p33, %p34
      %p36 = scmp.ne.s32.totalorder %s25, %s28
      %p37 = scmp.eq.s32.totalorder %s20, 1
      %p38 = por %p36, %p37
      %p39 = scmp.ne.s32.totalorder %s28, %s29
      %p40 = scmp.eq.s32.totalorder %s20, 0
      %p41 = por %p39, %p40
      %p42 = scmp.ne.s32.totalorder %s28, %s29
      %p43 = scmp.eq.s32.totalorder %s21, 1
      %p44 = por %p42, %p43
      %p46 = scmp.ne.s32.totalorder %s29, %s45
      %p47 = scmp.eq.s32.totalorder %s21, 0
      %p48 = por %p46, %p47
      %s50 = sadd.s32 %s49, 1
      %p53 = scmp.eq.s32.totalorder %s15, 1
      %p54 = scmp.ne.s32.totalorder %s49, %s51
      %p55 = scmp.eq.s32.totalorder %s15, 0
      %p56 = por %p54, %p55
      %p57 = scmp.ne.s32.totalorder %s49, %s51
      %p58 = scmp.eq.s32.totalorder %s20, 1
      %p59 = por %p57, %p58
      %p60 = scmp.ne.s32.totalorder %s51, %s52
      %p61 = scmp.eq.s32.totalorder %s20, 0
      %p62 = por %p60, %p61
      %p63 = scmp.ne.s32.totalorder %s51, %s52
      %p64 = scmp.eq.s32.totalorder %s21, 1
      %p65 = por %p63, %p64
      %p67 = scmp.ne.s32.totalorder %s52, %s66
      %p68 = scmp.eq.s32.totalorder %s21, 0
      %p69 = por %p67, %p68
      %s71 = sadd.s32 %s70, 1
      %p74 = scmp.eq.s32.totalorder %s15, 1
      %p75 = scmp.ne.s32.totalorder %s70, %s72
      %p76 = scmp.eq.s32.totalorder %s15, 0
      %p77 = por %p75, %p76
      %p78 = scmp.ne.s32.totalorder %s70, %s72
      %p79 = scmp.eq.s32.totalorder %s20, 1
      %p80 = por %p78, %p79
      %p81 = scmp.ne.s32.totalorder %s72, %s73
      %p82 = scmp.eq.s32.totalorder %s20, 0
      %p83 = por %p81, %p82
      %p84 = scmp.ne.s32.totalorder %s72, %s73
      %p85 = scmp.eq.s32.totalorder %s21, 1
      %p86 = por %p84, %p85
      %p88 = scmp.ne.s32.totalorder %s73, %s87
      %p89 = scmp.eq.s32.totalorder %s21, 0
      %p90 = por %p88, %p89
      %s92 = sadd.s32 %s91, 1
      %p95 = scmp.eq.s32.totalorder %s15, 1
      %p96 = scmp.ne.s32.totalorder %s91, %s93
      %p97 = scmp.eq.s32.totalorder %s15, 0
      %p98 = por %p96, %p97
      %p99 = scmp.ne.s32.totalorder %s91, %s93
      %p100 = scmp.eq.s32.totalorder %s20, 1
      %p101 = por %p99, %p100
      %p102 = scmp.ne.s32.totalorder %s93, %s94
      %p103 = scmp.eq.s32.totalorder %s20, 0
      %p104 = por %p102, %p103
      %p105 = scmp.ne.s32.totalorder %s93, %s94
      %p106 = scmp.eq.s32.totalorder %s21, 1
      %p107 = por %p105, %p106
      %p109 = scmp.ne.s32.totalorder %s94, %s108
      %p110 = scmp.eq.s32.totalorder %s21, 0
      %p111 = por %p109, %p110
      %s113 = sadd.s32 %s112, 1
      %p116 = scmp.eq.s32.totalorder %s15, 1
      %p117 = scmp.ne.s32.totalorder %s112, %s114
      %p118 = scmp.eq.s32.totalorder %s15, 0
      %p119 = por %p117, %p118
      %p120 = scmp.ne.s32.totalorder %s112, %s114
      %p121 = scmp.eq.s32.totalorder %s20, 1
      %p122 = por %p120, %p121
      %p123 = scmp.ne.s32.totalorder %s114, %s115
      %p124 = scmp.eq.s32.totalorder %s20, 0
      %p125 = por %p123, %p124
      %p126 = scmp.ne.s32.totalorder %s114, %s115
      %p127 = scmp.eq.s32.totalorder %s21, 1
      %p128 = por %p126, %p127
      %p130 = scmp.ne.s32.totalorder %s115, %s129
      %p131 = scmp.eq.s32.totalorder %s21, 0
      %p132 = por %p130, %p131
      %s134 = sadd.s32 %s133, 1
      %p137 = scmp.eq.s32.totalorder %s15, 1
      %p138 = scmp.ne.s32.totalorder %s133, %s135
      %p139 = scmp.eq.s32.totalorder %s15, 0
      %p140 = por %p138, %p139
      %p141 = scmp.ne.s32.totalorder %s133, %s135
      %p142 = scmp.eq.s32.totalorder %s20, 1
      %p143 = por %p141, %p142
      %p144 = scmp.ne.s32.totalorder %s135, %s136
      %p145 = scmp.eq.s32.totalorder %s20, 0
      %p146 = por %p144, %p145
      %p147 = scmp.ne.s32.totalorder %s135, %s136
      %p148 = scmp.eq.s32.totalorder %s21, 1
      %p149 = por %p147, %p148
      %p151 = scmp.ne.s32.totalorder %s136, %s150
      %p152 = scmp.eq.s32.totalorder %s21, 0
      %p153 = por %p151, %p152
      %s154 = ssub.s32 %s15, %s22
      %p155 = scmp.eq.s32.totalorder %s154, 0
      %s157 = sadd.s32 %s156, 1
      %s158 = scalar_select %p155, %s156, %s157
      %p161 = pneg %p155
      %p162 = scmp.eq.s32.totalorder %s15, 1
      %p163 = por %p161, %p162
      %p164 = scmp.ne.s32.totalorder %s156, %s159
      %p165 = scmp.eq.s32.totalorder %s15, 0
      %p166 = por %p164, %p165
      %p167 = scmp.ne.s32.totalorder %s156, %s159
      %p168 = scmp.eq.s32.totalorder %s20, 1
      %p169 = por %p167, %p168
      %p170 = scmp.ne.s32.totalorder %s159, %s160
      %p171 = scmp.eq.s32.totalorder %s20, 0
      %p172 = por %p170, %p171
      %p173 = scmp.ne.s32.totalorder %s159, %s160
      %p174 = scmp.eq.s32.totalorder %s21, 1
      %p175 = por %p173, %p174
      %p177 = scmp.ne.s32.totalorder %s160, %s176
      %p178 = scmp.eq.s32.totalorder %s21, 0
      %p179 = por %p177, %p178
      %p180 = scmp.le.s32.totalorder 1, %s15
      %p181 = scmp.lt.s32.totalorder %s15, 3
      %p182 = pnand %p180, %p181
      %p183 = pneg %p182
      // Predicated region
      $region9: #{tpu_custom_call.1} parent=5 // pred_check
        _
      $region10: #{tpu_custom_call.1} parent=5 // pred_check_branch
        %185 = sbr.rel (%p182) target = $region12
      $region11: #{tpu_custom_call.1} parent=5 // pred_region
        %s186 = ssub.s32 %s15, 1
        // Predicated region
        $region13: #{tpu_custom_call.1} parent=11 // pred_check
          %p187 = pneg %p62
        $region14: #{tpu_custom_call.1} parent=11 // pred_check_branch
          %189 = sbr.rel (%p187) target = $region16
        $region15: #{tpu_custom_call.1} parent=11 // pred_region
          _
        $region16: #{tpu_custom_call.1} parent=11 // pred_fallthru
          _
        // Predicated region
        $region17: #{tpu_custom_call.1} parent=11 // pred_check
          %p190 = pneg %p83
        $region18: #{tpu_custom_call.1} parent=11 // pred_check_branch
          %192 = sbr.rel (%p190) target = $region20
        $region19: #{tpu_custom_call.1} parent=11 // pred_region
          _
        $region20: #{tpu_custom_call.1} parent=11 // pred_fallthru
          _
        // Predicated region
        $region21: #{tpu_custom_call.1} parent=11 // pred_check
          %p193 = pneg %p104
        $region22: #{tpu_custom_call.1} parent=11 // pred_check_branch
          %195 = sbr.rel (%p193) target = $region24
        $region23: #{tpu_custom_call.1} parent=11 // pred_region
          _
        $region24: #{tpu_custom_call.1} parent=11 // pred_fallthru
          _
        // Predicated region
        $region25: #{tpu_custom_call.1} parent=11 // pred_check
          %p196 = pneg %p125
        $region26: #{tpu_custom_call.1} parent=11 // pred_check_branch
          %198 = sbr.rel (%p196) target = $region28
        $region27: #{tpu_custom_call.1} parent=11 // pred_region
          _
        $region28: #{tpu_custom_call.1} parent=11 // pred_fallthru
          _
        // Predicated region
        $region29: #{tpu_custom_call.1} parent=11 // pred_check
          %p199 = pneg %p146
        $region30: #{tpu_custom_call.1} parent=11 // pred_check_branch
          %201 = sbr.rel (%p199) target = $region32
        $region31: #{tpu_custom_call.1} parent=11 // pred_region
          _
        $region32: #{tpu_custom_call.1} parent=11 // pred_fallthru
          _
      $region12: #{tpu_custom_call.1} parent=5 // pred_fallthru
        _
      %p202 = scmp.lt.s32.totalorder %s15, 2
      // Predicated region
      $region33: #{tpu_custom_call.1} parent=5 // pred_check
        %p203 = pneg %p202
      $region34: #{tpu_custom_call.1} parent=5 // pred_check_branch
        %205 = sbr.rel (%p203) target = $region36
      $region35: #{tpu_custom_call.1} parent=5 // pred_region
        // Predicated region
        $region37: #{tpu_custom_call.1} parent=35 // pred_check
          %p206 = pneg %p35
        $region38: #{tpu_custom_call.1} parent=35 // pred_check_branch
          %208 = sbr.rel (%p206) target = $region40
        $region39: #{tpu_custom_call.1} parent=35 // pred_region
          %p209 = scmp.lt.s32.totalorder %s15, 1
          %s210 = scalar_select %p209, %s15, 1
          %s211 = smul.addr %s210, 37
          %s212 = smul.addr %s211, 4
          %s213 = scalar_lea.vmem %s0, %s212
        $region40: #{tpu_custom_call.1} parent=35 // pred_fallthru
          _
      $region36: #{tpu_custom_call.1} parent=5 // pred_fallthru
        _
      %p214 = scmp.le.s32.totalorder 1, %s15
      %p215 = scmp.lt.s32.totalorder %s15, 3
      %p216 = pnand %p214, %p215
      %p217 = pneg %p216
      // Predicated region
      $region41: #{tpu_custom_call.1} parent=5 // pred_check
        _
      $region42: #{tpu_custom_call.1} parent=5 // pred_check_branch
        %219 = sbr.rel (%p216) target = $region44
      $region43: #{tpu_custom_call.1} parent=5 // pred_region
        %s220 = ssub.s32 %s15, 1
        %p221 = scmp.lt.s32.totalorder %s20, 1
        %s222 = scalar_select %p221, %s20, 1
        %s223 = smul.addr %s222, 37
        %s224 = smul.addr %s223, 4
        %s225 = scalar_lea.vmem %s0, %s224
        %p226 = pneg %p41
        %p227 = pneg %p38
        %p228 = pneg %p62
        %p229 = pneg %p59
        %p230 = pneg %p83
        %p231 = pneg %p80
        %p232 = pneg %p104
        %p233 = pneg %p101
        %p234 = pneg %p125
        %p235 = pneg %p122
        %p236 = pneg %p146
        %p237 = pneg %p143
        %p238 = pneg %p172
        %p239 = pneg %p169
        %s240 = sand.u32 %s159, 1
        %s241 = scalar_lea.sflag [#allocation3], %s240
        %s242 = sand.u32 %s159, 1
        %s243 = smul.addr %s242, 16
        %s244 = scalar_lea.vmem [#allocation2], %s243
        %p245 = scmp.lt.s32.totalorder %s20, 1
        %s246 = scalar_select %p245, %s20, 1
        %s247 = smul.addr %s246, 37
        %s248 = smul.addr %s247, 4
        %s249 = scalar_lea.vmem %s0, %s248
        %v251 = vld [vmem:[%s249] sm:$0xf]
        %v252 = vld [vmem:[%s249 + $0x4] sm:$0xf]
        %v253 = vld [vmem:[%s249 + $0x8] sm:$0xf]
        %v254 = vld [vmem:[%s249 + $0xc] sm:$0xf]
        %v255 = vld [vmem:[%s249 + $0x10] sm:$0xf]
        %v256 = vld [vmem:[%s249 + $0x14] sm:$0xf]
        %v257 = vld [vmem:[%s249 + $0x18] sm:$0xf]
        %v258 = vld [vmem:[%s249 + $0x1c] sm:$0xf]
        %v259 = vld [vmem:[%s249 + $0x20] sm:$0xf]
        %v260 = vld [vmem:[%s249 + $0x24] sm:$0xf]
        %v261 = vld [vmem:[%s249 + $0x28] sm:$0xf]
        %v262 = vld [vmem:[%s249 + $0x2c] sm:$0xf]
        %v263 = vld [vmem:[%s249 + $0x30] sm:$0xf]
        %v264 = vld [vmem:[%s249 + $0x34] sm:$0xf]
        %v265 = vld [vmem:[%s249 + $0x38] sm:$0xf]
        %v266 = vld [vmem:[%s249 + $0x3c] sm:$0xf]
        %v267 = vld [vmem:[%s249 + $0x40] sm:$0xf]
        %v268 = vld [vmem:[%s249 + $0x44] sm:$0xf]
        %v269 = vld [vmem:[%s249 + $0x48] sm:$0xf]
        %v270 = vld [vmem:[%s249 + $0x4c] sm:$0xf]
        %v271 = vld [vmem:[%s249 + $0x50] sm:$0xf]
        %v272 = vld [vmem:[%s249 + $0x54] sm:$0xf]
        %v273 = vld [vmem:[%s249 + $0x58] sm:$0xf]
        %v274 = vld [vmem:[%s249 + $0x5c] sm:$0xf]
        %v275 = vld [vmem:[%s249 + $0x60] sm:$0xf]
        %v276 = vld [vmem:[%s249 + $0x64] sm:$0xf]
        %v277 = vld [vmem:[%s249 + $0x68] sm:$0xf]
        %v278 = vld [vmem:[%s249 + $0x6c] sm:$0xf]
        %v279 = vld [vmem:[%s249 + $0x70] sm:$0xf]
        %v280 = vld [vmem:[%s249 + $0x74] sm:$0xf]
        %v281 = vld [vmem:[%s249 + $0x78] sm:$0xf]
        %v282 = vld [vmem:[%s249 + $0x7c] sm:$0xf]
        %v283 = vld [vmem:[%s249 + $0x80] sm:$0xf]
        %v284 = vld [vmem:[%s249 + $0x84] sm:$0xf]
        %v285 = vld [vmem:[%s249 + $0x88] sm:$0xf]
        %v286 = vld [vmem:[%s249 + $0x8c] sm:$0xf]
        %v287 = vld [vmem:[%s249 + $0x90] sm:$0x1]
        %v288 = vunpack.c.l.bf16 %v251
        %v289 = vunpack.c.l.bf16 %v252
        %v290 = vunpack.c.l.bf16 %v253
        %v291 = vunpack.c.l.bf16 %v254
        %v292 = vunpack.c.l.bf16 %v255
        %v293 = vunpack.c.l.bf16 %v256
        %v294 = vunpack.c.l.bf16 %v257
        %v295 = vunpack.c.l.bf16 %v258
        %v296 = vunpack.c.l.bf16 %v259
        %v297 = vunpack.c.l.bf16 %v260
        %v298 = vunpack.c.l.bf16 %v261
        %v299 = vunpack.c.l.bf16 %v262
        %v300 = vunpack.c.l.bf16 %v263
        %v301 = vunpack.c.l.bf16 %v264
        %v302 = vunpack.c.l.bf16 %v265
        %v303 = vunpack.c.l.bf16 %v266
        %v304 = vunpack.c.l.bf16 %v267
        %v305 = vunpack.c.l.bf16 %v268
        %v306 = vunpack.c.l.bf16 %v269
        %v307 = vunpack.c.l.bf16 %v270
        %v308 = vunpack.c.l.bf16 %v271
        %v309 = vunpack.c.l.bf16 %v272
        %v310 = vunpack.c.l.bf16 %v273
        %v311 = vunpack.c.l.bf16 %v274
        %v312 = vunpack.c.l.bf16 %v275
        %v313 = vunpack.c.l.bf16 %v276
        %v314 = vunpack.c.l.bf16 %v277
        %v315 = vunpack.c.l.bf16 %v278
        %v316 = vunpack.c.l.bf16 %v279
        %v317 = vunpack.c.l.bf16 %v280
        %v318 = vunpack.c.l.bf16 %v281
        %v319 = vunpack.c.l.bf16 %v282
        %v320 = vunpack.c.l.bf16 %v283
        %v321 = vunpack.c.l.bf16 %v284
        %v322 = vunpack.c.l.bf16 %v285
        %v323 = vunpack.c.l.bf16 %v286
        %v324 = vunpack.c.l.bf16 %v287
        %v325 = vlaneseq
        %v326 = vshrl.u32 %v325, 7
        %v327 = vadd.s32 %v326, 8
        %v328 = vadd.s32 %v326, 16
        %v329 = vadd.s32 %v326, 24
        %v330 = vadd.s32 %v326, 32
        %v331 = vadd.s32 %v326, 40
        %v332 = vadd.s32 %v326, 48
        %v333 = vadd.s32 %v326, 56
        %v334 = vadd.s32 %v326, 64
        %v335 = vadd.s32 %v326, 72
        %v336 = vadd.s32 %v326, 80
        %v337 = vadd.s32 %v326, 88
        %v338 = vadd.s32 %v326, 96
        %v339 = vadd.s32 %v326, 104
        %v340 = vadd.s32 %v326, 112
        %v341 = vadd.s32 %v326, 120
        %v342 = vadd.s32 %v326, 128
        %v343 = vadd.s32 %v326, 136
        %v344 = vadd.s32 %v326, 144
        %v345 = vadd.s32 %v326, 152
        %v346 = vadd.s32 %v326, 160
        %v347 = vadd.s32 %v326, 168
        %v348 = vadd.s32 %v326, 176
        %v349 = vadd.s32 %v326, 184
        %v350 = vadd.s32 %v326, 192
        %v351 = vadd.s32 %v326, 200
        %v352 = vadd.s32 %v326, 208
        %v353 = vadd.s32 %v326, 216
        %v354 = vadd.s32 %v326, 224
        %v355 = vadd.s32 %v326, 232
        %v356 = vadd.s32 %v326, 240
        %v357 = vadd.s32 %v326, 248
        %vm358 = vcmp.lt.s32.totalorder %v326, 0
        %v359 = vsub.s32 0, %v326
        %v360 = vsel %vm358, %v359, %v326
        %v361 = vshrl.u32 %v360, 4
        %v362 = vand.u32 %v360, 15
        %v363 = vsub.s32 0, %v362
        %v364 = vsel %vm358, %v363, %v362
        %vm365 = vcmp.lt.s32.totalorder %v327, 0
        %v366 = vsub.s32 0, %v327
        %v367 = vsel %vm365, %v366, %v327
        %v368 = vshrl.u32 %v367, 4
        %v369 = vand.u32 %v367, 15
        %v370 = vsub.s32 0, %v369
        %v371 = vsel %vm365, %v370, %v369
        %vm372 = vcmp.lt.s32.totalorder %v328, 0
        %v373 = vsub.s32 0, %v328
        %v374 = vsel %vm372, %v373, %v328
        %v375 = vshrl.u32 %v374, 4
        %v376 = vand.u32 %v374, 15
        %v377 = vsub.s32 0, %v376
        %v378 = vsel %vm372, %v377, %v376
        %vm379 = vcmp.lt.s32.totalorder %v329, 0
        %v380 = vsub.s32 0, %v329
        %v381 = vsel %vm379, %v380, %v329
        %v382 = vshrl.u32 %v381, 4
        %v383 = vand.u32 %v381, 15
        %v384 = vsub.s32 0, %v383
        %v385 = vsel %vm379, %v384, %v383
        %vm386 = vcmp.lt.s32.totalorder %v330, 0
        %v387 = vsub.s32 0, %v330
        %v388 = vsel %vm386, %v387, %v330
        %v389 = vshrl.u32 %v388, 4
        %v390 = vand.u32 %v388, 15
        %v391 = vsub.s32 0, %v390
        %v392 = vsel %vm386, %v391, %v390
        %vm393 = vcmp.lt.s32.totalorder %v331, 0
        %v394 = vsub.s32 0, %v331
        %v395 = vsel %vm393, %v394, %v331
        %v396 = vshrl.u32 %v395, 4
        %v397 = vand.u32 %v395, 15
        %v398 = vsub.s32 0, %v397
        %v399 = vsel %vm393, %v398, %v397
        %vm400 = vcmp.lt.s32.totalorder %v332, 0
        %v401 = vsub.s32 0, %v332
        %v402 = vsel %vm400, %v401, %v332
        %v403 = vshrl.u32 %v402, 4
        %v404 = vand.u32 %v402, 15
        %v405 = vsub.s32 0, %v404
        %v406 = vsel %vm400, %v405, %v404
        %vm407 = vcmp.lt.s32.totalorder %v333, 0
        %v408 = vsub.s32 0, %v333
        %v409 = vsel %vm407, %v408, %v333
        %v410 = vshrl.u32 %v409, 4
        %v411 = vand.u32 %v409, 15
        %v412 = vsub.s32 0, %v411
        %v413 = vsel %vm407, %v412, %v411
        %vm414 = vcmp.lt.s32.totalorder %v334, 0
        %v415 = vsub.s32 0, %v334
        %v416 = vsel %vm414, %v415, %v334
        %v417 = vshrl.u32 %v416, 4
        %v418 = vand.u32 %v416, 15
        %v419 = vsub.s32 0, %v418
        %v420 = vsel %vm414, %v419, %v418
        %vm421 = vcmp.lt.s32.totalorder %v335, 0
        %v422 = vsub.s32 0, %v335
        %v423 = vsel %vm421, %v422, %v335
        %v424 = vshrl.u32 %v423, 4
        %v425 = vand.u32 %v423, 15
        %v426 = vsub.s32 0, %v425
        %v427 = vsel %vm421, %v426, %v425
        %vm428 = vcmp.lt.s32.totalorder %v336, 0
        %v429 = vsub.s32 0, %v336
        %v430 = vsel %vm428, %v429, %v336
        %v431 = vshrl.u32 %v430, 4
        %v432 = vand.u32 %v430, 15
        %v433 = vsub.s32 0, %v432
        %v434 = vsel %vm428, %v433, %v432
        %vm435 = vcmp.lt.s32.totalorder %v337, 0
        %v436 = vsub.s32 0, %v337
        %v437 = vsel %vm435, %v436, %v337
        %v438 = vshrl.u32 %v437, 4
        %v439 = vand.u32 %v437, 15
        %v440 = vsub.s32 0, %v439
        %v441 = vsel %vm435, %v440, %v439
        %vm442 = vcmp.lt.s32.totalorder %v338, 0
        %v443 = vsub.s32 0, %v338
        %v444 = vsel %vm442, %v443, %v338
        %v445 = vshrl.u32 %v444, 4
        %v446 = vand.u32 %v444, 15
        %v447 = vsub.s32 0, %v446
        %v448 = vsel %vm442, %v447, %v446
        %vm449 = vcmp.lt.s32.totalorder %v339, 0
        %v450 = vsub.s32 0, %v339
        %v451 = vsel %vm449, %v450, %v339
        %v452 = vshrl.u32 %v451, 4
        %v453 = vand.u32 %v451, 15
        %v454 = vsub.s32 0, %v453
        %v455 = vsel %vm449, %v454, %v453
        %vm456 = vcmp.lt.s32.totalorder %v340, 0
        %v457 = vsub.s32 0, %v340
        %v458 = vsel %vm456, %v457, %v340
        %v459 = vshrl.u32 %v458, 4
        %v460 = vand.u32 %v458, 15
        %v461 = vsub.s32 0, %v460
        %v462 = vsel %vm456, %v461, %v460
        %vm463 = vcmp.lt.s32.totalorder %v341, 0
        %v464 = vsub.s32 0, %v341
        %v465 = vsel %vm463, %v464, %v341
        %v466 = vshrl.u32 %v465, 4
        %v467 = vand.u32 %v465, 15
        %v468 = vsub.s32 0, %v467
        %v469 = vsel %vm463, %v468, %v467
        %vm470 = vcmp.lt.s32.totalorder %v342, 0
        %v471 = vsub.s32 0, %v342
        %v472 = vsel %vm470, %v471, %v342
        %v473 = vshrl.u32 %v472, 4
        %v474 = vand.u32 %v472, 15
        %v475 = vsub.s32 0, %v474
        %v476 = vsel %vm470, %v475, %v474
        %vm477 = vcmp.lt.s32.totalorder %v343, 0
        %v478 = vsub.s32 0, %v343
        %v479 = vsel %vm477, %v478, %v343
        %v480 = vshrl.u32 %v479, 4
        %v481 = vand.u32 %v479, 15
        %v482 = vsub.s32 0, %v481
        %v483 = vsel %vm477, %v482, %v481
        %vm484 = vcmp.lt.s32.totalorder %v344, 0
        %v485 = vsub.s32 0, %v344
        %v486 = vsel %vm484, %v485, %v344
        %v487 = vshrl.u32 %v486, 4
        %v488 = vand.u32 %v486, 15
        %v489 = vsub.s32 0, %v488
        %v490 = vsel %vm484, %v489, %v488
        %vm491 = vcmp.lt.s32.totalorder %v345, 0
        %v492 = vsub.s32 0, %v345
        %v493 = vsel %vm491, %v492, %v345
        %v494 = vshrl.u32 %v493, 4
        %v495 = vand.u32 %v493, 15
        %v496 = vsub.s32 0, %v495
        %v497 = vsel %vm491, %v496, %v495
        %vm498 = vcmp.lt.s32.totalorder %v346, 0
        %v499 = vsub.s32 0, %v346
        %v500 = vsel %vm498, %v499, %v346
        %v501 = vshrl.u32 %v500, 4
        %v502 = vand.u32 %v500, 15
        %v503 = vsub.s32 0, %v502
        %v504 = vsel %vm498, %v503, %v502
        %vm505 = vcmp.lt.s32.totalorder %v347, 0
        %v506 = vsub.s32 0, %v347
        %v507 = vsel %vm505, %v506, %v347
        %v508 = vshrl.u32 %v507, 4
        %v509 = vand.u32 %v507, 15
        %v510 = vsub.s32 0, %v509
        %v511 = vsel %vm505, %v510, %v509
        %vm512 = vcmp.lt.s32.totalorder %v348, 0
        %v513 = vsub.s32 0, %v348
        %v514 = vsel %vm512, %v513, %v348
        %v515 = vshrl.u32 %v514, 4
        %v516 = vand.u32 %v514, 15
        %v517 = vsub.s32 0, %v516
        %v518 = vsel %vm512, %v517, %v516
        %vm519 = vcmp.lt.s32.totalorder %v349, 0
        %v520 = vsub.s32 0, %v349
        %v521 = vsel %vm519, %v520, %v349
        %v522 = vshrl.u32 %v521, 4
        %v523 = vand.u32 %v521, 15
        %v524 = vsub.s32 0, %v523
        %v525 = vsel %vm519, %v524, %v523
        %vm526 = vcmp.lt.s32.totalorder %v350, 0
        %v527 = vsub.s32 0, %v350
        %v528 = vsel %vm526, %v527, %v350
        %v529 = vshrl.u32 %v528, 4
        %v530 = vand.u32 %v528, 15
        %v531 = vsub.s32 0, %v530
        %v532 = vsel %vm526, %v531, %v530
        %vm533 = vcmp.lt.s32.totalorder %v351, 0
        %v534 = vsub.s32 0, %v351
        %v535 = vsel %vm533, %v534, %v351
        %v536 = vshrl.u32 %v535, 4
        %v537 = vand.u32 %v535, 15
        %v538 = vsub.s32 0, %v537
        %v539 = vsel %vm533, %v538, %v537
        %vm540 = vcmp.lt.s32.totalorder %v352, 0
        %v541 = vsub.s32 0, %v352
        %v542 = vsel %vm540, %v541, %v352
        %v543 = vshrl.u32 %v542, 4
        %v544 = vand.u32 %v542, 15
        %v545 = vsub.s32 0, %v544
        %v546 = vsel %vm540, %v545, %v544
        %vm547 = vcmp.lt.s32.totalorder %v353, 0
        %v548 = vsub.s32 0, %v353
        %v549 = vsel %vm547, %v548, %v353
        %v550 = vshrl.u32 %v549, 4
        %v551 = vand.u32 %v549, 15
        %v552 = vsub.s32 0, %v551
        %v553 = vsel %vm547, %v552, %v551
        %vm554 = vcmp.lt.s32.totalorder %v354, 0
        %v555 = vsub.s32 0, %v354
        %v556 = vsel %vm554, %v555, %v354
        %v557 = vshrl.u32 %v556, 4
        %v558 = vand.u32 %v556, 15
        %v559 = vsub.s32 0, %v558
        %v560 = vsel %vm554, %v559, %v558
        %vm561 = vcmp.lt.s32.totalorder %v355, 0
        %v562 = vsub.s32 0, %v355
        %v563 = vsel %vm561, %v562, %v355
        %v564 = vshrl.u32 %v563, 4
        %v565 = vand.u32 %v563, 15
        %v566 = vsub.s32 0, %v565
        %v567 = vsel %vm561, %v566, %v565
        %vm568 = vcmp.lt.s32.totalorder %v356, 0
        %v569 = vsub.s32 0, %v356
        %v570 = vsel %vm568, %v569, %v356
        %v571 = vshrl.u32 %v570, 4
        %v572 = vand.u32 %v570, 15
        %v573 = vsub.s32 0, %v572
        %v574 = vsel %vm568, %v573, %v572
        %vm575 = vcmp.lt.s32.totalorder %v357, 0
        %v576 = vsub.s32 0, %v357
        %v577 = vsel %vm575, %v576, %v357
        %v578 = vshrl.u32 %v577, 4
        %v579 = vand.u32 %v577, 15
        %v580 = vsub.s32 0, %v579
        %v581 = vsel %vm575, %v580, %v579
        %vm582 = vcmp.ne.s32.totalorder %v364, 0
        %vm583 = vcmp.ne.s32.totalorder %v371, 0
        %vm584 = vcmp.ne.s32.totalorder %v378, 0
        %vm585 = vcmp.ne.s32.totalorder %v385, 0
        %vm586 = vcmp.ne.s32.totalorder %v392, 0
        %vm587 = vcmp.ne.s32.totalorder %v399, 0
        %vm588 = vcmp.ne.s32.totalorder %v406, 0
        %vm589 = vcmp.ne.s32.totalorder %v413, 0
        %vm590 = vcmp.ne.s32.totalorder %v420, 0
        %vm591 = vcmp.ne.s32.totalorder %v427, 0
        %vm592 = vcmp.ne.s32.totalorder %v434, 0
        %vm593 = vcmp.ne.s32.totalorder %v441, 0
        %vm594 = vcmp.ne.s32.totalorder %v448, 0
        %vm595 = vcmp.ne.s32.totalorder %v455, 0
        %vm596 = vcmp.ne.s32.totalorder %v462, 0
        %vm597 = vcmp.ne.s32.totalorder %v469, 0
        %vm598 = vcmp.ne.s32.totalorder %v476, 0
        %vm599 = vcmp.ne.s32.totalorder %v483, 0
        %vm600 = vcmp.ne.s32.totalorder %v490, 0
        %vm601 = vcmp.ne.s32.totalorder %v497, 0
        %vm602 = vcmp.ne.s32.totalorder %v504, 0
        %vm603 = vcmp.ne.s32.totalorder %v511, 0
        %vm604 = vcmp.ne.s32.totalorder %v518, 0
        %vm605 = vcmp.ne.s32.totalorder %v525, 0
        %vm606 = vcmp.ne.s32.totalorder %v532, 0
        %vm607 = vcmp.ne.s32.totalorder %v539, 0
        %vm608 = vcmp.ne.s32.totalorder %v546, 0
        %vm609 = vcmp.ne.s32.totalorder %v553, 0
        %vm610 = vcmp.ne.s32.totalorder %v560, 0
        %vm611 = vcmp.ne.s32.totalorder %v567, 0
        %vm612 = vcmp.ne.s32.totalorder %v574, 0
        %vm613 = vcmp.ne.s32.totalorder %v581, 0
        %vm614 = vcmp.lt.s32.totalorder %v364, 0
        %vm615 = vcmp.lt.s32.totalorder %v371, 0
        %vm616 = vcmp.lt.s32.totalorder %v378, 0
        %vm617 = vcmp.lt.s32.totalorder %v385, 0
        %vm618 = vcmp.lt.s32.totalorder %v392, 0
        %vm619 = vcmp.lt.s32.totalorder %v399, 0
        %vm620 = vcmp.lt.s32.totalorder %v406, 0
        %vm621 = vcmp.lt.s32.totalorder %v413, 0
        %vm622 = vcmp.lt.s32.totalorder %v420, 0
        %vm623 = vcmp.lt.s32.totalorder %v427, 0
        %vm624 = vcmp.lt.s32.totalorder %v434, 0
        %vm625 = vcmp.lt.s32.totalorder %v441, 0
        %vm626 = vcmp.lt.s32.totalorder %v448, 0
        %vm627 = vcmp.lt.s32.totalorder %v455, 0
        %vm628 = vcmp.lt.s32.totalorder %v462, 0
        %vm629 = vcmp.lt.s32.totalorder %v469, 0
        %vm630 = vcmp.lt.s32.totalorder %v476, 0
        %vm631 = vcmp.lt.s32.totalorder %v483, 0
        %vm632 = vcmp.lt.s32.totalorder %v490, 0
        %vm633 = vcmp.lt.s32.totalorder %v497, 0
        %vm634 = vcmp.lt.s32.totalorder %v504, 0
        %vm635 = vcmp.lt.s32.totalorder %v511, 0
        %vm636 = vcmp.lt.s32.totalorder %v518, 0
        %vm637 = vcmp.lt.s32.totalorder %v525, 0
        %vm638 = vcmp.lt.s32.totalorder %v532, 0
        %vm639 = vcmp.lt.s32.totalorder %v539, 0
        %vm640 = vcmp.lt.s32.totalorder %v546, 0
        %vm641 = vcmp.lt.s32.totalorder %v553, 0
        %vm642 = vcmp.lt.s32.totalorder %v560, 0
        %vm643 = vcmp.lt.s32.totalorder %v567, 0
        %vm644 = vcmp.lt.s32.totalorder %v574, 0
        %vm645 = vcmp.lt.s32.totalorder %v581, 0
        %vm646 = vmand %vm614, %vm582
        %vm647 = vmand %vm615, %vm583
        %vm648 = vmand %vm616, %vm584
        %vm649 = vmand %vm617, %vm585
        %vm650 = vmand %vm618, %vm586
        %vm651 = vmand %vm619, %vm587
        %vm652 = vmand %vm620, %vm588
        %vm653 = vmand %vm621, %vm589
        %vm654 = vmand %vm622, %vm590
        %vm655 = vmand %vm623, %vm591
        %vm656 = vmand %vm624, %vm592
        %vm657 = vmand %vm625, %vm593
        %vm658 = vmand %vm626, %vm594
        %vm659 = vmand %vm627, %vm595
        %vm660 = vmand %vm628, %vm596
        %vm661 = vmand %vm629, %vm597
        %vm662 = vmand %vm630, %vm598
        %vm663 = vmand %vm631, %vm599
        %vm664 = vmand %vm632, %vm600
        %vm665 = vmand %vm633, %vm601
        %vm666 = vmand %vm634, %vm602
        %vm667 = vmand %vm635, %vm603
        %vm668 = vmand %vm636, %vm604
        %vm669 = vmand %vm637, %vm605
        %vm670 = vmand %vm638, %vm606
        %vm671 = vmand %vm639, %vm607
        %vm672 = vmand %vm640, %vm608
        %vm673 = vmand %vm641, %vm609
        %vm674 = vmand %vm642, %vm610
        %vm675 = vmand %vm643, %vm611
        %vm676 = vmand %vm644, %vm612
        %vm677 = vmand %vm645, %vm613
        %v678 = vadd.s32 %v364, 16
        %v679 = vadd.s32 %v371, 16
        %v680 = vadd.s32 %v378, 16
        %v681 = vadd.s32 %v385, 16
        %v682 = vadd.s32 %v392, 16
        %v683 = vadd.s32 %v399, 16
        %v684 = vadd.s32 %v406, 16
        %v685 = vadd.s32 %v413, 16
        %v686 = vadd.s32 %v420, 16
        %v687 = vadd.s32 %v427, 16
        %v688 = vadd.s32 %v434, 16
        %v689 = vadd.s32 %v441, 16
        %v690 = vadd.s32 %v448, 16
        %v691 = vadd.s32 %v455, 16
        %v692 = vadd.s32 %v462, 16
        %v693 = vadd.s32 %v469, 16
        %v694 = vadd.s32 %v476, 16
        %v695 = vadd.s32 %v483, 16
        %v696 = vadd.s32 %v490, 16
        %v697 = vadd.s32 %v497, 16
        %v698 = vadd.s32 %v504, 16
        %v699 = vadd.s32 %v511, 16
        %v700 = vadd.s32 %v518, 16
        %v701 = vadd.s32 %v525, 16
        %v702 = vadd.s32 %v532, 16
        %v703 = vadd.s32 %v539, 16
        %v704 = vadd.s32 %v546, 16
        %v705 = vadd.s32 %v553, 16
        %v706 = vadd.s32 %v560, 16
        %v707 = vadd.s32 %v567, 16
        %v708 = vadd.s32 %v574, 16
        %v709 = vadd.s32 %v581, 16
        %v710 = vsel %vm646, %v678, %v364
        %v711 = vsel %vm647, %v679, %v371
        %v712 = vsel %vm648, %v680, %v378
        %v713 = vsel %vm649, %v681, %v385
        %v714 = vsel %vm650, %v682, %v392
        %v715 = vsel %vm651, %v683, %v399
        %v716 = vsel %vm652, %v684, %v406
        %v717 = vsel %vm653, %v685, %v413
        %v718 = vsel %vm654, %v686, %v420
        %v719 = vsel %vm655, %v687, %v427
        %v720 = vsel %vm656, %v688, %v434
        %v721 = vsel %vm657, %v689, %v441
        %v722 = vsel %vm658, %v690, %v448
        %v723 = vsel %vm659, %v691, %v455
        %v724 = vsel %vm660, %v692, %v462
        %v725 = vsel %vm661, %v693, %v469
        %v726 = vsel %vm662, %v694, %v476
        %v727 = vsel %vm663, %v695, %v483
        %v728 = vsel %vm664, %v696, %v490
        %v729 = vsel %vm665, %v697, %v497
        %v730 = vsel %vm666, %v698, %v504
        %v731 = vsel %vm667, %v699, %v511
        %v732 = vsel %vm668, %v700, %v518
        %v733 = vsel %vm669, %v701, %v525
        %v734 = vsel %vm670, %v702, %v532
        %v735 = vsel %vm671, %v703, %v539
        %v736 = vsel %vm672, %v704, %v546
        %v737 = vsel %vm673, %v705, %v553
        %v738 = vsel %vm674, %v706, %v560
        %v739 = vsel %vm675, %v707, %v567
        %v740 = vsel %vm676, %v708, %v574
        %v741 = vsel %vm677, %v709, %v581
        %vm742 = vcmp.gt.s32.totalorder %v710, 0
        %vm743 = vcmp.gt.s32.totalorder %v711, 0
        %vm744 = vcmp.gt.s32.totalorder %v712, 0
        %vm745 = vcmp.gt.s32.totalorder %v713, 0
        %vm746 = vcmp.gt.s32.totalorder %v714, 0
        %vm747 = vcmp.gt.s32.totalorder %v715, 0
        %vm748 = vcmp.gt.s32.totalorder %v716, 0
        %vm749 = vcmp.gt.s32.totalorder %v717, 0
        %vm750 = vcmp.gt.s32.totalorder %v718, 0
        %vm751 = vcmp.gt.s32.totalorder %v719, 0
        %vm752 = vcmp.gt.s32.totalorder %v720, 0
        %vm753 = vcmp.gt.s32.totalorder %v721, 0
        %vm754 = vcmp.gt.s32.totalorder %v722, 0
        %vm755 = vcmp.gt.s32.totalorder %v723, 0
        %vm756 = vcmp.gt.s32.totalorder %v724, 0
        %vm757 = vcmp.gt.s32.totalorder %v725, 0
        %vm758 = vcmp.gt.s32.totalorder %v726, 0
        %vm759 = vcmp.gt.s32.totalorder %v727, 0
        %vm760 = vcmp.gt.s32.totalorder %v728, 0
        %vm761 = vcmp.gt.s32.totalorder %v729, 0
        %vm762 = vcmp.gt.s32.totalorder %v730, 0
        %vm763 = vcmp.gt.s32.totalorder %v731, 0
        %vm764 = vcmp.gt.s32.totalorder %v732, 0
        %vm765 = vcmp.gt.s32.totalorder %v733, 0
        %vm766 = vcmp.gt.s32.totalorder %v734, 0
        %vm767 = vcmp.gt.s32.totalorder %v735, 0
        %vm768 = vcmp.gt.s32.totalorder %v736, 0
        %vm769 = vcmp.gt.s32.totalorder %v737, 0
        %vm770 = vcmp.gt.s32.totalorder %v738, 0
        %vm771 = vcmp.gt.s32.totalorder %v739, 0
        %vm772 = vcmp.gt.s32.totalorder %v740, 0
        %vm773 = vcmp.gt.s32.totalorder %v741, 0
        %vm774 = vcmp.lt.s32.totalorder %v710, 15
        %vm775 = vcmp.lt.s32.totalorder %v711, 15
        %vm776 = vcmp.lt.s32.totalorder %v712, 15
        %vm777 = vcmp.lt.s32.totalorder %v713, 15
        %vm778 = vcmp.lt.s32.totalorder %v714, 15
        %vm779 = vcmp.lt.s32.totalorder %v715, 15
        %vm780 = vcmp.lt.s32.totalorder %v716, 15
        %vm781 = vcmp.lt.s32.totalorder %v717, 15
        %vm782 = vcmp.lt.s32.totalorder %v718, 15
        %vm783 = vcmp.lt.s32.totalorder %v719, 15
        %vm784 = vcmp.lt.s32.totalorder %v720, 15
        %vm785 = vcmp.lt.s32.totalorder %v721, 15
        %vm786 = vcmp.lt.s32.totalorder %v722, 15
        %vm787 = vcmp.lt.s32.totalorder %v723, 15
        %vm788 = vcmp.lt.s32.totalorder %v724, 15
        %vm789 = vcmp.lt.s32.totalorder %v725, 15
        %vm790 = vcmp.lt.s32.totalorder %v726, 15
        %vm791 = vcmp.lt.s32.totalorder %v727, 15
        %vm792 = vcmp.lt.s32.totalorder %v728, 15
        %vm793 = vcmp.lt.s32.totalorder %v729, 15
        %vm794 = vcmp.lt.s32.totalorder %v730, 15
        %vm795 = vcmp.lt.s32.totalorder %v731, 15
        %vm796 = vcmp.lt.s32.totalorder %v732, 15
        %vm797 = vcmp.lt.s32.totalorder %v733, 15
        %vm798 = vcmp.lt.s32.totalorder %v734, 15
        %vm799 = vcmp.lt.s32.totalorder %v735, 15
        %vm800 = vcmp.lt.s32.totalorder %v736, 15
        %vm801 = vcmp.lt.s32.totalorder %v737, 15
        %vm802 = vcmp.lt.s32.totalorder %v738, 15
        %vm803 = vcmp.lt.s32.totalorder %v739, 15
        %vm804 = vcmp.lt.s32.totalorder %v740, 15
        %vm805 = vcmp.lt.s32.totalorder %v741, 15
        %v806 = vsel %vm742, 1, 0
        %v807 = vsel %vm743, 1, 0
        %v808 = vsel %vm744, 1, 0
        %v809 = vsel %vm745, 1, 0
        %v810 = vsel %vm746, 1, 0
        %v811 = vsel %vm747, 1, 0
        %v812 = vsel %vm748, 1, 0
        %v813 = vsel %vm749, 1, 0
        %v814 = vsel %vm750, 1, 0
        %v815 = vsel %vm751, 1, 0
        %v816 = vsel %vm752, 1, 0
        %v817 = vsel %vm753, 1, 0
        %v818 = vsel %vm754, 1, 0
        %v819 = vsel %vm755, 1, 0
        %v820 = vsel %vm756, 1, 0
        %v821 = vsel %vm757, 1, 0
        %v822 = vsel %vm758, 1, 0
        %v823 = vsel %vm759, 1, 0
        %v824 = vsel %vm760, 1, 0
        %v825 = vsel %vm761, 1, 0
        %v826 = vsel %vm762, 1, 0
        %v827 = vsel %vm763, 1, 0
        %v828 = vsel %vm764, 1, 0
        %v829 = vsel %vm765, 1, 0
        %v830 = vsel %vm766, 1, 0
        %v831 = vsel %vm767, 1, 0
        %v832 = vsel %vm768, 1, 0
        %v833 = vsel %vm769, 1, 0
        %v834 = vsel %vm770, 1, 0
        %v835 = vsel %vm771, 1, 0
        %v836 = vsel %vm772, 1, 0
        %v837 = vsel %vm773, 1, 0
        %vm838 = vcmp.eq.s32.totalorder %v806, 1
        %vm839 = vcmp.eq.s32.totalorder %v807, 1
        %vm840 = vcmp.eq.s32.totalorder %v808, 1
        %vm841 = vcmp.eq.s32.totalorder %v809, 1
        %vm842 = vcmp.eq.s32.totalorder %v810, 1
        %vm843 = vcmp.eq.s32.totalorder %v811, 1
        %vm844 = vcmp.eq.s32.totalorder %v812, 1
        %vm845 = vcmp.eq.s32.totalorder %v813, 1
        %vm846 = vcmp.eq.s32.totalorder %v814, 1
        %vm847 = vcmp.eq.s32.totalorder %v815, 1
        %vm848 = vcmp.eq.s32.totalorder %v816, 1
        %vm849 = vcmp.eq.s32.totalorder %v817, 1
        %vm850 = vcmp.eq.s32.totalorder %v818, 1
        %vm851 = vcmp.eq.s32.totalorder %v819, 1
        %vm852 = vcmp.eq.s32.totalorder %v820, 1
        %vm853 = vcmp.eq.s32.totalorder %v821, 1
        %vm854 = vcmp.eq.s32.totalorder %v822, 1
        %vm855 = vcmp.eq.s32.totalorder %v823, 1
        %vm856 = vcmp.eq.s32.totalorder %v824, 1
        %vm857 = vcmp.eq.s32.totalorder %v825, 1
        %vm858 = vcmp.eq.s32.totalorder %v826, 1
        %vm859 = vcmp.eq.s32.totalorder %v827, 1
        %vm860 = vcmp.eq.s32.totalorder %v828, 1
        %vm861 = vcmp.eq.s32.totalorder %v829, 1
        %vm862 = vcmp.eq.s32.totalorder %v830, 1
        %vm863 = vcmp.eq.s32.totalorder %v831, 1
        %vm864 = vcmp.eq.s32.totalorder %v832, 1
        %vm865 = vcmp.eq.s32.totalorder %v833, 1
        %vm866 = vcmp.eq.s32.totalorder %v834, 1
        %vm867 = vcmp.eq.s32.totalorder %v835, 1
        %vm868 = vcmp.eq.s32.totalorder %v836, 1
        %vm869 = vcmp.eq.s32.totalorder %v837, 1
        %v870 = vsel %vm838, %v288, 0.0
        %v871 = vsel %vm839, %v289, 0.0
        %v872 = vsel %vm840, %v290, 0.0
        %v873 = vsel %vm841, %v291, 0.0
        %v874 = vsel %vm842, %v292, 0.0
        %v875 = vsel %vm843, %v293, 0.0
        %v876 = vsel %vm844, %v294, 0.0
        %v877 = vsel %vm845, %v295, 0.0
        %v878 = vsel %vm846, %v296, 0.0
        %v879 = vsel %vm847, %v297, 0.0
        %v880 = vsel %vm848, %v298, 0.0
        %v881 = vsel %vm849, %v299, 0.0
        %v882 = vsel %vm850, %v300, 0.0
        %v883 = vsel %vm851, %v301, 0.0
        %v884 = vsel %vm852, %v302, 0.0
        %v885 = vsel %vm853, %v303, 0.0
        %v886 = vsel %vm854, %v304, 0.0
        %v887 = vsel %vm855, %v305, 0.0
        %v888 = vsel %vm856, %v306, 0.0
        %v889 = vsel %vm857, %v307, 0.0
        %v890 = vsel %vm858, %v308, 0.0
        %v891 = vsel %vm859, %v309, 0.0
        %v892 = vsel %vm860, %v310, 0.0
        %v893 = vsel %vm861, %v311, 0.0
        %v894 = vsel %vm862, %v312, 0.0
        %v895 = vsel %vm863, %v313, 0.0
        %v896 = vsel %vm864, %v314, 0.0
        %v897 = vsel %vm865, %v315, 0.0
        %v898 = vsel %vm866, %v316, 0.0
        %v899 = vsel %vm867, %v317, 0.0
        %v900 = vsel %vm868, %v318, 0.0
        %v901 = vsel %vm869, %v319, 0.0
        %v902 = vpack.c.bf16 %v871, %v870
        %v903 = vpack.c.bf16 %v873, %v872
        %v904 = vpack.c.bf16 %v875, %v874
        %v905 = vpack.c.bf16 %v877, %v876
        %v906 = vpack.c.bf16 %v879, %v878
        %v907 = vpack.c.bf16 %v881, %v880
        %v908 = vpack.c.bf16 %v883, %v882
        %v909 = vpack.c.bf16 %v885, %v884
        %v910 = vpack.c.bf16 %v887, %v886
        %v911 = vpack.c.bf16 %v889, %v888
        %v912 = vpack.c.bf16 %v891, %v890
        %v913 = vpack.c.bf16 %v893, %v892
        %v914 = vpack.c.bf16 %v895, %v894
        %v915 = vpack.c.bf16 %v897, %v896
        %v916 = vpack.c.bf16 %v899, %v898
        %v917 = vpack.c.bf16 %v901, %v900
        %v918 = vld [vmem:[%s1] sm:$0x3]
        %v919 = vpack.c.bf16 %v289, %v288
        %v920 = vpack.c.bf16 %v291, %v290
        %v921 = vpack.c.bf16 %v293, %v292
        %v922 = vpack.c.bf16 %v295, %v294
        %v923 = vpack.c.bf16 %v297, %v296
        %v924 = vpack.c.bf16 %v299, %v298
        %v925 = vpack.c.bf16 %v301, %v300
        %v926 = vpack.c.bf16 %v303, %v302
        %v927 = vpack.c.bf16 %v305, %v304
        %v928 = vpack.c.bf16 %v307, %v306
        %v929 = vpack.c.bf16 %v309, %v308
        %v930 = vpack.c.bf16 %v311, %v310
        %v931 = vpack.c.bf16 %v313, %v312
        %v932 = vpack.c.bf16 %v315, %v314
        %v933 = vpack.c.bf16 %v317, %v316
        %v934 = vpack.c.bf16 %v319, %v318
        %v935 = vpack.c.bf16 %v320, %v320
        %s936 = scalar_lea.vmem %s1, 2
        %v937 = vld [vmem:[%s936] sm:$0x3]
        %vm938 = vsmask.f32 7424
        %v940 = vshrl.u32 %v919, 16
        %v942 = vshll.u32 %v919, 16
        %v944 = vrot.slane %v942, 1
        %v945 = vor.u32 %v940, %v944
        %v947 = vshll.u32 %v920, 16
        %v949 = vrot.slane %v947, 1
        %v950 = vsel %vm938, %v945, %v949
        %v951 = vshrl.u32 %v920, 16
        %v953 = vor.u32 %v951, %v949
        %v955 = vshll.u32 %v921, 16
        %v957 = vrot.slane %v955, 1
        %v958 = vsel %vm938, %v953, %v957
        %v959 = vshrl.u32 %v921, 16
        %v961 = vor.u32 %v959, %v957
        %v963 = vshll.u32 %v922, 16
        %v965 = vrot.slane %v963, 1
        %v966 = vsel %vm938, %v961, %v965
        %v967 = vshrl.u32 %v922, 16
        %v969 = vor.u32 %v967, %v965
        %v971 = vshll.u32 %v923, 16
        %v973 = vrot.slane %v971, 1
        %v974 = vsel %vm938, %v969, %v973
        %v975 = vshrl.u32 %v923, 16
        %v977 = vor.u32 %v975, %v973
        %v979 = vshll.u32 %v924, 16
        %v981 = vrot.slane %v979, 1
        %v982 = vsel %vm938, %v977, %v981
        %v983 = vshrl.u32 %v924, 16
        %v985 = vor.u32 %v983, %v981
        %v987 = vshll.u32 %v925, 16
        %v989 = vrot.slane %v987, 1
        %v990 = vsel %vm938, %v985, %v989
        %v991 = vshrl.u32 %v925, 16
        %v993 = vor.u32 %v991, %v989
        %v995 = vshll.u32 %v926, 16
        %v997 = vrot.slane %v995, 1
        %v998 = vsel %vm938, %v993, %v997
        %v999 = vshrl.u32 %v926, 16
        %v1001 = vor.u32 %v999, %v997
        %v1003 = vshll.u32 %v927, 16
        %v1005 = vrot.slane %v1003, 1
        %v1006 = vsel %vm938, %v1001, %v1005
        %v1007 = vshrl.u32 %v927, 16
        %v1009 = vor.u32 %v1007, %v1005
        %v1011 = vshll.u32 %v928, 16
        %v1013 = vrot.slane %v1011, 1
        %v1014 = vsel %vm938, %v1009, %v1013
        %v1015 = vshrl.u32 %v928, 16
        %v1017 = vor.u32 %v1015, %v1013
        %v1019 = vshll.u32 %v929, 16
        %v1021 = vrot.slane %v1019, 1
        %v1022 = vsel %vm938, %v1017, %v1021
        %v1023 = vshrl.u32 %v929, 16
        %v1025 = vor.u32 %v1023, %v1021
        %v1027 = vshll.u32 %v930, 16
        %v1029 = vrot.slane %v1027, 1
        %v1030 = vsel %vm938, %v1025, %v1029
        %v1031 = vshrl.u32 %v930, 16
        %v1033 = vor.u32 %v1031, %v1029
        %v1035 = vshll.u32 %v931, 16
        %v1037 = vrot.slane %v1035, 1
        %v1038 = vsel %vm938, %v1033, %v1037
        %v1039 = vshrl.u32 %v931, 16
        %v1041 = vor.u32 %v1039, %v1037
        %v1043 = vshll.u32 %v932, 16
        %v1045 = vrot.slane %v1043, 1
        %v1046 = vsel %vm938, %v1041, %v1045
        %v1047 = vshrl.u32 %v932, 16
        %v1049 = vor.u32 %v1047, %v1045
        %v1051 = vshll.u32 %v933, 16
        %v1053 = vrot.slane %v1051, 1
        %v1054 = vsel %vm938, %v1049, %v1053
        %v1055 = vshrl.u32 %v933, 16
        %v1057 = vor.u32 %v1055, %v1053
        %v1059 = vshll.u32 %v934, 16
        %v1061 = vrot.slane %v1059, 1
        %v1062 = vsel %vm938, %v1057, %v1061
        %v1063 = vshrl.u32 %v934, 16
        %v1065 = vor.u32 %v1063, %v1061
        %v1067 = vshll.u32 %v935, 16
        %v1069 = vrot.slane %v1067, 1
        %v1070 = vsel %vm938, %v1065, %v1069
        %vm1071 = vcmask 31744
        %v1073 = vsel %vm1071, %v950, 0
        %v1076 = vsel %vm1071, %v958, 0
        %v1079 = vsel %vm1071, %v966, 0
        %v1082 = vsel %vm1071, %v974, 0
        %v1085 = vsel %vm1071, %v982, 0
        %v1088 = vsel %vm1071, %v990, 0
        %v1091 = vsel %vm1071, %v998, 0
        %v1094 = vsel %vm1071, %v1006, 0
        %v1097 = vsel %vm1071, %v1014, 0
        %v1100 = vsel %vm1071, %v1022, 0
        %v1103 = vsel %vm1071, %v1030, 0
        %v1106 = vsel %vm1071, %v1038, 0
        %v1109 = vsel %vm1071, %v1046, 0
        %v1112 = vsel %vm1071, %v1054, 0
        %v1115 = vsel %vm1071, %v1062, 0
        %v1118 = vsel %vm1071, %v1070, 0
        %vm1120 = vcmask 1041408
        %v1122 = vsel %vm1120, %v937, 0
        %1124 = vmatprep.subr.bf16.mxu0 0
        %1125 = vmatpush1.bf16.msra.mxu0 0
        %1126 = vmatprep.subr.bf16.mxu0 0
        %1127 = vmatpush1.bf16.msra.mxu0 0
        %1128 = vmatprep.subr.bf16.mxu0 0
        %1129 = vmatpush1.bf16.msra.mxu0 0
        %1130 = vmatprep.subr.bf16.mxu0 0
        %1131 = vmatpush1.bf16.msra.mxu0 0
        %1132 = vmatprep.subr.bf16.mxu0 0
        %1133 = vmatpush1.bf16.msra.mxu0 0
        %1134 = vmatprep.subr.bf16.mxu0 0
        %1135 = vmatpush1.bf16.msra.mxu0 0
        %1136 = vmatprep.subr.bf16.mxu0 0
        %1137 = vmatpush1.bf16.msra.mxu0 0
        %1138 = vmatprep.subr.bf16.mxu0 0
        %1139 = vmatpush1.bf16.msra.mxu0 %v1122
        %1140 = vmatprep.subr.bf16.mxu0 0
        %1141 = vmatpush2.bf16.msra.mxu0 0
        %1142 = vmatprep.subr.bf16.mxu0 0
        %1143 = vmatpush2.bf16.msra.mxu0 0
        %1144 = vmatprep.subr.bf16.mxu0 0
        %1145 = vmatpush2.bf16.msra.mxu0 0
        %1146 = vmatprep.subr.bf16.mxu0 0
        %1147 = vmatpush2.bf16.msra.mxu0 0
        %1148 = vmatprep.subr.bf16.mxu0 0
        %1149 = vmatpush2.bf16.msra.mxu0 0
        %1150 = vmatprep.subr.bf16.mxu0 0
        %1151 = vmatpush2.bf16.msra.mxu0 0
        %1152 = vmatprep.subr.bf16.mxu0 0
        %1153 = vmatpush2.bf16.msra.mxu0 0
        %1154 = vmatprep.subr.bf16.mxu0 0
        %1155 = vmatpush2.bf16.msra.mxu0 0
        %1156 = vmatprep.mubr.bf16.mxu0 0
        %1157 = vmatmul.mubr.bf16.gmra.mxu0 %v1073
        %v1158 = vpop.f32.mrf.mxu0
        %v1159 = vadd.f32 0.0, %v1158
        %v1160 = vpop.f32.mrf.mxu0
        %v1161 = vpop.f32.mrf.mxu0
        %v1162 = vadd.f32 0.0, %v1161
        %v1163 = vpop.f32.mrf.mxu0
        %1164 = vmatprep.mubr.bf16.mxu0 0
        %1165 = vmatmul.mubr.bf16.gmra.mxu0 %v1076
        %v1166 = vpop.f32.mrf.mxu0
        %v1167 = vadd.f32 0.0, %v1166
        %v1168 = vpop.f32.mrf.mxu0
        %v1169 = vpop.f32.mrf.mxu0
        %v1170 = vadd.f32 0.0, %v1169
        %v1171 = vpop.f32.mrf.mxu0
        %1172 = vmatprep.mubr.bf16.mxu0 0
        %1173 = vmatmul.mubr.bf16.gmra.mxu0 %v1079
        %v1174 = vpop.f32.mrf.mxu0
        %v1175 = vadd.f32 0.0, %v1174
        %v1176 = vpop.f32.mrf.mxu0
        %v1177 = vpop.f32.mrf.mxu0
        %v1178 = vadd.f32 0.0, %v1177
        %v1179 = vpop.f32.mrf.mxu0
        %1180 = vmatprep.mubr.bf16.mxu0 0
        %1181 = vmatmul.mubr.bf16.gmra.mxu0 %v1082
        %v1182 = vpop.f32.mrf.mxu0
        %v1183 = vadd.f32 0.0, %v1182
        %v1184 = vpop.f32.mrf.mxu0
        %v1185 = vpop.f32.mrf.mxu0
        %v1186 = vadd.f32 0.0, %v1185
        %v1187 = vpop.f32.mrf.mxu0
        %1188 = vmatprep.mubr.bf16.mxu0 0
        %1189 = vmatmul.mubr.bf16.gmra.mxu0 %v1085
        %v1190 = vpop.f32.mrf.mxu0
        %v1191 = vadd.f32 0.0, %v1190
        %v1192 = vpop.f32.mrf.mxu0
        %v1193 = vpop.f32.mrf.mxu0
        %v1194 = vadd.f32 0.0, %v1193
        %v1195 = vpop.f32.mrf.mxu0
        %1196 = vmatprep.mubr.bf16.mxu0 0
        %1197 = vmatmul.mubr.bf16.gmra.mxu0 %v1088
        %v1198 = vpop.f32.mrf.mxu0
        %v1199 = vadd.f32 0.0, %v1198
        %v1200 = vpop.f32.mrf.mxu0
        %v1201 = vpop.f32.mrf.mxu0
        %v1202 = vadd.f32 0.0, %v1201
        %v1203 = vpop.f32.mrf.mxu0
        %1204 = vmatprep.mubr.bf16.mxu0 0
        %1205 = vmatmul.mubr.bf16.gmra.mxu0 %v1091
        %v1206 = vpop.f32.mrf.mxu0
        %v1207 = vadd.f32 0.0, %v1206
        %v1208 = vpop.f32.mrf.mxu0
        %v1209 = vpop.f32.mrf.mxu0
        %v1210 = vadd.f32 0.0, %v1209
        %v1211 = vpop.f32.mrf.mxu0
        %1212 = vmatprep.mubr.bf16.mxu0 0
        %1213 = vmatmul.mubr.bf16.gmra.mxu0 %v1094
        %v1214 = vpop.f32.mrf.mxu0
        %v1215 = vadd.f32 0.0, %v1214
        %v1216 = vpop.f32.mrf.mxu0
        %v1217 = vpop.f32.mrf.mxu0
        %v1218 = vadd.f32 0.0, %v1217
        %v1219 = vpop.f32.mrf.mxu0
        %1220 = vmatprep.mubr.bf16.mxu0 0
        %1221 = vmatmul.mubr.bf16.gmra.mxu0 %v1097
        %v1222 = vpop.f32.mrf.mxu0
        %v1223 = vadd.f32 0.0, %v1222
        %v1224 = vpop.f32.mrf.mxu0
        %v1225 = vpop.f32.mrf.mxu0
        %v1226 = vadd.f32 0.0, %v1225
        %v1227 = vpop.f32.mrf.mxu0
        %1228 = vmatprep.mubr.bf16.mxu0 0
        %1229 = vmatmul.mubr.bf16.gmra.mxu0 %v1100
        %v1230 = vpop.f32.mrf.mxu0
        %v1231 = vadd.f32 0.0, %v1230
        %v1232 = vpop.f32.mrf.mxu0
        %v1233 = vpop.f32.mrf.mxu0
        %v1234 = vadd.f32 0.0, %v1233
        %v1235 = vpop.f32.mrf.mxu0
        %1236 = vmatprep.mubr.bf16.mxu0 0
        %1237 = vmatmul.mubr.bf16.gmra.mxu0 %v1103
        %v1238 = vpop.f32.mrf.mxu0
        %v1239 = vadd.f32 0.0, %v1238
        %v1240 = vpop.f32.mrf.mxu0
        %v1241 = vpop.f32.mrf.mxu0
        %v1242 = vadd.f32 0.0, %v1241
        %v1243 = vpop.f32.mrf.mxu0
        %1244 = vmatprep.mubr.bf16.mxu0 0
        %1245 = vmatmul.mubr.bf16.gmra.mxu0 %v1106
        %v1246 = vpop.f32.mrf.mxu0
        %v1247 = vadd.f32 0.0, %v1246
        %v1248 = vpop.f32.mrf.mxu0
        %v1249 = vpop.f32.mrf.mxu0
        %v1250 = vadd.f32 0.0, %v1249
        %v1251 = vpop.f32.mrf.mxu0
        %1252 = vmatprep.mubr.bf16.mxu0 0
        %1253 = vmatmul.mubr.bf16.gmra.mxu0 %v1109
        %v1254 = vpop.f32.mrf.mxu0
        %v1255 = vadd.f32 0.0, %v1254
        %v1256 = vpop.f32.mrf.mxu0
        %v1257 = vpop.f32.mrf.mxu0
        %v1258 = vadd.f32 0.0, %v1257
        %v1259 = vpop.f32.mrf.mxu0
        %1260 = vmatprep.mubr.bf16.mxu0 0
        %1261 = vmatmul.mubr.bf16.gmra.mxu0 %v1112
        %v1262 = vpop.f32.mrf.mxu0
        %v1263 = vadd.f32 0.0, %v1262
        %v1264 = vpop.f32.mrf.mxu0
        %v1265 = vpop.f32.mrf.mxu0
        %v1266 = vadd.f32 0.0, %v1265
        %v1267 = vpop.f32.mrf.mxu0
        %1268 = vmatprep.mubr.bf16.mxu0 0
        %1269 = vmatmul.mubr.bf16.gmra.mxu0 %v1115
        %v1270 = vpop.f32.mrf.mxu0
        %v1271 = vadd.f32 0.0, %v1270
        %v1272 = vpop.f32.mrf.mxu0
        %v1273 = vpop.f32.mrf.mxu0
        %v1274 = vadd.f32 0.0, %v1273
        %v1275 = vpop.f32.mrf.mxu0
        %1276 = vmatprep.mubr.bf16.mxu0 0
        %1277 = vmatmul.mubr.bf16.gmra.mxu0 %v1118
        %v1278 = vpop.f32.mrf.mxu0
        %v1279 = vadd.f32 0.0, %v1278
        %v1280 = vpop.f32.mrf.mxu0
        %v1281 = vpop.f32.mrf.mxu0
        %v1282 = vadd.f32 0.0, %v1281
        %v1283 = vpop.f32.mrf.mxu0
        %1284 = vdwg.mxu0
        %v1286 = vsel %vm1071, %v902, 0
        %v1289 = vsel %vm1071, %v903, 0
        %v1292 = vsel %vm1071, %v904, 0
        %v1295 = vsel %vm1071, %v905, 0
        %v1298 = vsel %vm1071, %v906, 0
        %v1301 = vsel %vm1071, %v907, 0
        %v1304 = vsel %vm1071, %v908, 0
        %v1307 = vsel %vm1071, %v909, 0
        %v1310 = vsel %vm1071, %v910, 0
        %v1313 = vsel %vm1071, %v911, 0
        %v1316 = vsel %vm1071, %v912, 0
        %v1319 = vsel %vm1071, %v913, 0
        %v1322 = vsel %vm1071, %v914, 0
        %v1325 = vsel %vm1071, %v915, 0
        %v1328 = vsel %vm1071, %v916, 0
        %v1331 = vsel %vm1071, %v917, 0
        %v1334 = vsel %vm1120, %v918, 0
        %1336 = vmatprep.subr.bf16.mxu0 0
        %1337 = vmatpush1.bf16.msra.mxu0 0
        %1338 = vmatprep.subr.bf16.mxu0 0
        %1339 = vmatpush1.bf16.msra.mxu0 0
        %1340 = vmatprep.subr.bf16.mxu0 0
        %1341 = vmatpush1.bf16.msra.mxu0 0
        %1342 = vmatprep.subr.bf16.mxu0 0
        %1343 = vmatpush1.bf16.msra.mxu0 0
        %1344 = vmatprep.subr.bf16.mxu0 0
        %1345 = vmatpush1.bf16.msra.mxu0 0
        %1346 = vmatprep.subr.bf16.mxu0 0
        %1347 = vmatpush1.bf16.msra.mxu0 0
        %1348 = vmatprep.subr.bf16.mxu0 0
        %1349 = vmatpush1.bf16.msra.mxu0 0
        %1350 = vmatprep.subr.bf16.mxu0 0
        %1351 = vmatpush1.bf16.msra.mxu0 %v1334
        %1352 = vmatprep.subr.bf16.mxu0 0
        %1353 = vmatpush2.bf16.msra.mxu0 0
        %1354 = vmatprep.subr.bf16.mxu0 0
        %1355 = vmatpush2.bf16.msra.mxu0 0
        %1356 = vmatprep.subr.bf16.mxu0 0
        %1357 = vmatpush2.bf16.msra.mxu0 0
        %1358 = vmatprep.subr.bf16.mxu0 0
        %1359 = vmatpush2.bf16.msra.mxu0 0
        %1360 = vmatprep.subr.bf16.mxu0 0
        %1361 = vmatpush2.bf16.msra.mxu0 0
        %1362 = vmatprep.subr.bf16.mxu0 0
        %1363 = vmatpush2.bf16.msra.mxu0 0
        %1364 = vmatprep.subr.bf16.mxu0 0
        %1365 = vmatpush2.bf16.msra.mxu0 0
        %1366 = vmatprep.subr.bf16.mxu0 0
        %1367 = vmatpush2.bf16.msra.mxu0 0
        %1368 = vmatprep.mubr.bf16.mxu0 0
        %1369 = vmatmul.mubr.bf16.gmra.mxu0 %v1286
        %v1370 = vpop.f32.mrf.mxu0
        %v1371 = vadd.f32 %v1159, %v1370
        %v1372 = vpop.f32.mrf.mxu0
        %v1373 = vpop.f32.mrf.mxu0
        %v1374 = vadd.f32 %v1162, %v1373
        %v1375 = vpop.f32.mrf.mxu0
        %1376 = vmatprep.mubr.bf16.mxu0 0
        %1377 = vmatmul.mubr.bf16.gmra.mxu0 %v1289
        %v1378 = vpop.f32.mrf.mxu0
        %v1379 = vadd.f32 %v1167, %v1378
        %v1380 = vpop.f32.mrf.mxu0
        %v1381 = vpop.f32.mrf.mxu0
        %v1382 = vadd.f32 %v1170, %v1381
        %v1383 = vpop.f32.mrf.mxu0
        %1384 = vmatprep.mubr.bf16.mxu0 0
        %1385 = vmatmul.mubr.bf16.gmra.mxu0 %v1292
        %v1386 = vpop.f32.mrf.mxu0
        %v1387 = vadd.f32 %v1175, %v1386
        %v1388 = vpop.f32.mrf.mxu0
        %v1389 = vpop.f32.mrf.mxu0
        %v1390 = vadd.f32 %v1178, %v1389
        %v1391 = vpop.f32.mrf.mxu0
        %1392 = vmatprep.mubr.bf16.mxu0 0
        %1393 = vmatmul.mubr.bf16.gmra.mxu0 %v1295
        %v1394 = vpop.f32.mrf.mxu0
        %v1395 = vadd.f32 %v1183, %v1394
        %v1396 = vpop.f32.mrf.mxu0
        %v1397 = vpop.f32.mrf.mxu0
        %v1398 = vadd.f32 %v1186, %v1397
        %v1399 = vpop.f32.mrf.mxu0
        %1400 = vmatprep.mubr.bf16.mxu0 0
        %1401 = vmatmul.mubr.bf16.gmra.mxu0 %v1298
        %v1402 = vpop.f32.mrf.mxu0
        %v1403 = vadd.f32 %v1191, %v1402
        %v1404 = vpop.f32.mrf.mxu0
        %v1405 = vpop.f32.mrf.mxu0
        %v1406 = vadd.f32 %v1194, %v1405
        %v1407 = vpop.f32.mrf.mxu0
        %1408 = vmatprep.mubr.bf16.mxu0 0
        %1409 = vmatmul.mubr.bf16.gmra.mxu0 %v1301
        %v1410 = vpop.f32.mrf.mxu0
        %v1411 = vadd.f32 %v1199, %v1410
        %v1412 = vpop.f32.mrf.mxu0
        %v1413 = vpop.f32.mrf.mxu0
        %v1414 = vadd.f32 %v1202, %v1413
        %v1415 = vpop.f32.mrf.mxu0
        %1416 = vmatprep.mubr.bf16.mxu0 0
        %1417 = vmatmul.mubr.bf16.gmra.mxu0 %v1304
        %v1418 = vpop.f32.mrf.mxu0
        %v1419 = vadd.f32 %v1207, %v1418
        %v1420 = vpop.f32.mrf.mxu0
        %v1421 = vpop.f32.mrf.mxu0
        %v1422 = vadd.f32 %v1210, %v1421
        %v1423 = vpop.f32.mrf.mxu0
        %1424 = vmatprep.mubr.bf16.mxu0 0
        %1425 = vmatmul.mubr.bf16.gmra.mxu0 %v1307
        %v1426 = vpop.f32.mrf.mxu0
        %v1427 = vadd.f32 %v1215, %v1426
        %v1428 = vpop.f32.mrf.mxu0
        %v1429 = vpop.f32.mrf.mxu0
        %v1430 = vadd.f32 %v1218, %v1429
        %v1431 = vpop.f32.mrf.mxu0
        %1432 = vmatprep.mubr.bf16.mxu0 0
        %1433 = vmatmul.mubr.bf16.gmra.mxu0 %v1310
        %v1434 = vpop.f32.mrf.mxu0
        %v1435 = vadd.f32 %v1223, %v1434
        %v1436 = vpop.f32.mrf.mxu0
        %v1437 = vpop.f32.mrf.mxu0
        %v1438 = vadd.f32 %v1226, %v1437
        %v1439 = vpop.f32.mrf.mxu0
        %1440 = vmatprep.mubr.bf16.mxu0 0
        %1441 = vmatmul.mubr.bf16.gmra.mxu0 %v1313
        %v1442 = vpop.f32.mrf.mxu0
        %v1443 = vadd.f32 %v1231, %v1442
        %v1444 = vpop.f32.mrf.mxu0
        %v1445 = vpop.f32.mrf.mxu0
        %v1446 = vadd.f32 %v1234, %v1445
        %v1447 = vpop.f32.mrf.mxu0
        %1448 = vmatprep.mubr.bf16.mxu0 0
        %1449 = vmatmul.mubr.bf16.gmra.mxu0 %v1316
        %v1450 = vpop.f32.mrf.mxu0
        %v1451 = vadd.f32 %v1239, %v1450
        %v1452 = vpop.f32.mrf.mxu0
        %v1453 = vpop.f32.mrf.mxu0
        %v1454 = vadd.f32 %v1242, %v1453
        %v1455 = vpop.f32.mrf.mxu0
        %1456 = vmatprep.mubr.bf16.mxu0 0
        %1457 = vmatmul.mubr.bf16.gmra.mxu0 %v1319
        %v1458 = vpop.f32.mrf.mxu0
        %v1459 = vadd.f32 %v1247, %v1458
        %v1460 = vpop.f32.mrf.mxu0
        %v1461 = vpop.f32.mrf.mxu0
        %v1462 = vadd.f32 %v1250, %v1461
        %v1463 = vpop.f32.mrf.mxu0
        %1464 = vmatprep.mubr.bf16.mxu0 0
        %1465 = vmatmul.mubr.bf16.gmra.mxu0 %v1322
        %v1466 = vpop.f32.mrf.mxu0
        %v1467 = vadd.f32 %v1255, %v1466
        %v1468 = vpop.f32.mrf.mxu0
        %v1469 = vpop.f32.mrf.mxu0
        %v1470 = vadd.f32 %v1258, %v1469
        %v1471 = vpop.f32.mrf.mxu0
        %1472 = vmatprep.mubr.bf16.mxu0 0
        %1473 = vmatmul.mubr.bf16.gmra.mxu0 %v1325
        %v1474 = vpop.f32.mrf.mxu0
        %v1475 = vadd.f32 %v1263, %v1474
        %v1476 = vpop.f32.mrf.mxu0
        %v1477 = vpop.f32.mrf.mxu0
        %v1478 = vadd.f32 %v1266, %v1477
        %v1479 = vpop.f32.mrf.mxu0
        %1480 = vmatprep.mubr.bf16.mxu0 0
        %1481 = vmatmul.mubr.bf16.gmra.mxu0 %v1328
        %v1482 = vpop.f32.mrf.mxu0
        %v1483 = vadd.f32 %v1271, %v1482
        %v1484 = vpop.f32.mrf.mxu0
        %v1485 = vpop.f32.mrf.mxu0
        %v1486 = vadd.f32 %v1274, %v1485
        %v1487 = vpop.f32.mrf.mxu0
        %1488 = vmatprep.mubr.bf16.mxu0 0
        %1489 = vmatmul.mubr.bf16.gmra.mxu0 %v1331
        %v1490 = vpop.f32.mrf.mxu0
        %v1491 = vadd.f32 %v1279, %v1490
        %v1492 = vpop.f32.mrf.mxu0
        %v1493 = vpop.f32.mrf.mxu0
        %v1494 = vadd.f32 %v1282, %v1493
        %v1495 = vpop.f32.mrf.mxu0
        %1496 = vdwg.mxu0
        %v1497 = vsel %vm774, 1, 0
        %v1498 = vsel %vm775, 1, 0
        %v1499 = vsel %vm776, 1, 0
        %v1500 = vsel %vm777, 1, 0
        %v1501 = vsel %vm778, 1, 0
        %v1502 = vsel %vm779, 1, 0
        %v1503 = vsel %vm780, 1, 0
        %v1504 = vsel %vm781, 1, 0
        %v1505 = vsel %vm782, 1, 0
        %v1506 = vsel %vm783, 1, 0
        %v1507 = vsel %vm784, 1, 0
        %v1508 = vsel %vm785, 1, 0
        %v1509 = vsel %vm786, 1, 0
        %v1510 = vsel %vm787, 1, 0
        %v1511 = vsel %vm788, 1, 0
        %v1512 = vsel %vm789, 1, 0
        %v1513 = vsel %vm790, 1, 0
        %v1514 = vsel %vm791, 1, 0
        %v1515 = vsel %vm792, 1, 0
        %v1516 = vsel %vm793, 1, 0
        %v1517 = vsel %vm794, 1, 0
        %v1518 = vsel %vm795, 1, 0
        %v1519 = vsel %vm796, 1, 0
        %v1520 = vsel %vm797, 1, 0
        %v1521 = vsel %vm798, 1, 0
        %v1522 = vsel %vm799, 1, 0
        %v1523 = vsel %vm800, 1, 0
        %v1524 = vsel %vm801, 1, 0
        %v1525 = vsel %vm802, 1, 0
        %v1526 = vsel %vm803, 1, 0
        %v1527 = vsel %vm804, 1, 0
        %v1528 = vsel %vm805, 1, 0
        %vm1529 = vcmp.eq.s32.totalorder %v1497, 1
        %vm1530 = vcmp.eq.s32.totalorder %v1498, 1
        %vm1531 = vcmp.eq.s32.totalorder %v1499, 1
        %vm1532 = vcmp.eq.s32.totalorder %v1500, 1
        %vm1533 = vcmp.eq.s32.totalorder %v1501, 1
        %vm1534 = vcmp.eq.s32.totalorder %v1502, 1
        %vm1535 = vcmp.eq.s32.totalorder %v1503, 1
        %vm1536 = vcmp.eq.s32.totalorder %v1504, 1
        %vm1537 = vcmp.eq.s32.totalorder %v1505, 1
        %vm1538 = vcmp.eq.s32.totalorder %v1506, 1
        %vm1539 = vcmp.eq.s32.totalorder %v1507, 1
        %vm1540 = vcmp.eq.s32.totalorder %v1508, 1
        %vm1541 = vcmp.eq.s32.totalorder %v1509, 1
        %vm1542 = vcmp.eq.s32.totalorder %v1510, 1
        %vm1543 = vcmp.eq.s32.totalorder %v1511, 1
        %vm1544 = vcmp.eq.s32.totalorder %v1512, 1
        %vm1545 = vcmp.eq.s32.totalorder %v1513, 1
        %vm1546 = vcmp.eq.s32.totalorder %v1514, 1
        %vm1547 = vcmp.eq.s32.totalorder %v1515, 1
        %vm1548 = vcmp.eq.s32.totalorder %v1516, 1
        %vm1549 = vcmp.eq.s32.totalorder %v1517, 1
        %vm1550 = vcmp.eq.s32.totalorder %v1518, 1
        %vm1551 = vcmp.eq.s32.totalorder %v1519, 1
        %vm1552 = vcmp.eq.s32.totalorder %v1520, 1
        %vm1553 = vcmp.eq.s32.totalorder %v1521, 1
        %vm1554 = vcmp.eq.s32.totalorder %v1522, 1
        %vm1555 = vcmp.eq.s32.totalorder %v1523, 1
        %vm1556 = vcmp.eq.s32.totalorder %v1524, 1
        %vm1557 = vcmp.eq.s32.totalorder %v1525, 1
        %vm1558 = vcmp.eq.s32.totalorder %v1526, 1
        %vm1559 = vcmp.eq.s32.totalorder %v1527, 1
        %vm1560 = vcmp.eq.s32.totalorder %v1528, 1
        %vm1594 = vcmask 1045504
        %v1595 = vrot.slane %v288, 2
        %v1596 = vrot.slane %v289, 2
        %v1597 = vsel %vm1594, %v1595, %v1596
        %v1598 = vrot.slane %v290, 2
        %v1599 = vsel %vm1594, %v1596, %v1598
        %v1600 = vrot.slane %v291, 2
        %v1601 = vsel %vm1594, %v1598, %v1600
        %v1602 = vrot.slane %v292, 2
        %v1603 = vsel %vm1594, %v1600, %v1602
        %v1604 = vrot.slane %v293, 2
        %v1605 = vsel %vm1594, %v1602, %v1604
        %v1606 = vrot.slane %v294, 2
        %v1607 = vsel %vm1594, %v1604, %v1606
        %v1608 = vrot.slane %v295, 2
        %v1609 = vsel %vm1594, %v1606, %v1608
        %v1610 = vrot.slane %v296, 2
        %v1611 = vsel %vm1594, %v1608, %v1610
        %v1612 = vrot.slane %v297, 2
        %v1613 = vsel %vm1594, %v1610, %v1612
        %v1614 = vrot.slane %v298, 2
        %v1615 = vsel %vm1594, %v1612, %v1614
        %v1616 = vrot.slane %v299, 2
        %v1617 = vsel %vm1594, %v1614, %v1616
        %v1618 = vrot.slane %v300, 2
        %v1619 = vsel %vm1594, %v1616, %v1618
        %v1620 = vrot.slane %v301, 2
        %v1621 = vsel %vm1594, %v1618, %v1620
        %v1622 = vrot.slane %v302, 2
        %v1623 = vsel %vm1594, %v1620, %v1622
        %v1624 = vrot.slane %v303, 2
        %v1625 = vsel %vm1594, %v1622, %v1624
        %v1626 = vrot.slane %v304, 2
        %v1627 = vsel %vm1594, %v1624, %v1626
        %v1628 = vrot.slane %v305, 2
        %v1629 = vsel %vm1594, %v1626, %v1628
        %v1630 = vrot.slane %v306, 2
        %v1631 = vsel %vm1594, %v1628, %v1630
        %v1632 = vrot.slane %v307, 2
        %v1633 = vsel %vm1594, %v1630, %v1632
        %v1634 = vrot.slane %v308, 2
        %v1635 = vsel %vm1594, %v1632, %v1634
        %v1636 = vrot.slane %v309, 2
        %v1637 = vsel %vm1594, %v1634, %v1636
        %v1638 = vrot.slane %v310, 2
        %v1639 = vsel %vm1594, %v1636, %v1638
        %v1640 = vrot.slane %v311, 2
        %v1641 = vsel %vm1594, %v1638, %v1640
        %v1642 = vrot.slane %v312, 2
        %v1643 = vsel %vm1594, %v1640, %v1642
        %v1644 = vrot.slane %v313, 2
        %v1645 = vsel %vm1594, %v1642, %v1644
        %v1646 = vrot.slane %v314, 2
        %v1647 = vsel %vm1594, %v1644, %v1646
        %v1648 = vrot.slane %v315, 2
        %v1649 = vsel %vm1594, %v1646, %v1648
        %v1650 = vrot.slane %v316, 2
        %v1651 = vsel %vm1594, %v1648, %v1650
        %v1652 = vrot.slane %v317, 2
        %v1653 = vsel %vm1594, %v1650, %v1652
        %v1654 = vrot.slane %v318, 2
        %v1655 = vsel %vm1594, %v1652, %v1654
        %v1656 = vrot.slane %v319, 2
        %v1657 = vsel %vm1594, %v1654, %v1656
        %v1658 = vrot.slane %v320, 2
        %v1659 = vsel %vm1594, %v1656, %v1658
        %v1692 = vsel %vm1529, %v1597, 0.0
        %v1693 = vsel %vm1530, %v1599, 0.0
        %v1694 = vsel %vm1531, %v1601, 0.0
        %v1695 = vsel %vm1532, %v1603, 0.0
        %v1696 = vsel %vm1533, %v1605, 0.0
        %v1697 = vsel %vm1534, %v1607, 0.0
        %v1698 = vsel %vm1535, %v1609, 0.0
        %v1699 = vsel %vm1536, %v1611, 0.0
        %v1700 = vsel %vm1537, %v1613, 0.0
        %v1701 = vsel %vm1538, %v1615, 0.0
        %v1702 = vsel %vm1539, %v1617, 0.0
        %v1703 = vsel %vm1540, %v1619, 0.0
        %v1704 = vsel %vm1541, %v1621, 0.0
        %v1705 = vsel %vm1542, %v1623, 0.0
        %v1706 = vsel %vm1543, %v1625, 0.0
        %v1707 = vsel %vm1544, %v1627, 0.0
        %v1708 = vsel %vm1545, %v1629, 0.0
        %v1709 = vsel %vm1546, %v1631, 0.0
        %v1710 = vsel %vm1547, %v1633, 0.0
        %v1711 = vsel %vm1548, %v1635, 0.0
        %v1712 = vsel %vm1549, %v1637, 0.0
        %v1713 = vsel %vm1550, %v1639, 0.0
        %v1714 = vsel %vm1551, %v1641, 0.0
        %v1715 = vsel %vm1552, %v1643, 0.0
        %v1716 = vsel %vm1553, %v1645, 0.0
        %v1717 = vsel %vm1554, %v1647, 0.0
        %v1718 = vsel %vm1555, %v1649, 0.0
        %v1719 = vsel %vm1556, %v1651, 0.0
        %v1720 = vsel %vm1557, %v1653, 0.0
        %v1721 = vsel %vm1558, %v1655, 0.0
        %v1722 = vsel %vm1559, %v1657, 0.0
        %v1723 = vsel %vm1560, %v1659, 0.0
        %v1724 = vpack.c.bf16 %v1693, %v1692
        %v1725 = vpack.c.bf16 %v1695, %v1694
        %v1726 = vpack.c.bf16 %v1697, %v1696
        %v1727 = vpack.c.bf16 %v1699, %v1698
        %v1728 = vpack.c.bf16 %v1701, %v1700
        %v1729 = vpack.c.bf16 %v1703, %v1702
        %v1730 = vpack.c.bf16 %v1705, %v1704
        %v1731 = vpack.c.bf16 %v1707, %v1706
        %v1732 = vpack.c.bf16 %v1709, %v1708
        %v1733 = vpack.c.bf16 %v1711, %v1710
        %v1734 = vpack.c.bf16 %v1713, %v1712
        %v1735 = vpack.c.bf16 %v1715, %v1714
        %v1736 = vpack.c.bf16 %v1717, %v1716
        %v1737 = vpack.c.bf16 %v1719, %v1718
        %v1738 = vpack.c.bf16 %v1721, %v1720
        %v1739 = vpack.c.bf16 %v1723, %v1722
        %s1740 = scalar_lea.vmem %s1, 4
        %v1741 = vld [vmem:[%s1740] sm:$0x3]
        %v1743 = vsel %vm1071, %v1724, 0
        %v1746 = vsel %vm1071, %v1725, 0
        %v1749 = vsel %vm1071, %v1726, 0
        %v1752 = vsel %vm1071, %v1727, 0
        %v1755 = vsel %vm1071, %v1728, 0
        %v1758 = vsel %vm1071, %v1729, 0
        %v1761 = vsel %vm1071, %v1730, 0
        %v1764 = vsel %vm1071, %v1731, 0
        %v1767 = vsel %vm1071, %v1732, 0
        %v1770 = vsel %vm1071, %v1733, 0
        %v1773 = vsel %vm1071, %v1734, 0
        %v1776 = vsel %vm1071, %v1735, 0
        %v1779 = vsel %vm1071, %v1736, 0
        %v1782 = vsel %vm1071, %v1737, 0
        %v1785 = vsel %vm1071, %v1738, 0
        %v1788 = vsel %vm1071, %v1739, 0
        %v1791 = vsel %vm1120, %v1741, 0
        %1793 = vmatprep.subr.bf16.mxu0 0
        %1794 = vmatpush1.bf16.msra.mxu0 0
        %1795 = vmatprep.subr.bf16.mxu0 0
        %1796 = vmatpush1.bf16.msra.mxu0 0
        %1797 = vmatprep.subr.bf16.mxu0 0
        %1798 = vmatpush1.bf16.msra.mxu0 0
        %1799 = vmatprep.subr.bf16.mxu0 0
        %1800 = vmatpush1.bf16.msra.mxu0 0
        %1801 = vmatprep.subr.bf16.mxu0 0
        %1802 = vmatpush1.bf16.msra.mxu0 0
        %1803 = vmatprep.subr.bf16.mxu0 0
        %1804 = vmatpush1.bf16.msra.mxu0 0
        %1805 = vmatprep.subr.bf16.mxu0 0
        %1806 = vmatpush1.bf16.msra.mxu0 0
        %1807 = vmatprep.subr.bf16.mxu0 0
        %1808 = vmatpush1.bf16.msra.mxu0 %v1791
        %1809 = vmatprep.subr.bf16.mxu0 0
        %1810 = vmatpush2.bf16.msra.mxu0 0
        %1811 = vmatprep.subr.bf16.mxu0 0
        %1812 = vmatpush2.bf16.msra.mxu0 0
        %1813 = vmatprep.subr.bf16.mxu0 0
        %1814 = vmatpush2.bf16.msra.mxu0 0
        %1815 = vmatprep.subr.bf16.mxu0 0
        %1816 = vmatpush2.bf16.msra.mxu0 0
        %1817 = vmatprep.subr.bf16.mxu0 0
        %1818 = vmatpush2.bf16.msra.mxu0 0
        %1819 = vmatprep.subr.bf16.mxu0 0
        %1820 = vmatpush2.bf16.msra.mxu0 0
        %1821 = vmatprep.subr.bf16.mxu0 0
        %1822 = vmatpush2.bf16.msra.mxu0 0
        %1823 = vmatprep.subr.bf16.mxu0 0
        %1824 = vmatpush2.bf16.msra.mxu0 0
        %1825 = vmatprep.mubr.bf16.mxu0 0
        %1826 = vmatmul.mubr.bf16.gmra.mxu0 %v1743
        %v1827 = vpop.f32.mrf.mxu0
        %v1828 = vadd.f32 0.0, %v1827
        %v1829 = vpop.f32.mrf.mxu0
        %v1830 = vpop.f32.mrf.mxu0
        %v1831 = vadd.f32 0.0, %v1830
        %v1832 = vpop.f32.mrf.mxu0
        %1833 = vmatprep.mubr.bf16.mxu0 0
        %1834 = vmatmul.mubr.bf16.gmra.mxu0 %v1746
        %v1835 = vpop.f32.mrf.mxu0
        %v1836 = vadd.f32 0.0, %v1835
        %v1837 = vpop.f32.mrf.mxu0
        %v1838 = vpop.f32.mrf.mxu0
        %v1839 = vadd.f32 0.0, %v1838
        %v1840 = vpop.f32.mrf.mxu0
        %1841 = vmatprep.mubr.bf16.mxu0 0
        %1842 = vmatmul.mubr.bf16.gmra.mxu0 %v1749
        %v1843 = vpop.f32.mrf.mxu0
        %v1844 = vadd.f32 0.0, %v1843
        %v1845 = vpop.f32.mrf.mxu0
        %v1846 = vpop.f32.mrf.mxu0
        %v1847 = vadd.f32 0.0, %v1846
        %v1848 = vpop.f32.mrf.mxu0
        %1849 = vmatprep.mubr.bf16.mxu0 0
        %1850 = vmatmul.mubr.bf16.gmra.mxu0 %v1752
        %v1851 = vpop.f32.mrf.mxu0
        %v1852 = vadd.f32 0.0, %v1851
        %v1853 = vpop.f32.mrf.mxu0
        %v1854 = vpop.f32.mrf.mxu0
        %v1855 = vadd.f32 0.0, %v1854
        %v1856 = vpop.f32.mrf.mxu0
        %1857 = vmatprep.mubr.bf16.mxu0 0
        %1858 = vmatmul.mubr.bf16.gmra.mxu0 %v1755
        %v1859 = vpop.f32.mrf.mxu0
        %v1860 = vadd.f32 0.0, %v1859
        %v1861 = vpop.f32.mrf.mxu0
        %v1862 = vpop.f32.mrf.mxu0
        %v1863 = vadd.f32 0.0, %v1862
        %v1864 = vpop.f32.mrf.mxu0
        %1865 = vmatprep.mubr.bf16.mxu0 0
        %1866 = vmatmul.mubr.bf16.gmra.mxu0 %v1758
        %v1867 = vpop.f32.mrf.mxu0
        %v1868 = vadd.f32 0.0, %v1867
        %v1869 = vpop.f32.mrf.mxu0
        %v1870 = vpop.f32.mrf.mxu0
        %v1871 = vadd.f32 0.0, %v1870
        %v1872 = vpop.f32.mrf.mxu0
        %1873 = vmatprep.mubr.bf16.mxu0 0
        %1874 = vmatmul.mubr.bf16.gmra.mxu0 %v1761
        %v1875 = vpop.f32.mrf.mxu0
        %v1876 = vadd.f32 0.0, %v1875
        %v1877 = vpop.f32.mrf.mxu0
        %v1878 = vpop.f32.mrf.mxu0
        %v1879 = vadd.f32 0.0, %v1878
        %v1880 = vpop.f32.mrf.mxu0
        %1881 = vmatprep.mubr.bf16.mxu0 0
        %1882 = vmatmul.mubr.bf16.gmra.mxu0 %v1764
        %v1883 = vpop.f32.mrf.mxu0
        %v1884 = vadd.f32 0.0, %v1883
        %v1885 = vpop.f32.mrf.mxu0
        %v1886 = vpop.f32.mrf.mxu0
        %v1887 = vadd.f32 0.0, %v1886
        %v1888 = vpop.f32.mrf.mxu0
        %1889 = vmatprep.mubr.bf16.mxu0 0
        %1890 = vmatmul.mubr.bf16.gmra.mxu0 %v1767
        %v1891 = vpop.f32.mrf.mxu0
        %v1892 = vadd.f32 0.0, %v1891
        %v1893 = vpop.f32.mrf.mxu0
        %v1894 = vpop.f32.mrf.mxu0
        %v1895 = vadd.f32 0.0, %v1894
        %v1896 = vpop.f32.mrf.mxu0
        %1897 = vmatprep.mubr.bf16.mxu0 0
        %1898 = vmatmul.mubr.bf16.gmra.mxu0 %v1770
        %v1899 = vpop.f32.mrf.mxu0
        %v1900 = vadd.f32 0.0, %v1899
        %v1901 = vpop.f32.mrf.mxu0
        %v1902 = vpop.f32.mrf.mxu0
        %v1903 = vadd.f32 0.0, %v1902
        %v1904 = vpop.f32.mrf.mxu0
        %1905 = vmatprep.mubr.bf16.mxu0 0
        %1906 = vmatmul.mubr.bf16.gmra.mxu0 %v1773
        %v1907 = vpop.f32.mrf.mxu0
        %v1908 = vadd.f32 0.0, %v1907
        %v1909 = vpop.f32.mrf.mxu0
        %v1910 = vpop.f32.mrf.mxu0
        %v1911 = vadd.f32 0.0, %v1910
        %v1912 = vpop.f32.mrf.mxu0
        %1913 = vmatprep.mubr.bf16.mxu0 0
        %1914 = vmatmul.mubr.bf16.gmra.mxu0 %v1776
        %v1915 = vpop.f32.mrf.mxu0
        %v1916 = vadd.f32 0.0, %v1915
        %v1917 = vpop.f32.mrf.mxu0
        %v1918 = vpop.f32.mrf.mxu0
        %v1919 = vadd.f32 0.0, %v1918
        %v1920 = vpop.f32.mrf.mxu0
        %1921 = vmatprep.mubr.bf16.mxu0 0
        %1922 = vmatmul.mubr.bf16.gmra.mxu0 %v1779
        %v1923 = vpop.f32.mrf.mxu0
        %v1924 = vadd.f32 0.0, %v1923
        %v1925 = vpop.f32.mrf.mxu0
        %v1926 = vpop.f32.mrf.mxu0
        %v1927 = vadd.f32 0.0, %v1926
        %v1928 = vpop.f32.mrf.mxu0
        %1929 = vmatprep.mubr.bf16.mxu0 0
        %1930 = vmatmul.mubr.bf16.gmra.mxu0 %v1782
        %v1931 = vpop.f32.mrf.mxu0
        %v1932 = vadd.f32 0.0, %v1931
        %v1933 = vpop.f32.mrf.mxu0
        %v1934 = vpop.f32.mrf.mxu0
        %v1935 = vadd.f32 0.0, %v1934
        %v1936 = vpop.f32.mrf.mxu0
        %1937 = vmatprep.mubr.bf16.mxu0 0
        %1938 = vmatmul.mubr.bf16.gmra.mxu0 %v1785
        %v1939 = vpop.f32.mrf.mxu0
        %v1940 = vadd.f32 0.0, %v1939
        %v1941 = vpop.f32.mrf.mxu0
        %v1942 = vpop.f32.mrf.mxu0
        %v1943 = vadd.f32 0.0, %v1942
        %v1944 = vpop.f32.mrf.mxu0
        %1945 = vmatprep.mubr.bf16.mxu0 0
        %1946 = vmatmul.mubr.bf16.gmra.mxu0 %v1788
        %v1947 = vpop.f32.mrf.mxu0
        %v1948 = vadd.f32 0.0, %v1947
        %v1949 = vpop.f32.mrf.mxu0
        %v1950 = vpop.f32.mrf.mxu0
        %v1951 = vadd.f32 0.0, %v1950
        %v1952 = vpop.f32.mrf.mxu0
        %1953 = vdwg.mxu0
        %v1954 = vadd.f32 %v1371, %v1828
        %v1955 = vadd.f32 %v1374, %v1831
        %v1956 = vadd.f32 %v1379, %v1836
        %v1957 = vadd.f32 %v1382, %v1839
        %v1958 = vadd.f32 %v1387, %v1844
        %v1959 = vadd.f32 %v1390, %v1847
        %v1960 = vadd.f32 %v1395, %v1852
        %v1961 = vadd.f32 %v1398, %v1855
        %v1962 = vadd.f32 %v1403, %v1860
        %v1963 = vadd.f32 %v1406, %v1863
        %v1964 = vadd.f32 %v1411, %v1868
        %v1965 = vadd.f32 %v1414, %v1871
        %v1966 = vadd.f32 %v1419, %v1876
        %v1967 = vadd.f32 %v1422, %v1879
        %v1968 = vadd.f32 %v1427, %v1884
        %v1969 = vadd.f32 %v1430, %v1887
        %v1970 = vadd.f32 %v1435, %v1892
        %v1971 = vadd.f32 %v1438, %v1895
        %v1972 = vadd.f32 %v1443, %v1900
        %v1973 = vadd.f32 %v1446, %v1903
        %v1974 = vadd.f32 %v1451, %v1908
        %v1975 = vadd.f32 %v1454, %v1911
        %v1976 = vadd.f32 %v1459, %v1916
        %v1977 = vadd.f32 %v1462, %v1919
        %v1978 = vadd.f32 %v1467, %v1924
        %v1979 = vadd.f32 %v1470, %v1927
        %v1980 = vadd.f32 %v1475, %v1932
        %v1981 = vadd.f32 %v1478, %v1935
        %v1982 = vadd.f32 %v1483, %v1940
        %v1983 = vadd.f32 %v1486, %v1943
        %v1984 = vadd.f32 %v1491, %v1948
        %v1985 = vadd.f32 %v1494, %v1951
        %v1986 = vsel %vm838, %v290, 0.0
        %v1987 = vsel %vm839, %v291, 0.0
        %v1988 = vsel %vm840, %v292, 0.0
        %v1989 = vsel %vm841, %v293, 0.0
        %v1990 = vsel %vm842, %v294, 0.0
        %v1991 = vsel %vm843, %v295, 0.0
        %v1992 = vsel %vm844, %v296, 0.0
        %v1993 = vsel %vm845, %v297, 0.0
        %v1994 = vsel %vm846, %v298, 0.0
        %v1995 = vsel %vm847, %v299, 0.0
        %v1996 = vsel %vm848, %v300, 0.0
        %v1997 = vsel %vm849, %v301, 0.0
        %v1998 = vsel %vm850, %v302, 0.0
        %v1999 = vsel %vm851, %v303, 0.0
        %v2000 = vsel %vm852, %v304, 0.0
        %v2001 = vsel %vm853, %v305, 0.0
        %v2002 = vsel %vm854, %v306, 0.0
        %v2003 = vsel %vm855, %v307, 0.0
        %v2004 = vsel %vm856, %v308, 0.0
        %v2005 = vsel %vm857, %v309, 0.0
        %v2006 = vsel %vm858, %v310, 0.0
        %v2007 = vsel %vm859, %v311, 0.0
        %v2008 = vsel %vm860, %v312, 0.0
        %v2009 = vsel %vm861, %v313, 0.0
        %v2010 = vsel %vm862, %v314, 0.0
        %v2011 = vsel %vm863, %v315, 0.0
        %v2012 = vsel %vm864, %v316, 0.0
        %v2013 = vsel %vm865, %v317, 0.0
        %v2014 = vsel %vm866, %v318, 0.0
        %v2015 = vsel %vm867, %v319, 0.0
        %v2016 = vsel %vm868, %v320, 0.0
        %v2017 = vsel %vm869, %v321, 0.0
        %v2018 = vpack.c.bf16 %v1987, %v1986
        %v2019 = vpack.c.bf16 %v1989, %v1988
        %v2020 = vpack.c.bf16 %v1991, %v1990
        %v2021 = vpack.c.bf16 %v1993, %v1992
        %v2022 = vpack.c.bf16 %v1995, %v1994
        %v2023 = vpack.c.bf16 %v1997, %v1996
        %v2024 = vpack.c.bf16 %v1999, %v1998
        %v2025 = vpack.c.bf16 %v2001, %v2000
        %v2026 = vpack.c.bf16 %v2003, %v2002
        %v2027 = vpack.c.bf16 %v2005, %v2004
        %v2028 = vpack.c.bf16 %v2007, %v2006
        %v2029 = vpack.c.bf16 %v2009, %v2008
        %v2030 = vpack.c.bf16 %v2011, %v2010
        %v2031 = vpack.c.bf16 %v2013, %v2012
        %v2032 = vpack.c.bf16 %v2015, %v2014
        %v2033 = vpack.c.bf16 %v2017, %v2016
        %s2034 = scalar_lea.vmem %s1, 6
        %v2035 = vld [vmem:[%s2034] sm:$0x3]
        %v2037 = vsel %vm1071, %v2018, 0
        %v2040 = vsel %vm1071, %v2019, 0
        %v2043 = vsel %vm1071, %v2020, 0
        %v2046 = vsel %vm1071, %v2021, 0
        %v2049 = vsel %vm1071, %v2022, 0
        %v2052 = vsel %vm1071, %v2023, 0
        %v2055 = vsel %vm1071, %v2024, 0
        %v2058 = vsel %vm1071, %v2025, 0
        %v2061 = vsel %vm1071, %v2026, 0
        %v2064 = vsel %vm1071, %v2027, 0
        %v2067 = vsel %vm1071, %v2028, 0
        %v2070 = vsel %vm1071, %v2029, 0
        %v2073 = vsel %vm1071, %v2030, 0
        %v2076 = vsel %vm1071, %v2031, 0
        %v2079 = vsel %vm1071, %v2032, 0
        %v2082 = vsel %vm1071, %v2033, 0
        %v2085 = vsel %vm1120, %v2035, 0
        %2087 = vmatprep.subr.bf16.mxu0 0
        %2088 = vmatpush1.bf16.msra.mxu0 0
        %2089 = vmatprep.subr.bf16.mxu0 0
        %2090 = vmatpush1.bf16.msra.mxu0 0
        %2091 = vmatprep.subr.bf16.mxu0 0
        %2092 = vmatpush1.bf16.msra.mxu0 0
        %2093 = vmatprep.subr.bf16.mxu0 0
        %2094 = vmatpush1.bf16.msra.mxu0 0
        %2095 = vmatprep.subr.bf16.mxu0 0
        %2096 = vmatpush1.bf16.msra.mxu0 0
        %2097 = vmatprep.subr.bf16.mxu0 0
        %2098 = vmatpush1.bf16.msra.mxu0 0
        %2099 = vmatprep.subr.bf16.mxu0 0
        %2100 = vmatpush1.bf16.msra.mxu0 0
        %2101 = vmatprep.subr.bf16.mxu0 0
        %2102 = vmatpush1.bf16.msra.mxu0 %v2085
        %2103 = vmatprep.subr.bf16.mxu0 0
        %2104 = vmatpush2.bf16.msra.mxu0 0
        %2105 = vmatprep.subr.bf16.mxu0 0
        %2106 = vmatpush2.bf16.msra.mxu0 0
        %2107 = vmatprep.subr.bf16.mxu0 0
        %2108 = vmatpush2.bf16.msra.mxu0 0
        %2109 = vmatprep.subr.bf16.mxu0 0
        %2110 = vmatpush2.bf16.msra.mxu0 0
        %2111 = vmatprep.subr.bf16.mxu0 0
        %2112 = vmatpush2.bf16.msra.mxu0 0
        %2113 = vmatprep.subr.bf16.mxu0 0
        %2114 = vmatpush2.bf16.msra.mxu0 0
        %2115 = vmatprep.subr.bf16.mxu0 0
        %2116 = vmatpush2.bf16.msra.mxu0 0
        %2117 = vmatprep.subr.bf16.mxu0 0
        %2118 = vmatpush2.bf16.msra.mxu0 0
        %2119 = vmatprep.mubr.bf16.mxu0 0
        %2120 = vmatmul.mubr.bf16.gmra.mxu0 %v2037
        %v2121 = vpop.f32.mrf.mxu0
        %v2122 = vadd.f32 0.0, %v2121
        %v2123 = vpop.f32.mrf.mxu0
        %v2124 = vpop.f32.mrf.mxu0
        %v2125 = vadd.f32 0.0, %v2124
        %v2126 = vpop.f32.mrf.mxu0
        %2127 = vmatprep.mubr.bf16.mxu0 0
        %2128 = vmatmul.mubr.bf16.gmra.mxu0 %v2040
        %v2129 = vpop.f32.mrf.mxu0
        %v2130 = vadd.f32 0.0, %v2129
        %v2131 = vpop.f32.mrf.mxu0
        %v2132 = vpop.f32.mrf.mxu0
        %v2133 = vadd.f32 0.0, %v2132
        %v2134 = vpop.f32.mrf.mxu0
        %2135 = vmatprep.mubr.bf16.mxu0 0
        %2136 = vmatmul.mubr.bf16.gmra.mxu0 %v2043
        %v2137 = vpop.f32.mrf.mxu0
        %v2138 = vadd.f32 0.0, %v2137
        %v2139 = vpop.f32.mrf.mxu0
        %v2140 = vpop.f32.mrf.mxu0
        %v2141 = vadd.f32 0.0, %v2140
        %v2142 = vpop.f32.mrf.mxu0
        %2143 = vmatprep.mubr.bf16.mxu0 0
        %2144 = vmatmul.mubr.bf16.gmra.mxu0 %v2046
        %v2145 = vpop.f32.mrf.mxu0
        %v2146 = vadd.f32 0.0, %v2145
        %v2147 = vpop.f32.mrf.mxu0
        %v2148 = vpop.f32.mrf.mxu0
        %v2149 = vadd.f32 0.0, %v2148
        %v2150 = vpop.f32.mrf.mxu0
        %2151 = vmatprep.mubr.bf16.mxu0 0
        %2152 = vmatmul.mubr.bf16.gmra.mxu0 %v2049
        %v2153 = vpop.f32.mrf.mxu0
        %v2154 = vadd.f32 0.0, %v2153
        %v2155 = vpop.f32.mrf.mxu0
        %v2156 = vpop.f32.mrf.mxu0
        %v2157 = vadd.f32 0.0, %v2156
        %v2158 = vpop.f32.mrf.mxu0
        %2159 = vmatprep.mubr.bf16.mxu0 0
        %2160 = vmatmul.mubr.bf16.gmra.mxu0 %v2052
        %v2161 = vpop.f32.mrf.mxu0
        %v2162 = vadd.f32 0.0, %v2161
        %v2163 = vpop.f32.mrf.mxu0
        %v2164 = vpop.f32.mrf.mxu0
        %v2165 = vadd.f32 0.0, %v2164
        %v2166 = vpop.f32.mrf.mxu0
        %2167 = vmatprep.mubr.bf16.mxu0 0
        %2168 = vmatmul.mubr.bf16.gmra.mxu0 %v2055
        %v2169 = vpop.f32.mrf.mxu0
        %v2170 = vadd.f32 0.0, %v2169
        %v2171 = vpop.f32.mrf.mxu0
        %v2172 = vpop.f32.mrf.mxu0
        %v2173 = vadd.f32 0.0, %v2172
        %v2174 = vpop.f32.mrf.mxu0
        %2175 = vmatprep.mubr.bf16.mxu0 0
        %2176 = vmatmul.mubr.bf16.gmra.mxu0 %v2058
        %v2177 = vpop.f32.mrf.mxu0
        %v2178 = vadd.f32 0.0, %v2177
        %v2179 = vpop.f32.mrf.mxu0
        %v2180 = vpop.f32.mrf.mxu0
        %v2181 = vadd.f32 0.0, %v2180
        %v2182 = vpop.f32.mrf.mxu0
        %2183 = vmatprep.mubr.bf16.mxu0 0
        %2184 = vmatmul.mubr.bf16.gmra.mxu0 %v2061
        %v2185 = vpop.f32.mrf.mxu0
        %v2186 = vadd.f32 0.0, %v2185
        %v2187 = vpop.f32.mrf.mxu0
        %v2188 = vpop.f32.mrf.mxu0
        %v2189 = vadd.f32 0.0, %v2188
        %v2190 = vpop.f32.mrf.mxu0
        %2191 = vmatprep.mubr.bf16.mxu0 0
        %2192 = vmatmul.mubr.bf16.gmra.mxu0 %v2064
        %v2193 = vpop.f32.mrf.mxu0
        %v2194 = vadd.f32 0.0, %v2193
        %v2195 = vpop.f32.mrf.mxu0
        %v2196 = vpop.f32.mrf.mxu0
        %v2197 = vadd.f32 0.0, %v2196
        %v2198 = vpop.f32.mrf.mxu0
        %2199 = vmatprep.mubr.bf16.mxu0 0
        %2200 = vmatmul.mubr.bf16.gmra.mxu0 %v2067
        %v2201 = vpop.f32.mrf.mxu0
        %v2202 = vadd.f32 0.0, %v2201
        %v2203 = vpop.f32.mrf.mxu0
        %v2204 = vpop.f32.mrf.mxu0
        %v2205 = vadd.f32 0.0, %v2204
        %v2206 = vpop.f32.mrf.mxu0
        %2207 = vmatprep.mubr.bf16.mxu0 0
        %2208 = vmatmul.mubr.bf16.gmra.mxu0 %v2070
        %v2209 = vpop.f32.mrf.mxu0
        %v2210 = vadd.f32 0.0, %v2209
        %v2211 = vpop.f32.mrf.mxu0
        %v2212 = vpop.f32.mrf.mxu0
        %v2213 = vadd.f32 0.0, %v2212
        %v2214 = vpop.f32.mrf.mxu0
        %2215 = vmatprep.mubr.bf16.mxu0 0
        %2216 = vmatmul.mubr.bf16.gmra.mxu0 %v2073
        %v2217 = vpop.f32.mrf.mxu0
        %v2218 = vadd.f32 0.0, %v2217
        %v2219 = vpop.f32.mrf.mxu0
        %v2220 = vpop.f32.mrf.mxu0
        %v2221 = vadd.f32 0.0, %v2220
        %v2222 = vpop.f32.mrf.mxu0
        %2223 = vmatprep.mubr.bf16.mxu0 0
        %2224 = vmatmul.mubr.bf16.gmra.mxu0 %v2076
        %v2225 = vpop.f32.mrf.mxu0
        %v2226 = vadd.f32 0.0, %v2225
        %v2227 = vpop.f32.mrf.mxu0
        %v2228 = vpop.f32.mrf.mxu0
        %v2229 = vadd.f32 0.0, %v2228
        %v2230 = vpop.f32.mrf.mxu0
        %2231 = vmatprep.mubr.bf16.mxu0 0
        %2232 = vmatmul.mubr.bf16.gmra.mxu0 %v2079
        %v2233 = vpop.f32.mrf.mxu0
        %v2234 = vadd.f32 0.0, %v2233
        %v2235 = vpop.f32.mrf.mxu0
        %v2236 = vpop.f32.mrf.mxu0
        %v2237 = vadd.f32 0.0, %v2236
        %v2238 = vpop.f32.mrf.mxu0
        %2239 = vmatprep.mubr.bf16.mxu0 0
        %2240 = vmatmul.mubr.bf16.gmra.mxu0 %v2082
        %v2241 = vpop.f32.mrf.mxu0
        %v2242 = vadd.f32 0.0, %v2241
        %v2243 = vpop.f32.mrf.mxu0
        %v2244 = vpop.f32.mrf.mxu0
        %v2245 = vadd.f32 0.0, %v2244
        %v2246 = vpop.f32.mrf.mxu0
        %2247 = vdwg.mxu0
        %v2248 = vadd.f32 %v1954, %v2122
        %v2249 = vadd.f32 %v1955, %v2125
        %v2250 = vadd.f32 %v1956, %v2130
        %v2251 = vadd.f32 %v1957, %v2133
        %v2252 = vadd.f32 %v1958, %v2138
        %v2253 = vadd.f32 %v1959, %v2141
        %v2254 = vadd.f32 %v1960, %v2146
        %v2255 = vadd.f32 %v1961, %v2149
        %v2256 = vadd.f32 %v1962, %v2154
        %v2257 = vadd.f32 %v1963, %v2157
        %v2258 = vadd.f32 %v1964, %v2162
        %v2259 = vadd.f32 %v1965, %v2165
        %v2260 = vadd.f32 %v1966, %v2170
        %v2261 = vadd.f32 %v1967, %v2173
        %v2262 = vadd.f32 %v1968, %v2178
        %v2263 = vadd.f32 %v1969, %v2181
        %v2264 = vadd.f32 %v1970, %v2186
        %v2265 = vadd.f32 %v1971, %v2189
        %v2266 = vadd.f32 %v1972, %v2194
        %v2267 = vadd.f32 %v1973, %v2197
        %v2268 = vadd.f32 %v1974, %v2202
        %v2269 = vadd.f32 %v1975, %v2205
        %v2270 = vadd.f32 %v1976, %v2210
        %v2271 = vadd.f32 %v1977, %v2213
        %v2272 = vadd.f32 %v1978, %v2218
        %v2273 = vadd.f32 %v1979, %v2221
        %v2274 = vadd.f32 %v1980, %v2226
        %v2275 = vadd.f32 %v1981, %v2229
        %v2276 = vadd.f32 %v1982, %v2234
        %v2277 = vadd.f32 %v1983, %v2237
        %v2278 = vadd.f32 %v1984, %v2242
        %v2279 = vadd.f32 %v1985, %v2245
        %v2280 = vpack.c.bf16 %v321, %v320
        %v2281 = vpack.c.bf16 %v322, %v322
        %s2282 = scalar_lea.vmem %s1, 8
        %v2283 = vld [vmem:[%s2282] sm:$0x3]
        %v2285 = vshll.u32 %v2280, 16
        %v2287 = vrot.slane %v2285, 1
        %v2288 = vsel %vm938, %v1065, %v2287
        %v2289 = vshrl.u32 %v2280, 16
        %v2291 = vor.u32 %v2289, %v2287
        %v2293 = vshll.u32 %v2281, 16
        %v2295 = vrot.slane %v2293, 1
        %v2296 = vsel %vm938, %v2291, %v2295
        %v2298 = vsel %vm1071, %v2288, 0
        %v2301 = vsel %vm1071, %v2296, 0
        %v2304 = vsel %vm1120, %v2283, 0
        %2306 = vmatprep.subr.bf16.mxu0 0
        %2307 = vmatpush1.bf16.msra.mxu0 0
        %2308 = vmatprep.subr.bf16.mxu0 0
        %2309 = vmatpush1.bf16.msra.mxu0 0
        %2310 = vmatprep.subr.bf16.mxu0 0
        %2311 = vmatpush1.bf16.msra.mxu0 0
        %2312 = vmatprep.subr.bf16.mxu0 0
        %2313 = vmatpush1.bf16.msra.mxu0 0
        %2314 = vmatprep.subr.bf16.mxu0 0
        %2315 = vmatpush1.bf16.msra.mxu0 0
        %2316 = vmatprep.subr.bf16.mxu0 0
        %2317 = vmatpush1.bf16.msra.mxu0 0
        %2318 = vmatprep.subr.bf16.mxu0 0
        %2319 = vmatpush1.bf16.msra.mxu0 0
        %2320 = vmatprep.subr.bf16.mxu0 0
        %2321 = vmatpush1.bf16.msra.mxu0 %v2304
        %2322 = vmatprep.subr.bf16.mxu0 0
        %2323 = vmatpush2.bf16.msra.mxu0 0
        %2324 = vmatprep.subr.bf16.mxu0 0
        %2325 = vmatpush2.bf16.msra.mxu0 0
        %2326 = vmatprep.subr.bf16.mxu0 0
        %2327 = vmatpush2.bf16.msra.mxu0 0
        %2328 = vmatprep.subr.bf16.mxu0 0
        %2329 = vmatpush2.bf16.msra.mxu0 0
        %2330 = vmatprep.subr.bf16.mxu0 0
        %2331 = vmatpush2.bf16.msra.mxu0 0
        %2332 = vmatprep.subr.bf16.mxu0 0
        %2333 = vmatpush2.bf16.msra.mxu0 0
        %2334 = vmatprep.subr.bf16.mxu0 0
        %2335 = vmatpush2.bf16.msra.mxu0 0
        %2336 = vmatprep.subr.bf16.mxu0 0
        %2337 = vmatpush2.bf16.msra.mxu0 0
        %2338 = vmatprep.mubr.bf16.mxu0 0
        %2339 = vmatmul.mubr.bf16.gmra.mxu0 %v1076
        %v2340 = vpop.f32.mrf.mxu0
        %v2341 = vadd.f32 0.0, %v2340
        %v2342 = vpop.f32.mrf.mxu0
        %v2343 = vpop.f32.mrf.mxu0
        %v2344 = vadd.f32 0.0, %v2343
        %v2345 = vpop.f32.mrf.mxu0
        %2346 = vmatprep.mubr.bf16.mxu0 0
        %2347 = vmatmul.mubr.bf16.gmra.mxu0 %v1079
        %v2348 = vpop.f32.mrf.mxu0
        %v2349 = vadd.f32 0.0, %v2348
        %v2350 = vpop.f32.mrf.mxu0
        %v2351 = vpop.f32.mrf.mxu0
        %v2352 = vadd.f32 0.0, %v2351
        %v2353 = vpop.f32.mrf.mxu0
        %2354 = vmatprep.mubr.bf16.mxu0 0
        %2355 = vmatmul.mubr.bf16.gmra.mxu0 %v1082
        %v2356 = vpop.f32.mrf.mxu0
        %v2357 = vadd.f32 0.0, %v2356
        %v2358 = vpop.f32.mrf.mxu0
        %v2359 = vpop.f32.mrf.mxu0
        %v2360 = vadd.f32 0.0, %v2359
        %v2361 = vpop.f32.mrf.mxu0
        %2362 = vmatprep.mubr.bf16.mxu0 0
        %2363 = vmatmul.mubr.bf16.gmra.mxu0 %v1085
        %v2364 = vpop.f32.mrf.mxu0
        %v2365 = vadd.f32 0.0, %v2364
        %v2366 = vpop.f32.mrf.mxu0
        %v2367 = vpop.f32.mrf.mxu0
        %v2368 = vadd.f32 0.0, %v2367
        %v2369 = vpop.f32.mrf.mxu0
        %2370 = vmatprep.mubr.bf16.mxu0 0
        %2371 = vmatmul.mubr.bf16.gmra.mxu0 %v1088
        %v2372 = vpop.f32.mrf.mxu0
        %v2373 = vadd.f32 0.0, %v2372
        %v2374 = vpop.f32.mrf.mxu0
        %v2375 = vpop.f32.mrf.mxu0
        %v2376 = vadd.f32 0.0, %v2375
        %v2377 = vpop.f32.mrf.mxu0
        %2378 = vmatprep.mubr.bf16.mxu0 0
        %2379 = vmatmul.mubr.bf16.gmra.mxu0 %v1091
        %v2380 = vpop.f32.mrf.mxu0
        %v2381 = vadd.f32 0.0, %v2380
        %v2382 = vpop.f32.mrf.mxu0
        %v2383 = vpop.f32.mrf.mxu0
        %v2384 = vadd.f32 0.0, %v2383
        %v2385 = vpop.f32.mrf.mxu0
        %2386 = vmatprep.mubr.bf16.mxu0 0
        %2387 = vmatmul.mubr.bf16.gmra.mxu0 %v1094
        %v2388 = vpop.f32.mrf.mxu0
        %v2389 = vadd.f32 0.0, %v2388
        %v2390 = vpop.f32.mrf.mxu0
        %v2391 = vpop.f32.mrf.mxu0
        %v2392 = vadd.f32 0.0, %v2391
        %v2393 = vpop.f32.mrf.mxu0
        %2394 = vmatprep.mubr.bf16.mxu0 0
        %2395 = vmatmul.mubr.bf16.gmra.mxu0 %v1097
        %v2396 = vpop.f32.mrf.mxu0
        %v2397 = vadd.f32 0.0, %v2396
        %v2398 = vpop.f32.mrf.mxu0
        %v2399 = vpop.f32.mrf.mxu0
        %v2400 = vadd.f32 0.0, %v2399
        %v2401 = vpop.f32.mrf.mxu0
        %2402 = vmatprep.mubr.bf16.mxu0 0
        %2403 = vmatmul.mubr.bf16.gmra.mxu0 %v1100
        %v2404 = vpop.f32.mrf.mxu0
        %v2405 = vadd.f32 0.0, %v2404
        %v2406 = vpop.f32.mrf.mxu0
        %v2407 = vpop.f32.mrf.mxu0
        %v2408 = vadd.f32 0.0, %v2407
        %v2409 = vpop.f32.mrf.mxu0
        %2410 = vmatprep.mubr.bf16.mxu0 0
        %2411 = vmatmul.mubr.bf16.gmra.mxu0 %v1103
        %v2412 = vpop.f32.mrf.mxu0
        %v2413 = vadd.f32 0.0, %v2412
        %v2414 = vpop.f32.mrf.mxu0
        %v2415 = vpop.f32.mrf.mxu0
        %v2416 = vadd.f32 0.0, %v2415
        %v2417 = vpop.f32.mrf.mxu0
        %2418 = vmatprep.mubr.bf16.mxu0 0
        %2419 = vmatmul.mubr.bf16.gmra.mxu0 %v1106
        %v2420 = vpop.f32.mrf.mxu0
        %v2421 = vadd.f32 0.0, %v2420
        %v2422 = vpop.f32.mrf.mxu0
        %v2423 = vpop.f32.mrf.mxu0
        %v2424 = vadd.f32 0.0, %v2423
        %v2425 = vpop.f32.mrf.mxu0
        %2426 = vmatprep.mubr.bf16.mxu0 0
        %2427 = vmatmul.mubr.bf16.gmra.mxu0 %v1109
        %v2428 = vpop.f32.mrf.mxu0
        %v2429 = vadd.f32 0.0, %v2428
        %v2430 = vpop.f32.mrf.mxu0
        %v2431 = vpop.f32.mrf.mxu0
        %v2432 = vadd.f32 0.0, %v2431
        %v2433 = vpop.f32.mrf.mxu0
        %2434 = vmatprep.mubr.bf16.mxu0 0
        %2435 = vmatmul.mubr.bf16.gmra.mxu0 %v1112
        %v2436 = vpop.f32.mrf.mxu0
        %v2437 = vadd.f32 0.0, %v2436
        %v2438 = vpop.f32.mrf.mxu0
        %v2439 = vpop.f32.mrf.mxu0
        %v2440 = vadd.f32 0.0, %v2439
        %v2441 = vpop.f32.mrf.mxu0
        %2442 = vmatprep.mubr.bf16.mxu0 0
        %2443 = vmatmul.mubr.bf16.gmra.mxu0 %v1115
        %v2444 = vpop.f32.mrf.mxu0
        %v2445 = vadd.f32 0.0, %v2444
        %v2446 = vpop.f32.mrf.mxu0
        %v2447 = vpop.f32.mrf.mxu0
        %v2448 = vadd.f32 0.0, %v2447
        %v2449 = vpop.f32.mrf.mxu0
        %2450 = vmatprep.mubr.bf16.mxu0 0
        %2451 = vmatmul.mubr.bf16.gmra.mxu0 %v2298
        %v2452 = vpop.f32.mrf.mxu0
        %v2453 = vadd.f32 0.0, %v2452
        %v2454 = vpop.f32.mrf.mxu0
        %v2455 = vpop.f32.mrf.mxu0
        %v2456 = vadd.f32 0.0, %v2455
        %v2457 = vpop.f32.mrf.mxu0
        %2458 = vmatprep.mubr.bf16.mxu0 0
        %2459 = vmatmul.mubr.bf16.gmra.mxu0 %v2301
        %v2460 = vpop.f32.mrf.mxu0
        %v2461 = vadd.f32 0.0, %v2460
        %v2462 = vpop.f32.mrf.mxu0
        %v2463 = vpop.f32.mrf.mxu0
        %v2464 = vadd.f32 0.0, %v2463
        %v2465 = vpop.f32.mrf.mxu0
        %2466 = vdwg.mxu0
        %v2467 = vadd.f32 %v2248, %v2341
        %v2468 = vadd.f32 %v2249, %v2344
        %v2469 = vadd.f32 %v2250, %v2349
        %v2470 = vadd.f32 %v2251, %v2352
        %v2471 = vadd.f32 %v2252, %v2357
        %v2472 = vadd.f32 %v2253, %v2360
        %v2473 = vadd.f32 %v2254, %v2365
        %v2474 = vadd.f32 %v2255, %v2368
        %v2475 = vadd.f32 %v2256, %v2373
        %v2476 = vadd.f32 %v2257, %v2376
        %v2477 = vadd.f32 %v2258, %v2381
        %v2478 = vadd.f32 %v2259, %v2384
        %v2479 = vadd.f32 %v2260, %v2389
        %v2480 = vadd.f32 %v2261, %v2392
        %v2481 = vadd.f32 %v2262, %v2397
        %v2482 = vadd.f32 %v2263, %v2400
        %v2483 = vadd.f32 %v2264, %v2405
        %v2484 = vadd.f32 %v2265, %v2408
        %v2485 = vadd.f32 %v2266, %v2413
        %v2486 = vadd.f32 %v2267, %v2416
        %v2487 = vadd.f32 %v2268, %v2421
        %v2488 = vadd.f32 %v2269, %v2424
        %v2489 = vadd.f32 %v2270, %v2429
        %v2490 = vadd.f32 %v2271, %v2432
        %v2491 = vadd.f32 %v2272, %v2437
        %v2492 = vadd.f32 %v2273, %v2440
        %v2493 = vadd.f32 %v2274, %v2445
        %v2494 = vadd.f32 %v2275, %v2448
        %v2495 = vadd.f32 %v2276, %v2453
        %v2496 = vadd.f32 %v2277, %v2456
        %v2497 = vadd.f32 %v2278, %v2461
        %v2498 = vadd.f32 %v2279, %v2464
        %v2501 = vrot.slane %v321, 2
        %v2502 = vsel %vm1594, %v1658, %v2501
        %v2503 = vrot.slane %v322, 2
        %v2504 = vsel %vm1594, %v2501, %v2503
        %v2507 = vsel %vm1529, %v1601, 0.0
        %v2508 = vsel %vm1530, %v1603, 0.0
        %v2509 = vsel %vm1531, %v1605, 0.0
        %v2510 = vsel %vm1532, %v1607, 0.0
        %v2511 = vsel %vm1533, %v1609, 0.0
        %v2512 = vsel %vm1534, %v1611, 0.0
        %v2513 = vsel %vm1535, %v1613, 0.0
        %v2514 = vsel %vm1536, %v1615, 0.0
        %v2515 = vsel %vm1537, %v1617, 0.0
        %v2516 = vsel %vm1538, %v1619, 0.0
        %v2517 = vsel %vm1539, %v1621, 0.0
        %v2518 = vsel %vm1540, %v1623, 0.0
        %v2519 = vsel %vm1541, %v1625, 0.0
        %v2520 = vsel %vm1542, %v1627, 0.0
        %v2521 = vsel %vm1543, %v1629, 0.0
        %v2522 = vsel %vm1544, %v1631, 0.0
        %v2523 = vsel %vm1545, %v1633, 0.0
        %v2524 = vsel %vm1546, %v1635, 0.0
        %v2525 = vsel %vm1547, %v1637, 0.0
        %v2526 = vsel %vm1548, %v1639, 0.0
        %v2527 = vsel %vm1549, %v1641, 0.0
        %v2528 = vsel %vm1550, %v1643, 0.0
        %v2529 = vsel %vm1551, %v1645, 0.0
        %v2530 = vsel %vm1552, %v1647, 0.0
        %v2531 = vsel %vm1553, %v1649, 0.0
        %v2532 = vsel %vm1554, %v1651, 0.0
        %v2533 = vsel %vm1555, %v1653, 0.0
        %v2534 = vsel %vm1556, %v1655, 0.0
        %v2535 = vsel %vm1557, %v1657, 0.0
        %v2536 = vsel %vm1558, %v1659, 0.0
        %v2537 = vsel %vm1559, %v2502, 0.0
        %v2538 = vsel %vm1560, %v2504, 0.0
        %v2539 = vpack.c.bf16 %v2508, %v2507
        %v2540 = vpack.c.bf16 %v2510, %v2509
        %v2541 = vpack.c.bf16 %v2512, %v2511
        %v2542 = vpack.c.bf16 %v2514, %v2513
        %v2543 = vpack.c.bf16 %v2516, %v2515
        %v2544 = vpack.c.bf16 %v2518, %v2517
        %v2545 = vpack.c.bf16 %v2520, %v2519
        %v2546 = vpack.c.bf16 %v2522, %v2521
        %v2547 = vpack.c.bf16 %v2524, %v2523
        %v2548 = vpack.c.bf16 %v2526, %v2525
        %v2549 = vpack.c.bf16 %v2528, %v2527
        %v2550 = vpack.c.bf16 %v2530, %v2529
        %v2551 = vpack.c.bf16 %v2532, %v2531
        %v2552 = vpack.c.bf16 %v2534, %v2533
        %v2553 = vpack.c.bf16 %v2536, %v2535
        %v2554 = vpack.c.bf16 %v2538, %v2537
        %s2555 = scalar_lea.vmem %s1, 10
        %v2556 = vld [vmem:[%s2555] sm:$0x3]
        %v2558 = vsel %vm1071, %v2539, 0
        %v2561 = vsel %vm1071, %v2540, 0
        %v2564 = vsel %vm1071, %v2541, 0
        %v2567 = vsel %vm1071, %v2542, 0
        %v2570 = vsel %vm1071, %v2543, 0
        %v2573 = vsel %vm1071, %v2544, 0
        %v2576 = vsel %vm1071, %v2545, 0
        %v2579 = vsel %vm1071, %v2546, 0
        %v2582 = vsel %vm1071, %v2547, 0
        %v2585 = vsel %vm1071, %v2548, 0
        %v2588 = vsel %vm1071, %v2549, 0
        %v2591 = vsel %vm1071, %v2550, 0
        %v2594 = vsel %vm1071, %v2551, 0
        %v2597 = vsel %vm1071, %v2552, 0
        %v2600 = vsel %vm1071, %v2553, 0
        %v2603 = vsel %vm1071, %v2554, 0
        %v2606 = vsel %vm1120, %v2556, 0
        %2608 = vmatprep.subr.bf16.mxu0 0
        %2609 = vmatpush1.bf16.msra.mxu0 0
        %2610 = vmatprep.subr.bf16.mxu0 0
        %2611 = vmatpush1.bf16.msra.mxu0 0
        %2612 = vmatprep.subr.bf16.mxu0 0
        %2613 = vmatpush1.bf16.msra.mxu0 0
        %2614 = vmatprep.subr.bf16.mxu0 0
        %2615 = vmatpush1.bf16.msra.mxu0 0
        %2616 = vmatprep.subr.bf16.mxu0 0
        %2617 = vmatpush1.bf16.msra.mxu0 0
        %2618 = vmatprep.subr.bf16.mxu0 0
        %2619 = vmatpush1.bf16.msra.mxu0 0
        %2620 = vmatprep.subr.bf16.mxu0 0
        %2621 = vmatpush1.bf16.msra.mxu0 0
        %2622 = vmatprep.subr.bf16.mxu0 0
        %2623 = vmatpush1.bf16.msra.mxu0 %v2606
        %2624 = vmatprep.subr.bf16.mxu0 0
        %2625 = vmatpush2.bf16.msra.mxu0 0
        %2626 = vmatprep.subr.bf16.mxu0 0
        %2627 = vmatpush2.bf16.msra.mxu0 0
        %2628 = vmatprep.subr.bf16.mxu0 0
        %2629 = vmatpush2.bf16.msra.mxu0 0
        %2630 = vmatprep.subr.bf16.mxu0 0
        %2631 = vmatpush2.bf16.msra.mxu0 0
        %2632 = vmatprep.subr.bf16.mxu0 0
        %2633 = vmatpush2.bf16.msra.mxu0 0
        %2634 = vmatprep.subr.bf16.mxu0 0
        %2635 = vmatpush2.bf16.msra.mxu0 0
        %2636 = vmatprep.subr.bf16.mxu0 0
        %2637 = vmatpush2.bf16.msra.mxu0 0
        %2638 = vmatprep.subr.bf16.mxu0 0
        %2639 = vmatpush2.bf16.msra.mxu0 0
        %2640 = vmatprep.mubr.bf16.mxu0 0
        %2641 = vmatmul.mubr.bf16.gmra.mxu0 %v2558
        %v2642 = vpop.f32.mrf.mxu0
        %v2643 = vadd.f32 0.0, %v2642
        %v2644 = vpop.f32.mrf.mxu0
        %v2645 = vpop.f32.mrf.mxu0
        %v2646 = vadd.f32 0.0, %v2645
        %v2647 = vpop.f32.mrf.mxu0
        %2648 = vmatprep.mubr.bf16.mxu0 0
        %2649 = vmatmul.mubr.bf16.gmra.mxu0 %v2561
        %v2650 = vpop.f32.mrf.mxu0
        %v2651 = vadd.f32 0.0, %v2650
        %v2652 = vpop.f32.mrf.mxu0
        %v2653 = vpop.f32.mrf.mxu0
        %v2654 = vadd.f32 0.0, %v2653
        %v2655 = vpop.f32.mrf.mxu0
        %2656 = vmatprep.mubr.bf16.mxu0 0
        %2657 = vmatmul.mubr.bf16.gmra.mxu0 %v2564
        %v2658 = vpop.f32.mrf.mxu0
        %v2659 = vadd.f32 0.0, %v2658
        %v2660 = vpop.f32.mrf.mxu0
        %v2661 = vpop.f32.mrf.mxu0
        %v2662 = vadd.f32 0.0, %v2661
        %v2663 = vpop.f32.mrf.mxu0
        %2664 = vmatprep.mubr.bf16.mxu0 0
        %2665 = vmatmul.mubr.bf16.gmra.mxu0 %v2567
        %v2666 = vpop.f32.mrf.mxu0
        %v2667 = vadd.f32 0.0, %v2666
        %v2668 = vpop.f32.mrf.mxu0
        %v2669 = vpop.f32.mrf.mxu0
        %v2670 = vadd.f32 0.0, %v2669
        %v2671 = vpop.f32.mrf.mxu0
        %2672 = vmatprep.mubr.bf16.mxu0 0
        %2673 = vmatmul.mubr.bf16.gmra.mxu0 %v2570
        %v2674 = vpop.f32.mrf.mxu0
        %v2675 = vadd.f32 0.0, %v2674
        %v2676 = vpop.f32.mrf.mxu0
        %v2677 = vpop.f32.mrf.mxu0
        %v2678 = vadd.f32 0.0, %v2677
        %v2679 = vpop.f32.mrf.mxu0
        %2680 = vmatprep.mubr.bf16.mxu0 0
        %2681 = vmatmul.mubr.bf16.gmra.mxu0 %v2573
        %v2682 = vpop.f32.mrf.mxu0
        %v2683 = vadd.f32 0.0, %v2682
        %v2684 = vpop.f32.mrf.mxu0
        %v2685 = vpop.f32.mrf.mxu0
        %v2686 = vadd.f32 0.0, %v2685
        %v2687 = vpop.f32.mrf.mxu0
        %2688 = vmatprep.mubr.bf16.mxu0 0
        %2689 = vmatmul.mubr.bf16.gmra.mxu0 %v2576
        %v2690 = vpop.f32.mrf.mxu0
        %v2691 = vadd.f32 0.0, %v2690
        %v2692 = vpop.f32.mrf.mxu0
        %v2693 = vpop.f32.mrf.mxu0
        %v2694 = vadd.f32 0.0, %v2693
        %v2695 = vpop.f32.mrf.mxu0
        %2696 = vmatprep.mubr.bf16.mxu0 0
        %2697 = vmatmul.mubr.bf16.gmra.mxu0 %v2579
        %v2698 = vpop.f32.mrf.mxu0
        %v2699 = vadd.f32 0.0, %v2698
        %v2700 = vpop.f32.mrf.mxu0
        %v2701 = vpop.f32.mrf.mxu0
        %v2702 = vadd.f32 0.0, %v2701
        %v2703 = vpop.f32.mrf.mxu0
        %2704 = vmatprep.mubr.bf16.mxu0 0
        %2705 = vmatmul.mubr.bf16.gmra.mxu0 %v2582
        %v2706 = vpop.f32.mrf.mxu0
        %v2707 = vadd.f32 0.0, %v2706
        %v2708 = vpop.f32.mrf.mxu0
        %v2709 = vpop.f32.mrf.mxu0
        %v2710 = vadd.f32 0.0, %v2709
        %v2711 = vpop.f32.mrf.mxu0
        %2712 = vmatprep.mubr.bf16.mxu0 0
        %2713 = vmatmul.mubr.bf16.gmra.mxu0 %v2585
        %v2714 = vpop.f32.mrf.mxu0
        %v2715 = vadd.f32 0.0, %v2714
        %v2716 = vpop.f32.mrf.mxu0
        %v2717 = vpop.f32.mrf.mxu0
        %v2718 = vadd.f32 0.0, %v2717
        %v2719 = vpop.f32.mrf.mxu0
        %2720 = vmatprep.mubr.bf16.mxu0 0
        %2721 = vmatmul.mubr.bf16.gmra.mxu0 %v2588
        %v2722 = vpop.f32.mrf.mxu0
        %v2723 = vadd.f32 0.0, %v2722
        %v2724 = vpop.f32.mrf.mxu0
        %v2725 = vpop.f32.mrf.mxu0
        %v2726 = vadd.f32 0.0, %v2725
        %v2727 = vpop.f32.mrf.mxu0
        %2728 = vmatprep.mubr.bf16.mxu0 0
        %2729 = vmatmul.mubr.bf16.gmra.mxu0 %v2591
        %v2730 = vpop.f32.mrf.mxu0
        %v2731 = vadd.f32 0.0, %v2730
        %v2732 = vpop.f32.mrf.mxu0
        %v2733 = vpop.f32.mrf.mxu0
        %v2734 = vadd.f32 0.0, %v2733
        %v2735 = vpop.f32.mrf.mxu0
        %2736 = vmatprep.mubr.bf16.mxu0 0
        %2737 = vmatmul.mubr.bf16.gmra.mxu0 %v2594
        %v2738 = vpop.f32.mrf.mxu0
        %v2739 = vadd.f32 0.0, %v2738
        %v2740 = vpop.f32.mrf.mxu0
        %v2741 = vpop.f32.mrf.mxu0
        %v2742 = vadd.f32 0.0, %v2741
        %v2743 = vpop.f32.mrf.mxu0
        %2744 = vmatprep.mubr.bf16.mxu0 0
        %2745 = vmatmul.mubr.bf16.gmra.mxu0 %v2597
        %v2746 = vpop.f32.mrf.mxu0
        %v2747 = vadd.f32 0.0, %v2746
        %v2748 = vpop.f32.mrf.mxu0
        %v2749 = vpop.f32.mrf.mxu0
        %v2750 = vadd.f32 0.0, %v2749
        %v2751 = vpop.f32.mrf.mxu0
        %2752 = vmatprep.mubr.bf16.mxu0 0
        %2753 = vmatmul.mubr.bf16.gmra.mxu0 %v2600
        %v2754 = vpop.f32.mrf.mxu0
        %v2755 = vadd.f32 0.0, %v2754
        %v2756 = vpop.f32.mrf.mxu0
        %v2757 = vpop.f32.mrf.mxu0
        %v2758 = vadd.f32 0.0, %v2757
        %v2759 = vpop.f32.mrf.mxu0
        %2760 = vmatprep.mubr.bf16.mxu0 0
        %2761 = vmatmul.mubr.bf16.gmra.mxu0 %v2603
        %v2762 = vpop.f32.mrf.mxu0
        %v2763 = vadd.f32 0.0, %v2762
        %v2764 = vpop.f32.mrf.mxu0
        %v2765 = vpop.f32.mrf.mxu0
        %v2766 = vadd.f32 0.0, %v2765
        %v2767 = vpop.f32.mrf.mxu0
        %2768 = vdwg.mxu0
        %v2769 = vadd.f32 %v2467, %v2643
        %v2770 = vadd.f32 %v2468, %v2646
        %v2771 = vadd.f32 %v2469, %v2651
        %v2772 = vadd.f32 %v2470, %v2654
        %v2773 = vadd.f32 %v2471, %v2659
        %v2774 = vadd.f32 %v2472, %v2662
        %v2775 = vadd.f32 %v2473, %v2667
        %v2776 = vadd.f32 %v2474, %v2670
        %v2777 = vadd.f32 %v2475, %v2675
        %v2778 = vadd.f32 %v2476, %v2678
        %v2779 = vadd.f32 %v2477, %v2683
        %v2780 = vadd.f32 %v2478, %v2686
        %v2781 = vadd.f32 %v2479, %v2691
        %v2782 = vadd.f32 %v2480, %v2694
        %v2783 = vadd.f32 %v2481, %v2699
        %v2784 = vadd.f32 %v2482, %v2702
        %v2785 = vadd.f32 %v2483, %v2707
        %v2786 = vadd.f32 %v2484, %v2710
        %v2787 = vadd.f32 %v2485, %v2715
        %v2788 = vadd.f32 %v2486, %v2718
        %v2789 = vadd.f32 %v2487, %v2723
        %v2790 = vadd.f32 %v2488, %v2726
        %v2791 = vadd.f32 %v2489, %v2731
        %v2792 = vadd.f32 %v2490, %v2734
        %v2793 = vadd.f32 %v2491, %v2739
        %v2794 = vadd.f32 %v2492, %v2742
        %v2795 = vadd.f32 %v2493, %v2747
        %v2796 = vadd.f32 %v2494, %v2750
        %v2797 = vadd.f32 %v2495, %v2755
        %v2798 = vadd.f32 %v2496, %v2758
        %v2799 = vadd.f32 %v2497, %v2763
        %v2800 = vadd.f32 %v2498, %v2766
        %v2801 = vsel %vm838, %v292, 0.0
        %v2802 = vsel %vm839, %v293, 0.0
        %v2803 = vsel %vm840, %v294, 0.0
        %v2804 = vsel %vm841, %v295, 0.0
        %v2805 = vsel %vm842, %v296, 0.0
        %v2806 = vsel %vm843, %v297, 0.0
        %v2807 = vsel %vm844, %v298, 0.0
        %v2808 = vsel %vm845, %v299, 0.0
        %v2809 = vsel %vm846, %v300, 0.0
        %v2810 = vsel %vm847, %v301, 0.0
        %v2811 = vsel %vm848, %v302, 0.0
        %v2812 = vsel %vm849, %v303, 0.0
        %v2813 = vsel %vm850, %v304, 0.0
        %v2814 = vsel %vm851, %v305, 0.0
        %v2815 = vsel %vm852, %v306, 0.0
        %v2816 = vsel %vm853, %v307, 0.0
        %v2817 = vsel %vm854, %v308, 0.0
        %v2818 = vsel %vm855, %v309, 0.0
        %v2819 = vsel %vm856, %v310, 0.0
        %v2820 = vsel %vm857, %v311, 0.0
        %v2821 = vsel %vm858, %v312, 0.0
        %v2822 = vsel %vm859, %v313, 0.0
        %v2823 = vsel %vm860, %v314, 0.0
        %v2824 = vsel %vm861, %v315, 0.0
        %v2825 = vsel %vm862, %v316, 0.0
        %v2826 = vsel %vm863, %v317, 0.0
        %v2827 = vsel %vm864, %v318, 0.0
        %v2828 = vsel %vm865, %v319, 0.0
        %v2829 = vsel %vm866, %v320, 0.0
        %v2830 = vsel %vm867, %v321, 0.0
        %v2831 = vsel %vm868, %v322, 0.0
        %v2832 = vsel %vm869, %v323, 0.0
        %v2833 = vpack.c.bf16 %v2802, %v2801
        %v2834 = vpack.c.bf16 %v2804, %v2803
        %v2835 = vpack.c.bf16 %v2806, %v2805
        %v2836 = vpack.c.bf16 %v2808, %v2807
        %v2837 = vpack.c.bf16 %v2810, %v2809
        %v2838 = vpack.c.bf16 %v2812, %v2811
        %v2839 = vpack.c.bf16 %v2814, %v2813
        %v2840 = vpack.c.bf16 %v2816, %v2815
        %v2841 = vpack.c.bf16 %v2818, %v2817
        %v2842 = vpack.c.bf16 %v2820, %v2819
        %v2843 = vpack.c.bf16 %v2822, %v2821
        %v2844 = vpack.c.bf16 %v2824, %v2823
        %v2845 = vpack.c.bf16 %v2826, %v2825
        %v2846 = vpack.c.bf16 %v2828, %v2827
        %v2847 = vpack.c.bf16 %v2830, %v2829
        %v2848 = vpack.c.bf16 %v2832, %v2831
        %s2849 = scalar_lea.vmem %s1, 12
        %v2850 = vld [vmem:[%s2849] sm:$0x3]
        %v2852 = vsel %vm1071, %v2833, 0
        %v2855 = vsel %vm1071, %v2834, 0
        %v2858 = vsel %vm1071, %v2835, 0
        %v2861 = vsel %vm1071, %v2836, 0
        %v2864 = vsel %vm1071, %v2837, 0
        %v2867 = vsel %vm1071, %v2838, 0
        %v2870 = vsel %vm1071, %v2839, 0
        %v2873 = vsel %vm1071, %v2840, 0
        %v2876 = vsel %vm1071, %v2841, 0
        %v2879 = vsel %vm1071, %v2842, 0
        %v2882 = vsel %vm1071, %v2843, 0
        %v2885 = vsel %vm1071, %v2844, 0
        %v2888 = vsel %vm1071, %v2845, 0
        %v2891 = vsel %vm1071, %v2846, 0
        %v2894 = vsel %vm1071, %v2847, 0
        %v2897 = vsel %vm1071, %v2848, 0
        %v2900 = vsel %vm1120, %v2850, 0
        %2902 = vmatprep.subr.bf16.mxu0 0
        %2903 = vmatpush1.bf16.msra.mxu0 0
        %2904 = vmatprep.subr.bf16.mxu0 0
        %2905 = vmatpush1.bf16.msra.mxu0 0
        %2906 = vmatprep.subr.bf16.mxu0 0
        %2907 = vmatpush1.bf16.msra.mxu0 0
        %2908 = vmatprep.subr.bf16.mxu0 0
        %2909 = vmatpush1.bf16.msra.mxu0 0
        %2910 = vmatprep.subr.bf16.mxu0 0
        %2911 = vmatpush1.bf16.msra.mxu0 0
        %2912 = vmatprep.subr.bf16.mxu0 0
        %2913 = vmatpush1.bf16.msra.mxu0 0
        %2914 = vmatprep.subr.bf16.mxu0 0
        %2915 = vmatpush1.bf16.msra.mxu0 0
        %2916 = vmatprep.subr.bf16.mxu0 0
        %2917 = vmatpush1.bf16.msra.mxu0 %v2900
        %2918 = vmatprep.subr.bf16.mxu0 0
        %2919 = vmatpush2.bf16.msra.mxu0 0
        %2920 = vmatprep.subr.bf16.mxu0 0
        %2921 = vmatpush2.bf16.msra.mxu0 0
        %2922 = vmatprep.subr.bf16.mxu0 0
        %2923 = vmatpush2.bf16.msra.mxu0 0
        %2924 = vmatprep.subr.bf16.mxu0 0
        %2925 = vmatpush2.bf16.msra.mxu0 0
        %2926 = vmatprep.subr.bf16.mxu0 0
        %2927 = vmatpush2.bf16.msra.mxu0 0
        %2928 = vmatprep.subr.bf16.mxu0 0
        %2929 = vmatpush2.bf16.msra.mxu0 0
        %2930 = vmatprep.subr.bf16.mxu0 0
        %2931 = vmatpush2.bf16.msra.mxu0 0
        %2932 = vmatprep.subr.bf16.mxu0 0
        %2933 = vmatpush2.bf16.msra.mxu0 0
        %2934 = vmatprep.mubr.bf16.mxu0 0
        %2935 = vmatmul.mubr.bf16.gmra.mxu0 %v2852
        %v2936 = vpop.f32.mrf.mxu0
        %v2937 = vadd.f32 0.0, %v2936
        %v2938 = vpop.f32.mrf.mxu0
        %v2939 = vpop.f32.mrf.mxu0
        %v2940 = vadd.f32 0.0, %v2939
        %v2941 = vpop.f32.mrf.mxu0
        %2942 = vmatprep.mubr.bf16.mxu0 0
        %2943 = vmatmul.mubr.bf16.gmra.mxu0 %v2855
        %v2944 = vpop.f32.mrf.mxu0
        %v2945 = vadd.f32 0.0, %v2944
        %v2946 = vpop.f32.mrf.mxu0
        %v2947 = vpop.f32.mrf.mxu0
        %v2948 = vadd.f32 0.0, %v2947
        %v2949 = vpop.f32.mrf.mxu0
        %2950 = vmatprep.mubr.bf16.mxu0 0
        %2951 = vmatmul.mubr.bf16.gmra.mxu0 %v2858
        %v2952 = vpop.f32.mrf.mxu0
        %v2953 = vadd.f32 0.0, %v2952
        %v2954 = vpop.f32.mrf.mxu0
        %v2955 = vpop.f32.mrf.mxu0
        %v2956 = vadd.f32 0.0, %v2955
        %v2957 = vpop.f32.mrf.mxu0
        %2958 = vmatprep.mubr.bf16.mxu0 0
        %2959 = vmatmul.mubr.bf16.gmra.mxu0 %v2861
        %v2960 = vpop.f32.mrf.mxu0
        %v2961 = vadd.f32 0.0, %v2960
        %v2962 = vpop.f32.mrf.mxu0
        %v2963 = vpop.f32.mrf.mxu0
        %v2964 = vadd.f32 0.0, %v2963
        %v2965 = vpop.f32.mrf.mxu0
        %2966 = vmatprep.mubr.bf16.mxu0 0
        %2967 = vmatmul.mubr.bf16.gmra.mxu0 %v2864
        %v2968 = vpop.f32.mrf.mxu0
        %v2969 = vadd.f32 0.0, %v2968
        %v2970 = vpop.f32.mrf.mxu0
        %v2971 = vpop.f32.mrf.mxu0
        %v2972 = vadd.f32 0.0, %v2971
        %v2973 = vpop.f32.mrf.mxu0
        %2974 = vmatprep.mubr.bf16.mxu0 0
        %2975 = vmatmul.mubr.bf16.gmra.mxu0 %v2867
        %v2976 = vpop.f32.mrf.mxu0
        %v2977 = vadd.f32 0.0, %v2976
        %v2978 = vpop.f32.mrf.mxu0
        %v2979 = vpop.f32.mrf.mxu0
        %v2980 = vadd.f32 0.0, %v2979
        %v2981 = vpop.f32.mrf.mxu0
        %2982 = vmatprep.mubr.bf16.mxu0 0
        %2983 = vmatmul.mubr.bf16.gmra.mxu0 %v2870
        %v2984 = vpop.f32.mrf.mxu0
        %v2985 = vadd.f32 0.0, %v2984
        %v2986 = vpop.f32.mrf.mxu0
        %v2987 = vpop.f32.mrf.mxu0
        %v2988 = vadd.f32 0.0, %v2987
        %v2989 = vpop.f32.mrf.mxu0
        %2990 = vmatprep.mubr.bf16.mxu0 0
        %2991 = vmatmul.mubr.bf16.gmra.mxu0 %v2873
        %v2992 = vpop.f32.mrf.mxu0
        %v2993 = vadd.f32 0.0, %v2992
        %v2994 = vpop.f32.mrf.mxu0
        %v2995 = vpop.f32.mrf.mxu0
        %v2996 = vadd.f32 0.0, %v2995
        %v2997 = vpop.f32.mrf.mxu0
        %2998 = vmatprep.mubr.bf16.mxu0 0
        %2999 = vmatmul.mubr.bf16.gmra.mxu0 %v2876
        %v3000 = vpop.f32.mrf.mxu0
        %v3001 = vadd.f32 0.0, %v3000
        %v3002 = vpop.f32.mrf.mxu0
        %v3003 = vpop.f32.mrf.mxu0
        %v3004 = vadd.f32 0.0, %v3003
        %v3005 = vpop.f32.mrf.mxu0
        %3006 = vmatprep.mubr.bf16.mxu0 0
        %3007 = vmatmul.mubr.bf16.gmra.mxu0 %v2879
        %v3008 = vpop.f32.mrf.mxu0
        %v3009 = vadd.f32 0.0, %v3008
        %v3010 = vpop.f32.mrf.mxu0
        %v3011 = vpop.f32.mrf.mxu0
        %v3012 = vadd.f32 0.0, %v3011
        %v3013 = vpop.f32.mrf.mxu0
        %3014 = vmatprep.mubr.bf16.mxu0 0
        %3015 = vmatmul.mubr.bf16.gmra.mxu0 %v2882
        %v3016 = vpop.f32.mrf.mxu0
        %v3017 = vadd.f32 0.0, %v3016
        %v3018 = vpop.f32.mrf.mxu0
        %v3019 = vpop.f32.mrf.mxu0
        %v3020 = vadd.f32 0.0, %v3019
        %v3021 = vpop.f32.mrf.mxu0
        %3022 = vmatprep.mubr.bf16.mxu0 0
        %3023 = vmatmul.mubr.bf16.gmra.mxu0 %v2885
        %v3024 = vpop.f32.mrf.mxu0
        %v3025 = vadd.f32 0.0, %v3024
        %v3026 = vpop.f32.mrf.mxu0
        %v3027 = vpop.f32.mrf.mxu0
        %v3028 = vadd.f32 0.0, %v3027
        %v3029 = vpop.f32.mrf.mxu0
        %3030 = vmatprep.mubr.bf16.mxu0 0
        %3031 = vmatmul.mubr.bf16.gmra.mxu0 %v2888
        %v3032 = vpop.f32.mrf.mxu0
        %v3033 = vadd.f32 0.0, %v3032
        %v3034 = vpop.f32.mrf.mxu0
        %v3035 = vpop.f32.mrf.mxu0
        %v3036 = vadd.f32 0.0, %v3035
        %v3037 = vpop.f32.mrf.mxu0
        %3038 = vmatprep.mubr.bf16.mxu0 0
        %3039 = vmatmul.mubr.bf16.gmra.mxu0 %v2891
        %v3040 = vpop.f32.mrf.mxu0
        %v3041 = vadd.f32 0.0, %v3040
        %v3042 = vpop.f32.mrf.mxu0
        %v3043 = vpop.f32.mrf.mxu0
        %v3044 = vadd.f32 0.0, %v3043
        %v3045 = vpop.f32.mrf.mxu0
        %3046 = vmatprep.mubr.bf16.mxu0 0
        %3047 = vmatmul.mubr.bf16.gmra.mxu0 %v2894
        %v3048 = vpop.f32.mrf.mxu0
        %v3049 = vadd.f32 0.0, %v3048
        %v3050 = vpop.f32.mrf.mxu0
        %v3051 = vpop.f32.mrf.mxu0
        %v3052 = vadd.f32 0.0, %v3051
        %v3053 = vpop.f32.mrf.mxu0
        %3054 = vmatprep.mubr.bf16.mxu0 0
        %3055 = vmatmul.mubr.bf16.gmra.mxu0 %v2897
        %v3056 = vpop.f32.mrf.mxu0
        %v3057 = vadd.f32 0.0, %v3056
        %v3058 = vpop.f32.mrf.mxu0
        %v3059 = vpop.f32.mrf.mxu0
        %v3060 = vadd.f32 0.0, %v3059
        %v3061 = vpop.f32.mrf.mxu0
        %3062 = vdwg.mxu0
        %v3063 = vadd.f32 %v2769, %v2937
        %v3064 = vadd.f32 %v2770, %v2940
        %v3065 = vadd.f32 %v2771, %v2945
        %v3066 = vadd.f32 %v2772, %v2948
        %v3067 = vadd.f32 %v2773, %v2953
        %v3068 = vadd.f32 %v2774, %v2956
        %v3069 = vadd.f32 %v2775, %v2961
        %v3070 = vadd.f32 %v2776, %v2964
        %v3071 = vadd.f32 %v2777, %v2969
        %v3072 = vadd.f32 %v2778, %v2972
        %v3073 = vadd.f32 %v2779, %v2977
        %v3074 = vadd.f32 %v2780, %v2980
        %v3075 = vadd.f32 %v2781, %v2985
        %v3076 = vadd.f32 %v2782, %v2988
        %v3077 = vadd.f32 %v2783, %v2993
        %v3078 = vadd.f32 %v2784, %v2996
        %v3079 = vadd.f32 %v2785, %v3001
        %v3080 = vadd.f32 %v2786, %v3004
        %v3081 = vadd.f32 %v2787, %v3009
        %v3082 = vadd.f32 %v2788, %v3012
        %v3083 = vadd.f32 %v2789, %v3017
        %v3084 = vadd.f32 %v2790, %v3020
        %v3085 = vadd.f32 %v2791, %v3025
        %v3086 = vadd.f32 %v2792, %v3028
        %v3087 = vadd.f32 %v2793, %v3033
        %v3088 = vadd.f32 %v2794, %v3036
        %v3089 = vadd.f32 %v2795, %v3041
        %v3090 = vadd.f32 %v2796, %v3044
        %v3091 = vadd.f32 %v2797, %v3049
        %v3092 = vadd.f32 %v2798, %v3052
        %v3093 = vadd.f32 %v2799, %v3057
        %v3094 = vadd.f32 %v2800, %v3060
        %v3095 = vpack.c.bf16 %v323, %v322
        %v3096 = vpack.c.bf16 %v324, %v324
        %s3097 = scalar_lea.vmem %s1, 14
        %v3098 = vld [vmem:[%s3097] sm:$0x3]
        %v3100 = vshll.u32 %v3095, 16
        %v3102 = vrot.slane %v3100, 1
        %v3103 = vsel %vm938, %v2291, %v3102
        %v3104 = vshrl.u32 %v3095, 16
        %v3106 = vor.u32 %v3104, %v3102
        %v3108 = vshll.u32 %v3096, 16
        %v3110 = vrot.slane %v3108, 1
        %v3111 = vsel %vm938, %v3106, %v3110
        %v3113 = vsel %vm1071, %v3103, 0
        %v3116 = vsel %vm1071, %v3111, 0
        %v3119 = vsel %vm1120, %v3098, 0
        %3121 = vmatprep.subr.bf16.mxu0 0
        %3122 = vmatpush1.bf16.msra.mxu0 0
        %3123 = vmatprep.subr.bf16.mxu0 0
        %3124 = vmatpush1.bf16.msra.mxu0 0
        %3125 = vmatprep.subr.bf16.mxu0 0
        %3126 = vmatpush1.bf16.msra.mxu0 0
        %3127 = vmatprep.subr.bf16.mxu0 0
        %3128 = vmatpush1.bf16.msra.mxu0 0
        %3129 = vmatprep.subr.bf16.mxu0 0
        %3130 = vmatpush1.bf16.msra.mxu0 0
        %3131 = vmatprep.subr.bf16.mxu0 0
        %3132 = vmatpush1.bf16.msra.mxu0 0
        %3133 = vmatprep.subr.bf16.mxu0 0
        %3134 = vmatpush1.bf16.msra.mxu0 0
        %3135 = vmatprep.subr.bf16.mxu0 0
        %3136 = vmatpush1.bf16.msra.mxu0 %v3119
        %3137 = vmatprep.subr.bf16.mxu0 0
        %3138 = vmatpush2.bf16.msra.mxu0 0
        %3139 = vmatprep.subr.bf16.mxu0 0
        %3140 = vmatpush2.bf16.msra.mxu0 0
        %3141 = vmatprep.subr.bf16.mxu0 0
        %3142 = vmatpush2.bf16.msra.mxu0 0
        %3143 = vmatprep.subr.bf16.mxu0 0
        %3144 = vmatpush2.bf16.msra.mxu0 0
        %3145 = vmatprep.subr.bf16.mxu0 0
        %3146 = vmatpush2.bf16.msra.mxu0 0
        %3147 = vmatprep.subr.bf16.mxu0 0
        %3148 = vmatpush2.bf16.msra.mxu0 0
        %3149 = vmatprep.subr.bf16.mxu0 0
        %3150 = vmatpush2.bf16.msra.mxu0 0
        %3151 = vmatprep.subr.bf16.mxu0 0
        %3152 = vmatpush2.bf16.msra.mxu0 0
        %3153 = vmatprep.mubr.bf16.mxu0 0
        %3154 = vmatmul.mubr.bf16.gmra.mxu0 %v1079
        %v3155 = vpop.f32.mrf.mxu0
        %v3156 = vadd.f32 0.0, %v3155
        %v3157 = vpop.f32.mrf.mxu0
        %v3158 = vpop.f32.mrf.mxu0
        %v3159 = vadd.f32 0.0, %v3158
        %v3160 = vpop.f32.mrf.mxu0
        %3161 = vmatprep.mubr.bf16.mxu0 0
        %3162 = vmatmul.mubr.bf16.gmra.mxu0 %v1082
        %v3163 = vpop.f32.mrf.mxu0
        %v3164 = vadd.f32 0.0, %v3163
        %v3165 = vpop.f32.mrf.mxu0
        %v3166 = vpop.f32.mrf.mxu0
        %v3167 = vadd.f32 0.0, %v3166
        %v3168 = vpop.f32.mrf.mxu0
        %3169 = vmatprep.mubr.bf16.mxu0 0
        %3170 = vmatmul.mubr.bf16.gmra.mxu0 %v1085
        %v3171 = vpop.f32.mrf.mxu0
        %v3172 = vadd.f32 0.0, %v3171
        %v3173 = vpop.f32.mrf.mxu0
        %v3174 = vpop.f32.mrf.mxu0
        %v3175 = vadd.f32 0.0, %v3174
        %v3176 = vpop.f32.mrf.mxu0
        %3177 = vmatprep.mubr.bf16.mxu0 0
        %3178 = vmatmul.mubr.bf16.gmra.mxu0 %v1088
        %v3179 = vpop.f32.mrf.mxu0
        %v3180 = vadd.f32 0.0, %v3179
        %v3181 = vpop.f32.mrf.mxu0
        %v3182 = vpop.f32.mrf.mxu0
        %v3183 = vadd.f32 0.0, %v3182
        %v3184 = vpop.f32.mrf.mxu0
        %3185 = vmatprep.mubr.bf16.mxu0 0
        %3186 = vmatmul.mubr.bf16.gmra.mxu0 %v1091
        %v3187 = vpop.f32.mrf.mxu0
        %v3188 = vadd.f32 0.0, %v3187
        %v3189 = vpop.f32.mrf.mxu0
        %v3190 = vpop.f32.mrf.mxu0
        %v3191 = vadd.f32 0.0, %v3190
        %v3192 = vpop.f32.mrf.mxu0
        %3193 = vmatprep.mubr.bf16.mxu0 0
        %3194 = vmatmul.mubr.bf16.gmra.mxu0 %v1094
        %v3195 = vpop.f32.mrf.mxu0
        %v3196 = vadd.f32 0.0, %v3195
        %v3197 = vpop.f32.mrf.mxu0
        %v3198 = vpop.f32.mrf.mxu0
        %v3199 = vadd.f32 0.0, %v3198
        %v3200 = vpop.f32.mrf.mxu0
        %3201 = vmatprep.mubr.bf16.mxu0 0
        %3202 = vmatmul.mubr.bf16.gmra.mxu0 %v1097
        %v3203 = vpop.f32.mrf.mxu0
        %v3204 = vadd.f32 0.0, %v3203
        %v3205 = vpop.f32.mrf.mxu0
        %v3206 = vpop.f32.mrf.mxu0
        %v3207 = vadd.f32 0.0, %v3206
        %v3208 = vpop.f32.mrf.mxu0
        %3209 = vmatprep.mubr.bf16.mxu0 0
        %3210 = vmatmul.mubr.bf16.gmra.mxu0 %v1100
        %v3211 = vpop.f32.mrf.mxu0
        %v3212 = vadd.f32 0.0, %v3211
        %v3213 = vpop.f32.mrf.mxu0
        %v3214 = vpop.f32.mrf.mxu0
        %v3215 = vadd.f32 0.0, %v3214
        %v3216 = vpop.f32.mrf.mxu0
        %3217 = vmatprep.mubr.bf16.mxu0 0
        %3218 = vmatmul.mubr.bf16.gmra.mxu0 %v1103
        %v3219 = vpop.f32.mrf.mxu0
        %v3220 = vadd.f32 0.0, %v3219
        %v3221 = vpop.f32.mrf.mxu0
        %v3222 = vpop.f32.mrf.mxu0
        %v3223 = vadd.f32 0.0, %v3222
        %v3224 = vpop.f32.mrf.mxu0
        %3225 = vmatprep.mubr.bf16.mxu0 0
        %3226 = vmatmul.mubr.bf16.gmra.mxu0 %v1106
        %v3227 = vpop.f32.mrf.mxu0
        %v3228 = vadd.f32 0.0, %v3227
        %v3229 = vpop.f32.mrf.mxu0
        %v3230 = vpop.f32.mrf.mxu0
        %v3231 = vadd.f32 0.0, %v3230
        %v3232 = vpop.f32.mrf.mxu0
        %3233 = vmatprep.mubr.bf16.mxu0 0
        %3234 = vmatmul.mubr.bf16.gmra.mxu0 %v1109
        %v3235 = vpop.f32.mrf.mxu0
        %v3236 = vadd.f32 0.0, %v3235
        %v3237 = vpop.f32.mrf.mxu0
        %v3238 = vpop.f32.mrf.mxu0
        %v3239 = vadd.f32 0.0, %v3238
        %v3240 = vpop.f32.mrf.mxu0
        %3241 = vmatprep.mubr.bf16.mxu0 0
        %3242 = vmatmul.mubr.bf16.gmra.mxu0 %v1112
        %v3243 = vpop.f32.mrf.mxu0
        %v3244 = vadd.f32 0.0, %v3243
        %v3245 = vpop.f32.mrf.mxu0
        %v3246 = vpop.f32.mrf.mxu0
        %v3247 = vadd.f32 0.0, %v3246
        %v3248 = vpop.f32.mrf.mxu0
        %3249 = vmatprep.mubr.bf16.mxu0 0
        %3250 = vmatmul.mubr.bf16.gmra.mxu0 %v1115
        %v3251 = vpop.f32.mrf.mxu0
        %v3252 = vadd.f32 0.0, %v3251
        %v3253 = vpop.f32.mrf.mxu0
        %v3254 = vpop.f32.mrf.mxu0
        %v3255 = vadd.f32 0.0, %v3254
        %v3256 = vpop.f32.mrf.mxu0
        %3257 = vmatprep.mubr.bf16.mxu0 0
        %3258 = vmatmul.mubr.bf16.gmra.mxu0 %v2298
        %v3259 = vpop.f32.mrf.mxu0
        %v3260 = vadd.f32 0.0, %v3259
        %v3261 = vpop.f32.mrf.mxu0
        %v3262 = vpop.f32.mrf.mxu0
        %v3263 = vadd.f32 0.0, %v3262
        %v3264 = vpop.f32.mrf.mxu0
        %3265 = vmatprep.mubr.bf16.mxu0 0
        %3266 = vmatmul.mubr.bf16.gmra.mxu0 %v3113
        %v3267 = vpop.f32.mrf.mxu0
        %v3268 = vadd.f32 0.0, %v3267
        %v3269 = vpop.f32.mrf.mxu0
        %v3270 = vpop.f32.mrf.mxu0
        %v3271 = vadd.f32 0.0, %v3270
        %v3272 = vpop.f32.mrf.mxu0
        %3273 = vmatprep.mubr.bf16.mxu0 0
        %3274 = vmatmul.mubr.bf16.gmra.mxu0 %v3116
        %v3275 = vpop.f32.mrf.mxu0
        %v3276 = vadd.f32 0.0, %v3275
        %v3277 = vpop.f32.mrf.mxu0
        %v3278 = vpop.f32.mrf.mxu0
        %v3279 = vadd.f32 0.0, %v3278
        %v3280 = vpop.f32.mrf.mxu0
        %3281 = vdwg.mxu0
        %v3282 = vadd.f32 %v3063, %v3156
        %v3283 = vadd.f32 %v3064, %v3159
        %v3284 = vadd.f32 %v3065, %v3164
        %v3285 = vadd.f32 %v3066, %v3167
        %v3286 = vadd.f32 %v3067, %v3172
        %v3287 = vadd.f32 %v3068, %v3175
        %v3288 = vadd.f32 %v3069, %v3180
        %v3289 = vadd.f32 %v3070, %v3183
        %v3290 = vadd.f32 %v3071, %v3188
        %v3291 = vadd.f32 %v3072, %v3191
        %v3292 = vadd.f32 %v3073, %v3196
        %v3293 = vadd.f32 %v3074, %v3199
        %v3294 = vadd.f32 %v3075, %v3204
        %v3295 = vadd.f32 %v3076, %v3207
        %v3296 = vadd.f32 %v3077, %v3212
        %v3297 = vadd.f32 %v3078, %v3215
        %v3298 = vadd.f32 %v3079, %v3220
        %v3299 = vadd.f32 %v3080, %v3223
        %v3300 = vadd.f32 %v3081, %v3228
        %v3301 = vadd.f32 %v3082, %v3231
        %v3302 = vadd.f32 %v3083, %v3236
        %v3303 = vadd.f32 %v3084, %v3239
        %v3304 = vadd.f32 %v3085, %v3244
        %v3305 = vadd.f32 %v3086, %v3247
        %v3306 = vadd.f32 %v3087, %v3252
        %v3307 = vadd.f32 %v3088, %v3255
        %v3308 = vadd.f32 %v3089, %v3260
        %v3309 = vadd.f32 %v3090, %v3263
        %v3310 = vadd.f32 %v3091, %v3268
        %v3311 = vadd.f32 %v3092, %v3271
        %v3312 = vadd.f32 %v3093, %v3276
        %v3313 = vadd.f32 %v3094, %v3279
        %v3316 = vrot.slane %v323, 2
        %v3317 = vsel %vm1594, %v2503, %v3316
        %v3318 = vrot.slane %v324, 2
        %v3319 = vsel %vm1594, %v3316, %v3318
        %v3322 = vsel %vm1529, %v1605, 0.0
        %v3323 = vsel %vm1530, %v1607, 0.0
        %v3324 = vsel %vm1531, %v1609, 0.0
        %v3325 = vsel %vm1532, %v1611, 0.0
        %v3326 = vsel %vm1533, %v1613, 0.0
        %v3327 = vsel %vm1534, %v1615, 0.0
        %v3328 = vsel %vm1535, %v1617, 0.0
        %v3329 = vsel %vm1536, %v1619, 0.0
        %v3330 = vsel %vm1537, %v1621, 0.0
        %v3331 = vsel %vm1538, %v1623, 0.0
        %v3332 = vsel %vm1539, %v1625, 0.0
        %v3333 = vsel %vm1540, %v1627, 0.0
        %v3334 = vsel %vm1541, %v1629, 0.0
        %v3335 = vsel %vm1542, %v1631, 0.0
        %v3336 = vsel %vm1543, %v1633, 0.0
        %v3337 = vsel %vm1544, %v1635, 0.0
        %v3338 = vsel %vm1545, %v1637, 0.0
        %v3339 = vsel %vm1546, %v1639, 0.0
        %v3340 = vsel %vm1547, %v1641, 0.0
        %v3341 = vsel %vm1548, %v1643, 0.0
        %v3342 = vsel %vm1549, %v1645, 0.0
        %v3343 = vsel %vm1550, %v1647, 0.0
        %v3344 = vsel %vm1551, %v1649, 0.0
        %v3345 = vsel %vm1552, %v1651, 0.0
        %v3346 = vsel %vm1553, %v1653, 0.0
        %v3347 = vsel %vm1554, %v1655, 0.0
        %v3348 = vsel %vm1555, %v1657, 0.0
        %v3349 = vsel %vm1556, %v1659, 0.0
        %v3350 = vsel %vm1557, %v2502, 0.0
        %v3351 = vsel %vm1558, %v2504, 0.0
        %v3352 = vsel %vm1559, %v3317, 0.0
        %v3353 = vsel %vm1560, %v3319, 0.0
        %v3354 = vpack.c.bf16 %v3323, %v3322
        %v3355 = vpack.c.bf16 %v3325, %v3324
        %v3356 = vpack.c.bf16 %v3327, %v3326
        %v3357 = vpack.c.bf16 %v3329, %v3328
        %v3358 = vpack.c.bf16 %v3331, %v3330
        %v3359 = vpack.c.bf16 %v3333, %v3332
        %v3360 = vpack.c.bf16 %v3335, %v3334
        %v3361 = vpack.c.bf16 %v3337, %v3336
        %v3362 = vpack.c.bf16 %v3339, %v3338
        %v3363 = vpack.c.bf16 %v3341, %v3340
        %v3364 = vpack.c.bf16 %v3343, %v3342
        %v3365 = vpack.c.bf16 %v3345, %v3344
        %v3366 = vpack.c.bf16 %v3347, %v3346
        %v3367 = vpack.c.bf16 %v3349, %v3348
        %v3368 = vpack.c.bf16 %v3351, %v3350
        %v3369 = vpack.c.bf16 %v3353, %v3352
        %s3370 = scalar_lea.vmem %s1, 16
        %v3371 = vld [vmem:[%s3370] sm:$0x3]
        %v3373 = vsel %vm1071, %v3354, 0
        %v3376 = vsel %vm1071, %v3355, 0
        %v3379 = vsel %vm1071, %v3356, 0
        %v3382 = vsel %vm1071, %v3357, 0
        %v3385 = vsel %vm1071, %v3358, 0
        %v3388 = vsel %vm1071, %v3359, 0
        %v3391 = vsel %vm1071, %v3360, 0
        %v3394 = vsel %vm1071, %v3361, 0
        %v3397 = vsel %vm1071, %v3362, 0
        %v3400 = vsel %vm1071, %v3363, 0
        %v3403 = vsel %vm1071, %v3364, 0
        %v3406 = vsel %vm1071, %v3365, 0
        %v3409 = vsel %vm1071, %v3366, 0
        %v3412 = vsel %vm1071, %v3367, 0
        %v3415 = vsel %vm1071, %v3368, 0
        %v3418 = vsel %vm1071, %v3369, 0
        %v3421 = vsel %vm1120, %v3371, 0
        %3423 = vmatprep.subr.bf16.mxu0 0
        %3424 = vmatpush1.bf16.msra.mxu0 0
        %3425 = vmatprep.subr.bf16.mxu0 0
        %3426 = vmatpush1.bf16.msra.mxu0 0
        %3427 = vmatprep.subr.bf16.mxu0 0
        %3428 = vmatpush1.bf16.msra.mxu0 0
        %3429 = vmatprep.subr.bf16.mxu0 0
        %3430 = vmatpush1.bf16.msra.mxu0 0
        %3431 = vmatprep.subr.bf16.mxu0 0
        %3432 = vmatpush1.bf16.msra.mxu0 0
        %3433 = vmatprep.subr.bf16.mxu0 0
        %3434 = vmatpush1.bf16.msra.mxu0 0
        %3435 = vmatprep.subr.bf16.mxu0 0
        %3436 = vmatpush1.bf16.msra.mxu0 0
        %3437 = vmatprep.subr.bf16.mxu0 0
        %3438 = vmatpush1.bf16.msra.mxu0 %v3421
        %3439 = vmatprep.subr.bf16.mxu0 0
        %3440 = vmatpush2.bf16.msra.mxu0 0
        %3441 = vmatprep.subr.bf16.mxu0 0
        %3442 = vmatpush2.bf16.msra.mxu0 0
        %3443 = vmatprep.subr.bf16.mxu0 0
        %3444 = vmatpush2.bf16.msra.mxu0 0
        %3445 = vmatprep.subr.bf16.mxu0 0
        %3446 = vmatpush2.bf16.msra.mxu0 0
        %3447 = vmatprep.subr.bf16.mxu0 0
        %3448 = vmatpush2.bf16.msra.mxu0 0
        %3449 = vmatprep.subr.bf16.mxu0 0
        %3450 = vmatpush2.bf16.msra.mxu0 0
        %3451 = vmatprep.subr.bf16.mxu0 0
        %3452 = vmatpush2.bf16.msra.mxu0 0
        %3453 = vmatprep.subr.bf16.mxu0 0
        %3454 = vmatpush2.bf16.msra.mxu0 0
        %3455 = vmatprep.mubr.bf16.mxu0 0
        %3456 = vmatmul.mubr.bf16.gmra.mxu0 %v3373
        %v3457 = vpop.f32.mrf.mxu0
        %v3458 = vadd.f32 0.0, %v3457
        %v3459 = vpop.f32.mrf.mxu0
        %v3460 = vpop.f32.mrf.mxu0
        %v3461 = vadd.f32 0.0, %v3460
        %v3462 = vpop.f32.mrf.mxu0
        %3463 = vmatprep.mubr.bf16.mxu0 0
        %3464 = vmatmul.mubr.bf16.gmra.mxu0 %v3376
        %v3465 = vpop.f32.mrf.mxu0
        %v3466 = vadd.f32 0.0, %v3465
        %v3467 = vpop.f32.mrf.mxu0
        %v3468 = vpop.f32.mrf.mxu0
        %v3469 = vadd.f32 0.0, %v3468
        %v3470 = vpop.f32.mrf.mxu0
        %3471 = vmatprep.mubr.bf16.mxu0 0
        %3472 = vmatmul.mubr.bf16.gmra.mxu0 %v3379
        %v3473 = vpop.f32.mrf.mxu0
        %v3474 = vadd.f32 0.0, %v3473
        %v3475 = vpop.f32.mrf.mxu0
        %v3476 = vpop.f32.mrf.mxu0
        %v3477 = vadd.f32 0.0, %v3476
        %v3478 = vpop.f32.mrf.mxu0
        %3479 = vmatprep.mubr.bf16.mxu0 0
        %3480 = vmatmul.mubr.bf16.gmra.mxu0 %v3382
        %v3481 = vpop.f32.mrf.mxu0
        %v3482 = vadd.f32 0.0, %v3481
        %v3483 = vpop.f32.mrf.mxu0
        %v3484 = vpop.f32.mrf.mxu0
        %v3485 = vadd.f32 0.0, %v3484
        %v3486 = vpop.f32.mrf.mxu0
        %3487 = vmatprep.mubr.bf16.mxu0 0
        %3488 = vmatmul.mubr.bf16.gmra.mxu0 %v3385
        %v3489 = vpop.f32.mrf.mxu0
        %v3490 = vadd.f32 0.0, %v3489
        %v3491 = vpop.f32.mrf.mxu0
        %v3492 = vpop.f32.mrf.mxu0
        %v3493 = vadd.f32 0.0, %v3492
        %v3494 = vpop.f32.mrf.mxu0
        %3495 = vmatprep.mubr.bf16.mxu0 0
        %3496 = vmatmul.mubr.bf16.gmra.mxu0 %v3388
        %v3497 = vpop.f32.mrf.mxu0
        %v3498 = vadd.f32 0.0, %v3497
        %v3499 = vpop.f32.mrf.mxu0
        %v3500 = vpop.f32.mrf.mxu0
        %v3501 = vadd.f32 0.0, %v3500
        %v3502 = vpop.f32.mrf.mxu0
        %3503 = vmatprep.mubr.bf16.mxu0 0
        %3504 = vmatmul.mubr.bf16.gmra.mxu0 %v3391
        %v3505 = vpop.f32.mrf.mxu0
        %v3506 = vadd.f32 0.0, %v3505
        %v3507 = vpop.f32.mrf.mxu0
        %v3508 = vpop.f32.mrf.mxu0
        %v3509 = vadd.f32 0.0, %v3508
        %v3510 = vpop.f32.mrf.mxu0
        %3511 = vmatprep.mubr.bf16.mxu0 0
        %3512 = vmatmul.mubr.bf16.gmra.mxu0 %v3394
        %v3513 = vpop.f32.mrf.mxu0
        %v3514 = vadd.f32 0.0, %v3513
        %v3515 = vpop.f32.mrf.mxu0
        %v3516 = vpop.f32.mrf.mxu0
        %v3517 = vadd.f32 0.0, %v3516
        %v3518 = vpop.f32.mrf.mxu0
        %3519 = vmatprep.mubr.bf16.mxu0 0
        %3520 = vmatmul.mubr.bf16.gmra.mxu0 %v3397
        %v3521 = vpop.f32.mrf.mxu0
        %v3522 = vadd.f32 0.0, %v3521
        %v3523 = vpop.f32.mrf.mxu0
        %v3524 = vpop.f32.mrf.mxu0
        %v3525 = vadd.f32 0.0, %v3524
        %v3526 = vpop.f32.mrf.mxu0
        %3527 = vmatprep.mubr.bf16.mxu0 0
        %3528 = vmatmul.mubr.bf16.gmra.mxu0 %v3400
        %v3529 = vpop.f32.mrf.mxu0
        %v3530 = vadd.f32 0.0, %v3529
        %v3531 = vpop.f32.mrf.mxu0
        %v3532 = vpop.f32.mrf.mxu0
        %v3533 = vadd.f32 0.0, %v3532
        %v3534 = vpop.f32.mrf.mxu0
        %3535 = vmatprep.mubr.bf16.mxu0 0
        %3536 = vmatmul.mubr.bf16.gmra.mxu0 %v3403
        %v3537 = vpop.f32.mrf.mxu0
        %v3538 = vadd.f32 0.0, %v3537
        %v3539 = vpop.f32.mrf.mxu0
        %v3540 = vpop.f32.mrf.mxu0
        %v3541 = vadd.f32 0.0, %v3540
        %v3542 = vpop.f32.mrf.mxu0
        %3543 = vmatprep.mubr.bf16.mxu0 0
        %3544 = vmatmul.mubr.bf16.gmra.mxu0 %v3406
        %v3545 = vpop.f32.mrf.mxu0
        %v3546 = vadd.f32 0.0, %v3545
        %v3547 = vpop.f32.mrf.mxu0
        %v3548 = vpop.f32.mrf.mxu0
        %v3549 = vadd.f32 0.0, %v3548
        %v3550 = vpop.f32.mrf.mxu0
        %3551 = vmatprep.mubr.bf16.mxu0 0
        %3552 = vmatmul.mubr.bf16.gmra.mxu0 %v3409
        %v3553 = vpop.f32.mrf.mxu0
        %v3554 = vadd.f32 0.0, %v3553
        %v3555 = vpop.f32.mrf.mxu0
        %v3556 = vpop.f32.mrf.mxu0
        %v3557 = vadd.f32 0.0, %v3556
        %v3558 = vpop.f32.mrf.mxu0
        %3559 = vmatprep.mubr.bf16.mxu0 0
        %3560 = vmatmul.mubr.bf16.gmra.mxu0 %v3412
        %v3561 = vpop.f32.mrf.mxu0
        %v3562 = vadd.f32 0.0, %v3561
        %v3563 = vpop.f32.mrf.mxu0
        %v3564 = vpop.f32.mrf.mxu0
        %v3565 = vadd.f32 0.0, %v3564
        %v3566 = vpop.f32.mrf.mxu0
        %3567 = vmatprep.mubr.bf16.mxu0 0
        %3568 = vmatmul.mubr.bf16.gmra.mxu0 %v3415
        %v3569 = vpop.f32.mrf.mxu0
        %v3570 = vadd.f32 0.0, %v3569
        %v3571 = vpop.f32.mrf.mxu0
        %v3572 = vpop.f32.mrf.mxu0
        %v3573 = vadd.f32 0.0, %v3572
        %v3574 = vpop.f32.mrf.mxu0
        %3575 = vmatprep.mubr.bf16.mxu0 0
        %3576 = vmatmul.mubr.bf16.gmra.mxu0 %v3418
        %v3577 = vpop.f32.mrf.mxu0
        %v3578 = vadd.f32 0.0, %v3577
        %v3579 = vpop.f32.mrf.mxu0
        %v3580 = vpop.f32.mrf.mxu0
        %v3581 = vadd.f32 0.0, %v3580
        %v3582 = vpop.f32.mrf.mxu0
        %3583 = vdwg.mxu0
        %v3584 = vadd.f32 %v3282, %v3458
        %v3585 = vadd.f32 %v3283, %v3461
        %v3586 = vadd.f32 %v3284, %v3466
        %v3587 = vadd.f32 %v3285, %v3469
        %v3588 = vadd.f32 %v3286, %v3474
        %v3589 = vadd.f32 %v3287, %v3477
        %v3590 = vadd.f32 %v3288, %v3482
        %v3591 = vadd.f32 %v3289, %v3485
        %v3592 = vadd.f32 %v3290, %v3490
        %v3593 = vadd.f32 %v3291, %v3493
        %v3594 = vadd.f32 %v3292, %v3498
        %v3595 = vadd.f32 %v3293, %v3501
        %v3596 = vadd.f32 %v3294, %v3506
        %v3597 = vadd.f32 %v3295, %v3509
        %v3598 = vadd.f32 %v3296, %v3514
        %v3599 = vadd.f32 %v3297, %v3517
        %v3600 = vadd.f32 %v3298, %v3522
        %v3601 = vadd.f32 %v3299, %v3525
        %v3602 = vadd.f32 %v3300, %v3530
        %v3603 = vadd.f32 %v3301, %v3533
        %v3604 = vadd.f32 %v3302, %v3538
        %v3605 = vadd.f32 %v3303, %v3541
        %v3606 = vadd.f32 %v3304, %v3546
        %v3607 = vadd.f32 %v3305, %v3549
        %v3608 = vadd.f32 %v3306, %v3554
        %v3609 = vadd.f32 %v3307, %v3557
        %v3610 = vadd.f32 %v3308, %v3562
        %v3611 = vadd.f32 %v3309, %v3565
        %v3612 = vadd.f32 %v3310, %v3570
        %v3613 = vadd.f32 %v3311, %v3573
        %v3614 = vadd.f32 %v3312, %v3578
        %v3615 = vadd.f32 %v3313, %v3581
        %v3616 = vld [vmem:[%s2] sm:$0x1]
        %v3618 = vlaneseq
        %v3619 = vshrl.u32 %v3618, 7
        %v3620 = vsub.s32 0, %v3619
        %v3621 = vrot.slane %v3616, %v3620
        %v3623 = vadd.f32 %v3584, %v3621
        %v3624 = vadd.f32 %v3585, %v3621
        %v3625 = vadd.f32 %v3586, %v3621
        %v3626 = vadd.f32 %v3587, %v3621
        %v3627 = vadd.f32 %v3588, %v3621
        %v3628 = vadd.f32 %v3589, %v3621
        %v3629 = vadd.f32 %v3590, %v3621
        %v3630 = vadd.f32 %v3591, %v3621
        %v3631 = vadd.f32 %v3592, %v3621
        %v3632 = vadd.f32 %v3593, %v3621
        %v3633 = vadd.f32 %v3594, %v3621
        %v3634 = vadd.f32 %v3595, %v3621
        %v3635 = vadd.f32 %v3596, %v3621
        %v3636 = vadd.f32 %v3597, %v3621
        %v3637 = vadd.f32 %v3598, %v3621
        %v3638 = vadd.f32 %v3599, %v3621
        %v3639 = vadd.f32 %v3600, %v3621
        %v3640 = vadd.f32 %v3601, %v3621
        %v3641 = vadd.f32 %v3602, %v3621
        %v3642 = vadd.f32 %v3603, %v3621
        %v3643 = vadd.f32 %v3604, %v3621
        %v3644 = vadd.f32 %v3605, %v3621
        %v3645 = vadd.f32 %v3606, %v3621
        %v3646 = vadd.f32 %v3607, %v3621
        %v3647 = vadd.f32 %v3608, %v3621
        %v3648 = vadd.f32 %v3609, %v3621
        %v3649 = vadd.f32 %v3610, %v3621
        %v3650 = vadd.f32 %v3611, %v3621
        %v3651 = vadd.f32 %v3612, %v3621
        %v3652 = vadd.f32 %v3613, %v3621
        %v3653 = vadd.f32 %v3614, %v3621
        %v3654 = vadd.f32 %v3615, %v3621
        %v3655 = vmax.f32 %v3623, 0.0
        %v3656 = vmax.f32 %v3624, 0.0
        %v3657 = vmax.f32 %v3625, 0.0
        %v3658 = vmax.f32 %v3626, 0.0
        %v3659 = vmax.f32 %v3627, 0.0
        %v3660 = vmax.f32 %v3628, 0.0
        %v3661 = vmax.f32 %v3629, 0.0
        %v3662 = vmax.f32 %v3630, 0.0
        %v3663 = vmax.f32 %v3631, 0.0
        %v3664 = vmax.f32 %v3632, 0.0
        %v3665 = vmax.f32 %v3633, 0.0
        %v3666 = vmax.f32 %v3634, 0.0
        %v3667 = vmax.f32 %v3635, 0.0
        %v3668 = vmax.f32 %v3636, 0.0
        %v3669 = vmax.f32 %v3637, 0.0
        %v3670 = vmax.f32 %v3638, 0.0
        %v3671 = vmax.f32 %v3639, 0.0
        %v3672 = vmax.f32 %v3640, 0.0
        %v3673 = vmax.f32 %v3641, 0.0
        %v3674 = vmax.f32 %v3642, 0.0
        %v3675 = vmax.f32 %v3643, 0.0
        %v3676 = vmax.f32 %v3644, 0.0
        %v3677 = vmax.f32 %v3645, 0.0
        %v3678 = vmax.f32 %v3646, 0.0
        %v3679 = vmax.f32 %v3647, 0.0
        %v3680 = vmax.f32 %v3648, 0.0
        %v3681 = vmax.f32 %v3649, 0.0
        %v3682 = vmax.f32 %v3650, 0.0
        %v3683 = vmax.f32 %v3651, 0.0
        %v3684 = vmax.f32 %v3652, 0.0
        %v3685 = vmax.f32 %v3653, 0.0
        %v3686 = vmax.f32 %v3654, 0.0
        %v3687 = vld [vmem:[%s3] sm:$0xff]
        %v3688 = vld [vmem:[%s4] sm:$0xff]
        %3690 = vset.pattern.permute.xlu0 0
        %3691 = vperm.xlu0 %3690, %v3688
        %v3692 = vpop.permute.xlu0 %3691
        %3694 = vmatprep.subr.mxu0 0.0
        %3695 = vmatpush1.xpose.msra.mxu0 %v3670
        %3696 = vmatprep.subr.mxu0 0.0
        %3697 = vmatpush1.xpose.msra.mxu0 %v3669
        %3698 = vmatprep.subr.mxu0 0.0
        %3699 = vmatpush1.xpose.msra.mxu0 %v3668
        %3700 = vmatprep.subr.mxu0 0.0
        %3701 = vmatpush1.xpose.msra.mxu0 %v3667
        %3702 = vmatprep.subr.mxu0 0.0
        %3703 = vmatpush1.xpose.msra.mxu0 %v3666
        %3704 = vmatprep.subr.mxu0 0.0
        %3705 = vmatpush1.xpose.msra.mxu0 %v3665
        %3706 = vmatprep.subr.mxu0 0.0
        %3707 = vmatpush1.xpose.msra.mxu0 %v3664
        %3708 = vmatprep.subr.mxu0 0.0
        %3709 = vmatpush1.xpose.msra.mxu0 %v3663
        %3710 = vmatprep.subr.mxu0 0.0
        %3711 = vmatpush1.xpose.msra.mxu0 %v3662
        %3712 = vmatprep.subr.mxu0 0.0
        %3713 = vmatpush1.xpose.msra.mxu0 %v3661
        %3714 = vmatprep.subr.mxu0 0.0
        %3715 = vmatpush1.xpose.msra.mxu0 %v3660
        %3716 = vmatprep.subr.mxu0 0.0
        %3717 = vmatpush1.xpose.msra.mxu0 %v3659
        %3718 = vmatprep.subr.mxu0 0.0
        %3719 = vmatpush1.xpose.msra.mxu0 %v3658
        %3720 = vmatprep.subr.mxu0 0.0
        %3721 = vmatpush1.xpose.msra.mxu0 %v3657
        %3722 = vmatprep.subr.mxu0 0.0
        %3723 = vmatpush1.xpose.msra.mxu0 %v3656
        %3724 = vmatprep.subr.mxu0 0.0
        %3725 = vmatpush1.xpose.msra.mxu0 %v3655
        %3726 = vmatprep.subr.mxu0 0.0
        %3727 = vmatpush2.xpose.msra.mxu0 %v3686
        %3728 = vmatprep.subr.mxu0 0.0
        %3729 = vmatpush2.xpose.msra.mxu0 %v3685
        %3730 = vmatprep.subr.mxu0 0.0
        %3731 = vmatpush2.xpose.msra.mxu0 %v3684
        %3732 = vmatprep.subr.mxu0 0.0
        %3733 = vmatpush2.xpose.msra.mxu0 %v3683
        %3734 = vmatprep.subr.mxu0 0.0
        %3735 = vmatpush2.xpose.msra.mxu0 %v3682
        %3736 = vmatprep.subr.mxu0 0.0
        %3737 = vmatpush2.xpose.msra.mxu0 %v3681
        %3738 = vmatprep.subr.mxu0 0.0
        %3739 = vmatpush2.xpose.msra.mxu0 %v3680
        %3740 = vmatprep.subr.mxu0 0.0
        %3741 = vmatpush2.xpose.msra.mxu0 %v3679
        %3742 = vmatprep.subr.mxu0 0.0
        %3743 = vmatpush2.xpose.msra.mxu0 %v3678
        %3744 = vmatprep.subr.mxu0 0.0
        %3745 = vmatpush2.xpose.msra.mxu0 %v3677
        %3746 = vmatprep.subr.mxu0 0.0
        %3747 = vmatpush2.xpose.msra.mxu0 %v3676
        %3748 = vmatprep.subr.mxu0 0.0
        %3749 = vmatpush2.xpose.msra.mxu0 %v3675
        %3750 = vmatprep.subr.mxu0 0.0
        %3751 = vmatpush2.xpose.msra.mxu0 %v3674
        %3752 = vmatprep.subr.mxu0 0.0
        %3753 = vmatpush2.xpose.msra.mxu0 %v3673
        %3754 = vmatprep.subr.mxu0 0.0
        %3755 = vmatpush2.xpose.msra.mxu0 %v3672
        %3756 = vmatprep.subr.mxu0 0.0
        %3757 = vmatpush2.xpose.msra.mxu0 %v3671
        %3758 = vmatprep.mubr.f32.mxu0 0.0
        %3759 = vmatmul.mubr.f32.gmra.mxu0 %v3687
        %v3760 = vpop.f32.mrf.mxu0
        %v3761 = vadd.f32 %v3692, %v3760
        %v3762 = vpop.f32.mrf.mxu0
        %v3763 = vadd.f32 %v3692, %v3762
        %3764 = vdwg.mxu0
        %v3765 = vadd.f32 %v3761, %v3763
        %3766 = vadd.xlane.f32.xlu0 %v3765
        %v3767 = vpop.xlane.xlu0 %3766
        %v3768 = vrcp.pop 256.0
        %v3769 = vmul.f32 %v3767, %v3768
        %vm3770 = vcmp.eq.s32.totalorder %v326, 0
        %v3771 = vxor.u32 %v3761, 2147483648
        %v3772 = vxor.u32 %v3763, 2147483648
        %v3773 = vmul.f32 %v3771, 1.442695
        %v3774 = vpow.pop %v3773
        %v3775 = vmul.f32 %v3772, 1.442695
        %v3776 = vpow.pop %v3775
        %v3777 = vadd.f32 %v3774, 1.0
        %v3778 = vadd.f32 %v3776, 1.0
        %v3779 = vrcp.pop %v3777
        %v3780 = vmul.f32 1.0, %v3779
        %v3781 = vrcp.pop %v3778
        %v3782 = vmul.f32 1.0, %v3781
        %vm3783 = vcmp.le.s32.totalorder %v326, 4
        %v3784 = vld [vmem:[%s5] sm:$0xff]
        %v3785 = vld [vmem:[%s5 + $0x8] sm:$0xff]
        %v3786 = vadd.f32 %v3784, %v3761
        %v3787 = vadd.f32 %v3785, %v3763
        %v3788 = vsel %vm3783, %v3786, %v3769
        %v3789 = vsel %vm3783, %v3787, %v3769
        %v3790 = vsel %vm3770, %v3780, %v3788
        %v3791 = vsel %vm3770, %v3782, %v3789
        %3792 = vst [vmem:[%s244] sm:$0xff] %v3790
        %3793 = vst [vmem:[%s244 + $0x8] sm:$0xff] %v3791
        %s3794 = sand.u32 %s159, 1
        %s3795 = scalar_lea.sflag [#allocation3], %s3794
        %s3796 = sand.u32 %s159, 1
        %s3797 = smul.addr %s3796, 16
        %s3798 = scalar_lea.vmem [#allocation2], %s3797
        // Predicated region
        $region45: #{tpu_custom_call.1} parent=43 // pred_check
          %p3799 = pneg %p169
        $region46: #{tpu_custom_call.1} parent=43 // pred_check_branch
          %3801 = sbr.rel (%p3799) target = $region48
        $region47: #{tpu_custom_call.1} parent=43 // pred_region
          %s3803 = ssub.s32 256, 256
          %3804 = vsyncadd %s3795, %s3803
          %s3805 = smul.addr %s20, 2
          %s3806 = smul.addr %s3805, 128
          %s3807 = scalar_lea.hbm %s6, %s3806
          %s3809 = sshll.u32 %s3798, 4
          %s3810 = int_to_ptr.vmem [resolvable:$true] %s3809
          %3812 = dma.vmem_to_hbm [thread:$0]  %s3810, 256, %s3807, %s3795
        $region48: #{tpu_custom_call.1} parent=43 // pred_fallthru
          _
      $region44: #{tpu_custom_call.1} parent=5 // pred_fallthru
        _
      %p3813 = scmp.le.s32.totalorder 2, %s15
      // Predicated region
      $region49: #{tpu_custom_call.1} parent=5 // pred_check
        %p3814 = pneg %p3813
      $region50: #{tpu_custom_call.1} parent=5 // pred_check_branch
        %3816 = sbr.rel (%p3814) target = $region52
      $region51: #{tpu_custom_call.1} parent=5 // pred_region
        %s3817 = ssub.s32 %s15, 2
        // Predicated region
        $region53: #{tpu_custom_call.1} parent=51 // pred_check
          %p3818 = pneg %p175
        $region54: #{tpu_custom_call.1} parent=51 // pred_check_branch
          %3820 = sbr.rel (%p3818) target = $region56
        $region55: #{tpu_custom_call.1} parent=51 // pred_region
          %s3821 = sand.u32 %s160, 1
          %s3822 = scalar_lea.sflag [#allocation3], %s3821
          %s3823 = sand.u32 %s160, 1
          %s3824 = smul.addr %s3823, 16
          %s3825 = scalar_lea.vmem [#allocation2], %s3824
          %3826 = dma.done %s3822, 256
        $region56: #{tpu_custom_call.1} parent=51 // pred_fallthru
          _
      $region52: #{tpu_custom_call.1} parent=5 // pred_fallthru
        _
    $region6: #{tpu_custom_call.1} parent=1 // loop_footer
      %s19 = sadd.s32 1, %s15
    $region7: #{tpu_custom_call.1} parent=1 // loop_footer_branch
      %14 = sbr.rel target = $region3
    $region8: #{tpu_custom_call.1} parent=1 // loop_exit
      _
    %3827 = vsyncpa [#allocation3], 1
    %s3828 = scalar_lea.sflag [#allocation3], 1
    %3829 = vsyncpa %s3828, 1

</llo_original>
